<compile_context>
chip_gen: v7x
topology: tpu7x:2x2x1
jax: 0.10.0
libtpu: 0.0.40
codegen_flags: <defaults>
</compile_context>

<pallas_src>
import jax
import jax.numpy as jnp
from jax import lax
from jax.experimental import pallas as pl
from jax.experimental.pallas import tpu as pltpu


def attn_encoder_kernel(
    x_ref,      # [S*B, D]     matmul dtype, embedded input, t-major rows
    wm_ref,     # [L, D+H, 4H] matmul dtype, stacked [w_ih.T ; w_hh.T] per layer
    b_ref,      # [L, 1, 4H]   f32, b_ih + b_hh
    w1n_ref,    # [H, L1]      matmul dtype, linear1 rows multiplying h_N
    w1h_ref,    # [H, L1]      matmul dtype, linear1 rows multiplying hidden_t
    b1_ref,     # [1, L1]      f32
    w2_ref,     # [L1, 1]      matmul dtype
    b2_ref,     # [1, 1]       f32
    wfc_ref,    # [H, 1]       matmul dtype, linear_final rows multiplying ctx
    wfn_ref,    # [H, 1]       matmul dtype, linear_final rows multiplying h_N
    bf_ref,     # [1, 1]       f32
    attn_ref,   # out [B, S]   f32  attention weights
    out_ref,    # out [B, 1]   f32  final logit per batch element
):
    f32 = jnp.float32
    B, S = attn_ref.shape
    L, DH, H4 = wm_ref.shape
    H = H4 // 4
    D = DH - H
    cdt = x_ref.dtype  # MXU operand dtype (bf16 recommended on all gens)

    # ---- hoisted layer-0 input projection: ONE [S*B, D] @ [D, 4H] matmul ----
    wih0 = wm_ref[0, :D, :]
    gin0 = (jnp.dot(x_ref[...], wih0, preferred_element_type=f32)
            + b_ref[0])                                       # [S*B, 4H] f32

    # loop-invariant weight loads hoisted out of the recurrence.
    # Layers >= 1: keep the input-part and recurrent-part weights SPLIT so the
    # per-step gate computation is two small dots (no cross-lane concat on the
    # serial critical path).
    whh0 = wm_ref[0, D:, :]                                   # [H, 4H]
    wx_hi = [wm_ref[l, :H, :] for l in range(1, L)]           # [H, 4H] each
    wh_hi = [wm_ref[l, H:, :] for l in range(1, L)]           # [H, 4H] each
    b_hi = [b_ref[l] for l in range(1, L)]                    # [1, 4H] each

    def cell(gates, c_prev):
        # sigmoid via tanh identity: one EUP push (plus 2 cheap VPU ops)
        # instead of an exp + reciprocal chain; tanh over the full [B, 4H]
        # vreg covers the g gate.  <= 3 tanh-class EUP ops per cell.
        sg = jnp.tanh(gates * 0.5) * 0.5 + 0.5
        th = jnp.tanh(gates)
        i_g = sg[:, 0 * H:1 * H]
        f_g = sg[:, 1 * H:2 * H]
        g_g = th[:, 2 * H:3 * H]
        o_g = sg[:, 3 * H:4 * H]
        c_new = f_g * c_prev + i_g * g_g
        h_new = o_g * jnp.tanh(c_new)
        return h_new, c_new

    # ---- fully unrolled recurrence; h/c state carried in vregs ----
    # TODO(synk): beyond roughly B>=64 per program, spill `hid` to a VMEM
    # scratch ([S*B, H], one planned store per step) or tile B via a parallel
    # grid axis so the unrolled carry does not spill uncontrolled (64 vregs).
    h = [jnp.zeros((B, H), f32) for _ in range(L)]
    c = [jnp.zeros((B, H), f32) for _ in range(L)]
    hid = []
    for t in range(S):
        # note: in the bf16 path h is re-cast to bf16 each step; for long
        # sequences keep the recurrent operand in f32 if drift matters.
        g0 = gin0[t * B:(t + 1) * B, :] + jnp.dot(
            h[0].astype(cdt), whh0, preferred_element_type=f32)
        h[0], c[0] = cell(g0, c[0])
        inp = h[0]
        for l in range(1, L):
            g = (jnp.dot(inp.astype(cdt), wx_hi[l - 1],
                         preferred_element_type=f32)
                 + jnp.dot(h[l].astype(cdt), wh_hi[l - 1],
                           preferred_element_type=f32)
                 + b_hi[l - 1])
            h[l], c[l] = cell(g, c[l])
            inp = h[l]
        hid.append(inp)                                       # top-layer hidden

    # PyTorch module (LSTM branch): h_N = c_n[-1] (cell state of last layer).
    h_N = c[L - 1]                                            # [B, H]

    # ---- attention energies, batched over the whole sequence ----
    hid_flat = jnp.concatenate(hid, axis=0)                   # [S*B, H], t-major
    base = (jnp.dot(h_N.astype(cdt), w1n_ref[...], preferred_element_type=f32)
            + b1_ref[...])                                    # [B, L1], once
    base_rep = jnp.tile(base, (S, 1))                         # [S*B, L1]
    o1 = jnp.tanh(
        jnp.dot(hid_flat.astype(cdt), w1h_ref[...], preferred_element_type=f32)
        + base_rep)                                           # [S*B, L1]
    e = (jnp.dot(o1.astype(cdt), w2_ref[...], preferred_element_type=f32)
         + b2_ref[...])                                       # [S*B, 1]
    # Assemble lane-dense [B, S] energies via S static lane inserts.  The
    # reviewed reshape([S*B,1]->[S,B]) + transpose alternative is a
    # sublane->lane relayout whose shape-cast support at this tiny shape is
    # uncertain; this proven path is off the recurrence critical path (S=8).
    e_bs = jnp.concatenate(
        [e[t * B:(t + 1) * B, :] for t in range(S)], axis=1)  # [B, S]

    # ---- softmax over the sequence (lane axis), f32 ----
    m = jnp.max(e_bs, axis=1, keepdims=True)
    p = jnp.exp(e_bs - m)
    inv_den = pl.reciprocal(jnp.sum(p, axis=1, keepdims=True), approx=True)
    w_bs = p * inv_den                                        # [B, S]
    attn_ref[...] = w_bs

    # ---- context vector + final linear (split weights: no lane concat) ----
    ctx = jnp.zeros((B, H), f32)
    for t in range(S):
        ctx = ctx + w_bs[:, t:t + 1] * hid[t]
    out_ref[...] = (
        jnp.dot(ctx.astype(cdt), wfc_ref[...], preferred_element_type=f32)
        + jnp.dot(h_N.astype(cdt), wfn_ref[...], preferred_element_type=f32)
        + bf_ref[...])


def attn_encoder_forward(x_index, params, *, matmul_dtype=jnp.bfloat16):
    """x_index: int32 [batch, seq].  Returns (attn_weights [B, S], out [B]).

    matmul_dtype: dtype fed to the MXU.  bf16 is recommended on ALL TPU
    generations (the v5e/v6e/v7x MXUs are bf16 arrays; f32 operands buy no
    accuracy on the systolic array and can cost multi-pass emulation).  Use
    f32 only as a bit-accuracy validation path vs an f32 reference.  All
    element-wise gate math, softmax and accumulation stay in f32 regardless.
    """
    # nn.Embedding gather + dropout(p=0)==identity handled as XLA glue.
    # TODO(synk): at production B*S*D, move the gather in-kernel via
    # PrefetchScalarGridSpec(num_scalar_prefetch=1) + pl.Element row-gather
    # BlockSpec to avoid materializing/transposing the [B,S,D] activation.
    emb = params["embed"][x_index]                            # [B, S, D]
    B, S = x_index.shape
    D = emb.shape[-1]
    # t-major flattened input for the hoisted layer-0 projection
    x2d = jnp.transpose(emb, (1, 0, 2)).reshape(S * B, D).astype(matmul_dtype)

    cast = lambda a: a.astype(matmul_dtype)
    vmem = pl.BlockSpec(memory_space=pltpu.MemorySpace.VMEM)
    # TODO(synk): at production batch sizes, add a leading grid axis over batch
    # tiles with dimension_semantics=("parallel",) (uses both v7x TensorCores
    # and enables pipelining), keep weights resident, stream x / hid per batch
    # tile, pad attn to a lane-dense width, and set
    # pltpu.CompilerParams(vmem_limit_bytes=...) for v7x's 64 MiB VMEM.
    attn, out = pl.pallas_call(
        attn_encoder_kernel,
        out_shape=(
            jax.ShapeDtypeStruct((B, S), jnp.float32),
            jax.ShapeDtypeStruct((B, 1), jnp.float32),
        ),
        in_specs=[vmem] * 11,
        out_specs=(vmem, vmem),
    )(
        x2d,
        cast(params["wm"]), params["b"],
        cast(params["w1n"]), cast(params["w1h"]), params["b1"],
        cast(params["w2"]), params["b2"],
        cast(params["wfc"]), cast(params["wfn"]), params["bf"],
    )
    return attn, out[:, 0]


def init_params(key, vocab, D, H, L, L1):
    assert D == H, "stacked merged LSTM weights require embed_dim == hidden_dim"
    keys = jax.random.split(key, 1 + 4 * L + 6)
    embed = jax.random.normal(keys[0], (vocab, D), jnp.float32)

    k = 1.0 / jnp.sqrt(jnp.float32(H))
    wm, b = [], []
    idx = 1
    for l in range(L):
        in_dim = D if l == 0 else H
        w_ih = jax.random.uniform(keys[idx], (4 * H, in_dim), jnp.float32, -k, k); idx += 1
        w_hh = jax.random.uniform(keys[idx], (4 * H, H), jnp.float32, -k, k); idx += 1
        b_ih = jax.random.uniform(keys[idx], (4 * H,), jnp.float32, -k, k); idx += 1
        b_hh = jax.random.uniform(keys[idx], (4 * H,), jnp.float32, -k, k); idx += 1
        wm.append(jnp.concatenate([w_ih.T, w_hh.T], axis=0))     # [in+H, 4H]
        b.append((b_ih + b_hh)[None, :])                          # [1, 4H]

    k1 = 1.0 / jnp.sqrt(jnp.float32(2 * H))
    w1 = jax.random.uniform(keys[idx], (L1, 2 * H), jnp.float32, -k1, k1); idx += 1
    b1 = jax.random.uniform(keys[idx], (L1,), jnp.float32, -k1, k1); idx += 1
    k2 = 1.0 / jnp.sqrt(jnp.float32(L1))
    w2 = jax.random.uniform(keys[idx], (1, L1), jnp.float32, -k2, k2); idx += 1
    b2 = jax.random.uniform(keys[idx], (1,), jnp.float32, -k2, k2); idx += 1
    wf = jax.random.uniform(keys[idx], (1, 2 * H), jnp.float32, -k1, k1); idx += 1
    bf = jax.random.uniform(keys[idx], (1,), jnp.float32, -k1, k1); idx += 1

    w1t = w1.T                                                    # [2H, L1]
    wft = wf.T                                                    # [2H, 1]
    return {
        "embed": embed,
        "wm": jnp.stack(wm),                                      # [L, 2H, 4H]
        "b": jnp.stack(b),                                        # [L, 1, 4H]
        "w1n": w1t[:H], "w1h": w1t[H:],                           # [H, L1] each
        "b1": b1[None, :],                                        # [1, L1]
        "w2": w2.T,                                               # [L1, 1]
        "b2": b2[None, :],                                        # [1, 1]
        "wfc": wft[:H], "wfn": wft[H:],                           # [H, 1] each
        "bf": bf[None, :],                                        # [1, 1]
    }


def reference_forward(x_index, params):
    """Pure-JAX f32 reference of the PyTorch forward (LSTM cell_type, dropout=0)."""
    hp = lax.Precision.HIGHEST
    emb = params["embed"][x_index]
    x = jnp.transpose(emb, (1, 0, 2)).astype(jnp.float32)         # [S, B, D]
    S, B, D = x.shape
    L = params["wm"].shape[0]
    H = params["wm"].shape[2] // 4

    w_ih = params["wm"][:, :D, :]
    w_hh = params["wm"][:, D:, :]

    h = jnp.zeros((L, B, H), jnp.float32)
    c = jnp.zeros((L, B, H), jnp.float32)
    hidden = []
    for t in range(S):
        inp = x[t]
        nh, nc = [], []
        for l in range(L):
            gates = (jnp.dot(inp, w_ih[l], precision=hp)
                     + jnp.dot(h[l], w_hh[l], precision=hp) + params["b"][l])
            i_g = jax.nn.sigmoid(gates[:, :H])
            f_g = jax.nn.sigmoid(gates[:, H:2 * H])
            g_g = jnp.tanh(gates[:, 2 * H:3 * H])
            o_g = jax.nn.sigmoid(gates[:, 3 * H:])
            cn = f_g * c[l] + i_g * g_g
            hn = o_g * jnp.tanh(cn)
            nc.append(cn); nh.append(hn)
            inp = hn
        h = jnp.stack(nh); c = jnp.stack(nc)
        hidden.append(inp)
    hidden = jnp.stack(hidden)                                    # [S, B, H]
    h_N = c[-1]                                                   # [B, H]  (matches PyTorch: h_N = c_n[-1])

    w1_t = jnp.concatenate([params["w1n"], params["w1h"]], axis=0)  # [2H, L1]
    wf_t = jnp.concatenate([params["wfc"], params["wfn"]], axis=0)  # [2H, 1]
    cat = jnp.concatenate(
        [jnp.broadcast_to(h_N[None], (S, B, H)), hidden], axis=2)
    o1 = jnp.tanh(jnp.einsum("sbh,hl->sbl", cat, w1_t, precision=hp)
                  + params["b1"])
    e = (jnp.einsum("sbl,lo->sbo", o1, params["w2"], precision=hp)[..., 0]
         + params["b2"][0, 0])                                    # [S, B]
    attn = jax.nn.softmax(e.T, axis=1)                            # [B, S]
    ctx = jnp.einsum("bs,sbh->bh", attn, hidden, precision=hp)
    cat_vec = jnp.concatenate([ctx, h_N], axis=1)
    out = jnp.dot(cat_vec, wf_t, precision=hp)[:, 0] + params["bf"][0, 0]
    return attn, out


if __name__ == "__main__":
    vocab, D, H, L, L1 = 50, 32, 32, 2, 32   # rnn_hidden_dim=32, 2 layers, linear1=32
    batch, seq = 2, 8

    key = jax.random.PRNGKey(0)
    k_params, k_idx = jax.random.split(key)
    params = init_params(k_params, vocab, D, H, L, L1)
    x_index = jax.random.randint(k_idx, (batch, seq), 0, vocab, dtype=jnp.int32)

    attn_ref_v, out_ref_v = reference_forward(x_index, params)

    # f32 MXU operands (bit-accuracy validation path): tight check vs reference
    attn32, out32 = jax.block_until_ready(
        attn_encoder_forward(x_index, params, matmul_dtype=jnp.float32))
    assert attn32.shape == (batch, seq) and out32.shape == (batch,)
    assert jnp.allclose(attn32, attn_ref_v, atol=1e-3, rtol=1e-3)
    assert jnp.allclose(out32, out_ref_v, atol=1e-3, rtol=1e-3)

    # bf16 MXU operands (recommended default on v5e/v6e/v7x): loose sanity
    # check only, since the f32 reference uses HIGHEST precision matmuls.
    attn16, out16 = jax.block_until_ready(
        attn_encoder_forward(x_index, params, matmul_dtype=jnp.bfloat16))
    assert jnp.allclose(attn16, attn_ref_v, atol=5e-2, rtol=5e-2)
    assert jnp.allclose(out16, out_ref_v, atol=1e-1, rtol=1e-1)

    print("KERNEL_OK")
</pallas_src>

<mosaic_0001>
module attributes {stable_mosaic.version = 11 : i64} {
  func.func @attn_encoder_kernel(%arg0: memref<16x32xf32, #tpu.memory_space<vmem>>, %arg1: memref<2x64x128xf32, #tpu.memory_space<vmem>>, %arg2: memref<2x1x128xf32, #tpu.memory_space<vmem>>, %arg3: memref<32x32xf32, #tpu.memory_space<vmem>>, %arg4: memref<32x32xf32, #tpu.memory_space<vmem>>, %arg5: memref<1x32xf32, #tpu.memory_space<vmem>>, %arg6: memref<32x1xf32, #tpu.memory_space<vmem>>, %arg7: memref<1x1xf32, #tpu.memory_space<vmem>>, %arg8: memref<32x1xf32, #tpu.memory_space<vmem>>, %arg9: memref<32x1xf32, #tpu.memory_space<vmem>>, %arg10: memref<1x1xf32, #tpu.memory_space<vmem>>, %arg11: memref<2x8xf32, #tpu.memory_space<vmem>>, %arg12: memref<2x1xf32, #tpu.memory_space<vmem>>) attributes {dimension_semantics = [], scalar_prefetch = 0 : i64, scratch_operands = 0 : i64, tpu.core_type = #tpu.core_type<tc>} {
    %c0 = arith.constant 0 : index
    %c0_0 = arith.constant 0 : index
    %c0_1 = arith.constant 0 : index
    %0 = vector.load %arg1[%c0, %c0_0, %c0_1] : memref<2x64x128xf32, #tpu.memory_space<vmem>>, vector<1x32x128xf32>
    %1 = vector.shape_cast %0 : vector<1x32x128xf32> to vector<32x128xf32>
    %c0_2 = arith.constant 0 : index
    %c0_3 = arith.constant 0 : index
    %2 = vector.load %arg0[%c0_2, %c0_3] : memref<16x32xf32, #tpu.memory_space<vmem>>, vector<16x32xf32>
    %cst = arith.constant dense<0.000000e+00> : vector<16x128xf32>
    %3 = tpu.matmul %2, %1, %cst {dimension_numbers = #tpu.dot_dimension_numbers<[1], [0], [0], [1], [0, 0, 1, 1], [], []>} : vector<16x32xf32>, vector<32x128xf32>, vector<16x128xf32> -> vector<16x128xf32>
    %c0_4 = arith.constant 0 : index
    %c0_5 = arith.constant 0 : index
    %c0_6 = arith.constant 0 : index
    %4 = vector.load %arg2[%c0_4, %c0_5, %c0_6] : memref<2x1x128xf32, #tpu.memory_space<vmem>>, vector<1x1x128xf32>
    %5 = vector.shape_cast %4 : vector<1x1x128xf32> to vector<1x128xf32>
    %6 = vector.broadcast %5 : vector<1x128xf32> to vector<16x128xf32>
    %7 = arith.addf %3, %6 : vector<16x128xf32>
    %c0_7 = arith.constant 0 : index
    %c32 = arith.constant 32 : index
    %c0_8 = arith.constant 0 : index
    %8 = vector.load %arg1[%c0_7, %c32, %c0_8] : memref<2x64x128xf32, #tpu.memory_space<vmem>>, vector<1x32x128xf32>
    %9 = vector.shape_cast %8 : vector<1x32x128xf32> to vector<32x128xf32>
    %c1 = arith.constant 1 : index
    %c0_9 = arith.constant 0 : index
    %c0_10 = arith.constant 0 : index
    %10 = vector.load %arg1[%c1, %c0_9, %c0_10] : memref<2x64x128xf32, #tpu.memory_space<vmem>>, vector<1x32x128xf32>
    %11 = vector.shape_cast %10 : vector<1x32x128xf32> to vector<32x128xf32>
    %c1_11 = arith.constant 1 : index
    %c32_12 = arith.constant 32 : index
    %c0_13 = arith.constant 0 : index
    %12 = vector.load %arg1[%c1_11, %c32_12, %c0_13] : memref<2x64x128xf32, #tpu.memory_space<vmem>>, vector<1x32x128xf32>
    %13 = vector.shape_cast %12 : vector<1x32x128xf32> to vector<32x128xf32>
    %c1_14 = arith.constant 1 : index
    %c0_15 = arith.constant 0 : index
    %c0_16 = arith.constant 0 : index
    %14 = vector.load %arg2[%c1_14, %c0_15, %c0_16] : memref<2x1x128xf32, #tpu.memory_space<vmem>>, vector<1x1x128xf32>
    %15 = vector.shape_cast %14 : vector<1x1x128xf32> to vector<1x128xf32>
    %cst_17 = arith.constant 0.000000e+00 : f32
    %16 = vector.broadcast %cst_17 : f32 to vector<2x32xf32>
    %cst_18 = arith.constant 0.000000e+00 : f32
    %17 = vector.broadcast %cst_18 : f32 to vector<2x32xf32>
    %cst_19 = arith.constant 0.000000e+00 : f32
    %18 = vector.broadcast %cst_19 : f32 to vector<2x32xf32>
    %cst_20 = arith.constant 0.000000e+00 : f32
    %19 = vector.broadcast %cst_20 : f32 to vector<2x32xf32>
    %20 = vector.extract_strided_slice %7 {offsets = [0, 0], sizes = [2, 128], strides = [1, 1]} : vector<16x128xf32> to vector<2x128xf32>
    %cst_21 = arith.constant dense<0.000000e+00> : vector<2x128xf32>
    %21 = tpu.matmul %16, %9, %cst_21 {dimension_numbers = #tpu.dot_dimension_numbers<[1], [0], [0], [1], [0, 0, 1, 1], [], []>} : vector<2x32xf32>, vector<32x128xf32>, vector<2x128xf32> -> vector<2x128xf32>
    %22 = arith.addf %20, %21 : vector<2x128xf32>
    %cst_22 = arith.constant 5.000000e-01 : f32
    %23 = vector.broadcast %cst_22 : f32 to vector<2x128xf32>
    %24 = arith.mulf %22, %23 : vector<2x128xf32>
    %25 = math.tanh %24 : vector<2x128xf32>
    %cst_23 = arith.constant 5.000000e-01 : f32
    %26 = vector.broadcast %cst_23 : f32 to vector<2x128xf32>
    %27 = arith.mulf %25, %26 : vector<2x128xf32>
    %cst_24 = arith.constant 5.000000e-01 : f32
    %28 = vector.broadcast %cst_24 : f32 to vector<2x128xf32>
    %29 = arith.addf %27, %28 : vector<2x128xf32>
    %30 = math.tanh %22 : vector<2x128xf32>
    %31 = vector.extract_strided_slice %29 {offsets = [0, 0], sizes = [2, 32], strides = [1, 1]} : vector<2x128xf32> to vector<2x32xf32>
    %32 = vector.extract_strided_slice %29 {offsets = [0, 32], sizes = [2, 32], strides = [1, 1]} : vector<2x128xf32> to vector<2x32xf32>
    %33 = vector.extract_strided_slice %30 {offsets = [0, 64], sizes = [2, 32], strides = [1, 1]} : vector<2x128xf32> to vector<2x32xf32>
    %34 = vector.extract_strided_slice %29 {offsets = [0, 96], sizes = [2, 32], strides = [1, 1]} : vector<2x128xf32> to vector<2x32xf32>
    %35 = arith.mulf %32, %18 : vector<2x32xf32>
    %36 = arith.mulf %31, %33 : vector<2x32xf32>
    %37 = arith.addf %35, %36 : vector<2x32xf32>
    %38 = math.tanh %37 : vector<2x32xf32>
    %39 = arith.mulf %34, %38 : vector<2x32xf32>
    %cst_25 = arith.constant dense<0.000000e+00> : vector<2x128xf32>
    %40 = tpu.matmul %39, %11, %cst_25 {dimension_numbers = #tpu.dot_dimension_numbers<[1], [0], [0], [1], [0, 0, 1, 1], [], []>} : vector<2x32xf32>, vector<32x128xf32>, vector<2x128xf32> -> vector<2x128xf32>
    %cst_26 = arith.constant dense<0.000000e+00> : vector<2x128xf32>
    %41 = tpu.matmul %17, %13, %cst_26 {dimension_numbers = #tpu.dot_dimension_numbers<[1], [0], [0], [1], [0, 0, 1, 1], [], []>} : vector<2x32xf32>, vector<32x128xf32>, vector<2x128xf32> -> vector<2x128xf32>
    %42 = arith.addf %40, %41 : vector<2x128xf32>
    %43 = vector.broadcast %15 : vector<1x128xf32> to vector<2x128xf32>
    %44 = arith.addf %42, %43 : vector<2x128xf32>
    %cst_27 = arith.constant 5.000000e-01 : f32
    %45 = vector.broadcast %cst_27 : f32 to vector<2x128xf32>
    %46 = arith.mulf %44, %45 : vector<2x128xf32>
    %47 = math.tanh %46 : vector<2x128xf32>
    %cst_28 = arith.constant 5.000000e-01 : f32
    %48 = vector.broadcast %cst_28 : f32 to vector<2x128xf32>
    %49 = arith.mulf %47, %48 : vector<2x128xf32>
    %cst_29 = arith.constant 5.000000e-01 : f32
    %50 = vector.broadcast %cst_29 : f32 to vector<2x128xf32>
    %51 = arith.addf %49, %50 : vector<2x128xf32>
    %52 = math.tanh %44 : vector<2x128xf32>
    %53 = vector.extract_strided_slice %51 {offsets = [0, 0], sizes = [2, 32], strides = [1, 1]} : vector<2x128xf32> to vector<2x32xf32>
    %54 = vector.extract_strided_slice %51 {offsets = [0, 32], sizes = [2, 32], strides = [1, 1]} : vector<2x128xf32> to vector<2x32xf32>
    %55 = vector.extract_strided_slice %52 {offsets = [0, 64], sizes = [2, 32], strides = [1, 1]} : vector<2x128xf32> to vector<2x32xf32>
    %56 = vector.extract_strided_slice %51 {offsets = [0, 96], sizes = [2, 32], strides = [1, 1]} : vector<2x128xf32> to vector<2x32xf32>
    %57 = arith.mulf %54, %19 : vector<2x32xf32>
    %58 = arith.mulf %53, %55 : vector<2x32xf32>
    %59 = arith.addf %57, %58 : vector<2x32xf32>
    %60 = math.tanh %59 : vector<2x32xf32>
    %61 = arith.mulf %56, %60 : vector<2x32xf32>
    %62 = vector.extract_strided_slice %7 {offsets = [2, 0], sizes = [2, 128], strides = [1, 1]} : vector<16x128xf32> to vector<2x128xf32>
    %cst_30 = arith.constant dense<0.000000e+00> : vector<2x128xf32>
    %63 = tpu.matmul %39, %9, %cst_30 {dimension_numbers = #tpu.dot_dimension_numbers<[1], [0], [0], [1], [0, 0, 1, 1], [], []>} : vector<2x32xf32>, vector<32x128xf32>, vector<2x128xf32> -> vector<2x128xf32>
    %64 = arith.addf %62, %63 : vector<2x128xf32>
    %cst_31 = arith.constant 5.000000e-01 : f32
    %65 = vector.broadcast %cst_31 : f32 to vector<2x128xf32>
    %66 = arith.mulf %64, %65 : vector<2x128xf32>
    %67 = math.tanh %66 : vector<2x128xf32>
    %cst_32 = arith.constant 5.000000e-01 : f32
    %68 = vector.broadcast %cst_32 : f32 to vector<2x128xf32>
    %69 = arith.mulf %67, %68 : vector<2x128xf32>
    %cst_33 = arith.constant 5.000000e-01 : f32
    %70 = vector.broadcast %cst_33 : f32 to vector<2x128xf32>
    %71 = arith.addf %69, %70 : vector<2x128xf32>
    %72 = math.tanh %64 : vector<2x128xf32>
    %73 = vector.extract_strided_slice %71 {offsets = [0, 0], sizes = [2, 32], strides = [1, 1]} : vector<2x128xf32> to vector<2x32xf32>
    %74 = vector.extract_strided_slice %71 {offsets = [0, 32], sizes = [2, 32], strides = [1, 1]} : vector<2x128xf32> to vector<2x32xf32>
    %75 = vector.extract_strided_slice %72 {offsets = [0, 64], sizes = [2, 32], strides = [1, 1]} : vector<2x128xf32> to vector<2x32xf32>
    %76 = vector.extract_strided_slice %71 {offsets = [0, 96], sizes = [2, 32], strides = [1, 1]} : vector<2x128xf32> to vector<2x32xf32>
    %77 = arith.mulf %74, %37 : vector<2x32xf32>
    %78 = arith.mulf %73, %75 : vector<2x32xf32>
    %79 = arith.addf %77, %78 : vector<2x32xf32>
    %80 = math.tanh %79 : vector<2x32xf32>
    %81 = arith.mulf %76, %80 : vector<2x32xf32>
    %cst_34 = arith.constant dense<0.000000e+00> : vector<2x128xf32>
    %82 = tpu.matmul %81, %11, %cst_34 {dimension_numbers = #tpu.dot_dimension_numbers<[1], [0], [0], [1], [0, 0, 1, 1], [], []>} : vector<2x32xf32>, vector<32x128xf32>, vector<2x128xf32> -> vector<2x128xf32>
    %cst_35 = arith.constant dense<0.000000e+00> : vector<2x128xf32>
    %83 = tpu.matmul %61, %13, %cst_35 {dimension_numbers = #tpu.dot_dimension_numbers<[1], [0], [0], [1], [0, 0, 1, 1], [], []>} : vector<2x32xf32>, vector<32x128xf32>, vector<2x128xf32> -> vector<2x128xf32>
    %84 = arith.addf %82, %83 : vector<2x128xf32>
    %85 = vector.broadcast %15 : vector<1x128xf32> to vector<2x128xf32>
    %86 = arith.addf %84, %85 : vector<2x128xf32>
    %cst_36 = arith.constant 5.000000e-01 : f32
    %87 = vector.broadcast %cst_36 : f32 to vector<2x128xf32>
    %88 = arith.mulf %86, %87 : vector<2x128xf32>
    %89 = math.tanh %88 : vector<2x128xf32>
    %cst_37 = arith.constant 5.000000e-01 : f32
    %90 = vector.broadcast %cst_37 : f32 to vector<2x128xf32>
    %91 = arith.mulf %89, %90 : vector<2x128xf32>
    %cst_38 = arith.constant 5.000000e-01 : f32
    %92 = vector.broadcast %cst_38 : f32 to vector<2x128xf32>
    %93 = arith.addf %91, %92 : vector<2x128xf32>
    %94 = math.tanh %86 : vector<2x128xf32>
    %95 = vector.extract_strided_slice %93 {offsets = [0, 0], sizes = [2, 32], strides = [1, 1]} : vector<2x128xf32> to vector<2x32xf32>
    %96 = vector.extract_strided_slice %93 {offsets = [0, 32], sizes = [2, 32], strides = [1, 1]} : vector<2x128xf32> to vector<2x32xf32>
    %97 = vector.extract_strided_slice %94 {offsets = [0, 64], sizes = [2, 32], strides = [1, 1]} : vector<2x128xf32> to vector<2x32xf32>
    %98 = vector.extract_strided_slice %93 {offsets = [0, 96], sizes = [2, 32], strides = [1, 1]} : vector<2x128xf32> to vector<2x32xf32>
    %99 = arith.mulf %96, %59 : vector<2x32xf32>
    %100 = arith.mulf %95, %97 : vector<2x32xf32>
    %101 = arith.addf %99, %100 : vector<2x32xf32>
    %102 = math.tanh %101 : vector<2x32xf32>
    %103 = arith.mulf %98, %102 : vector<2x32xf32>
    %104 = vector.extract_strided_slice %7 {offsets = [4, 0], sizes = [2, 128], strides = [1, 1]} : vector<16x128xf32> to vector<2x128xf32>
    %cst_39 = arith.constant dense<0.000000e+00> : vector<2x128xf32>
    %105 = tpu.matmul %81, %9, %cst_39 {dimension_numbers = #tpu.dot_dimension_numbers<[1], [0], [0], [1], [0, 0, 1, 1], [], []>} : vector<2x32xf32>, vector<32x128xf32>, vector<2x128xf32> -> vector<2x128xf32>
    %106 = arith.addf %104, %105 : vector<2x128xf32>
    %cst_40 = arith.constant 5.000000e-01 : f32
    %107 = vector.broadcast %cst_40 : f32 to vector<2x128xf32>
    %108 = arith.mulf %106, %107 : vector<2x128xf32>
    %109 = math.tanh %108 : vector<2x128xf32>
    %cst_41 = arith.constant 5.000000e-01 : f32
    %110 = vector.broadcast %cst_41 : f32 to vector<2x128xf32>
    %111 = arith.mulf %109, %110 : vector<2x128xf32>
    %cst_42 = arith.constant 5.000000e-01 : f32
    %112 = vector.broadcast %cst_42 : f32 to vector<2x128xf32>
    %113 = arith.addf %111, %112 : vector<2x128xf32>
    %114 = math.tanh %106 : vector<2x128xf32>
    %115 = vector.extract_strided_slice %113 {offsets = [0, 0], sizes = [2, 32], strides = [1, 1]} : vector<2x128xf32> to vector<2x32xf32>
    %116 = vector.extract_strided_slice %113 {offsets = [0, 32], sizes = [2, 32], strides = [1, 1]} : vector<2x128xf32> to vector<2x32xf32>
    %117 = vector.extract_strided_slice %114 {offsets = [0, 64], sizes = [2, 32], strides = [1, 1]} : vector<2x128xf32> to vector<2x32xf32>
    %118 = vector.extract_strided_slice %113 {offsets = [0, 96], sizes = [2, 32], strides = [1, 1]} : vector<2x128xf32> to vector<2x32xf32>
    %119 = arith.mulf %116, %79 : vector<2x32xf32>
    %120 = arith.mulf %115, %117 : vector<2x32xf32>
    %121 = arith.addf %119, %120 : vector<2x32xf32>
    %122 = math.tanh %121 : vector<2x32xf32>
    %123 = arith.mulf %118, %122 : vector<2x32xf32>
    %cst_43 = arith.constant dense<0.000000e+00> : vector<2x128xf32>
    %124 = tpu.matmul %123, %11, %cst_43 {dimension_numbers = #tpu.dot_dimension_numbers<[1], [0], [0], [1], [0, 0, 1, 1], [], []>} : vector<2x32xf32>, vector<32x128xf32>, vector<2x128xf32> -> vector<2x128xf32>
    %cst_44 = arith.constant dense<0.000000e+00> : vector<2x128xf32>
    %125 = tpu.matmul %103, %13, %cst_44 {dimension_numbers = #tpu.dot_dimension_numbers<[1], [0], [0], [1], [0, 0, 1, 1], [], []>} : vector<2x32xf32>, vector<32x128xf32>, vector<2x128xf32> -> vector<2x128xf32>
    %126 = arith.addf %124, %125 : vector<2x128xf32>
    %127 = vector.broadcast %15 : vector<1x128xf32> to vector<2x128xf32>
    %128 = arith.addf %126, %127 : vector<2x128xf32>
    %cst_45 = arith.constant 5.000000e-01 : f32
    %129 = vector.broadcast %cst_45 : f32 to vector<2x128xf32>
    %130 = arith.mulf %128, %129 : vector<2x128xf32>
    %131 = math.tanh %130 : vector<2x128xf32>
    %cst_46 = arith.constant 5.000000e-01 : f32
    %132 = vector.broadcast %cst_46 : f32 to vector<2x128xf32>
    %133 = arith.mulf %131, %132 : vector<2x128xf32>
    %cst_47 = arith.constant 5.000000e-01 : f32
    %134 = vector.broadcast %cst_47 : f32 to vector<2x128xf32>
    %135 = arith.addf %133, %134 : vector<2x128xf32>
    %136 = math.tanh %128 : vector<2x128xf32>
    %137 = vector.extract_strided_slice %135 {offsets = [0, 0], sizes = [2, 32], strides = [1, 1]} : vector<2x128xf32> to vector<2x32xf32>
    %138 = vector.extract_strided_slice %135 {offsets = [0, 32], sizes = [2, 32], strides = [1, 1]} : vector<2x128xf32> to vector<2x32xf32>
    %139 = vector.extract_strided_slice %136 {offsets = [0, 64], sizes = [2, 32], strides = [1, 1]} : vector<2x128xf32> to vector<2x32xf32>
    %140 = vector.extract_strided_slice %135 {offsets = [0, 96], sizes = [2, 32], strides = [1, 1]} : vector<2x128xf32> to vector<2x32xf32>
    %141 = arith.mulf %138, %101 : vector<2x32xf32>
    %142 = arith.mulf %137, %139 : vector<2x32xf32>
    %143 = arith.addf %141, %142 : vector<2x32xf32>
    %144 = math.tanh %143 : vector<2x32xf32>
    %145 = arith.mulf %140, %144 : vector<2x32xf32>
    %146 = vector.extract_strided_slice %7 {offsets = [6, 0], sizes = [2, 128], strides = [1, 1]} : vector<16x128xf32> to vector<2x128xf32>
    %cst_48 = arith.constant dense<0.000000e+00> : vector<2x128xf32>
    %147 = tpu.matmul %123, %9, %cst_48 {dimension_numbers = #tpu.dot_dimension_numbers<[1], [0], [0], [1], [0, 0, 1, 1], [], []>} : vector<2x32xf32>, vector<32x128xf32>, vector<2x128xf32> -> vector<2x128xf32>
    %148 = arith.addf %146, %147 : vector<2x128xf32>
    %cst_49 = arith.constant 5.000000e-01 : f32
    %149 = vector.broadcast %cst_49 : f32 to vector<2x128xf32>
    %150 = arith.mulf %148, %149 : vector<2x128xf32>
    %151 = math.tanh %150 : vector<2x128xf32>
    %cst_50 = arith.constant 5.000000e-01 : f32
    %152 = vector.broadcast %cst_50 : f32 to vector<2x128xf32>
    %153 = arith.mulf %151, %152 : vector<2x128xf32>
    %cst_51 = arith.constant 5.000000e-01 : f32
    %154 = vector.broadcast %cst_51 : f32 to vector<2x128xf32>
    %155 = arith.addf %153, %154 : vector<2x128xf32>
    %156 = math.tanh %148 : vector<2x128xf32>
    %157 = vector.extract_strided_slice %155 {offsets = [0, 0], sizes = [2, 32], strides = [1, 1]} : vector<2x128xf32> to vector<2x32xf32>
    %158 = vector.extract_strided_slice %155 {offsets = [0, 32], sizes = [2, 32], strides = [1, 1]} : vector<2x128xf32> to vector<2x32xf32>
    %159 = vector.extract_strided_slice %156 {offsets = [0, 64], sizes = [2, 32], strides = [1, 1]} : vector<2x128xf32> to vector<2x32xf32>
    %160 = vector.extract_strided_slice %155 {offsets = [0, 96], sizes = [2, 32], strides = [1, 1]} : vector<2x128xf32> to vector<2x32xf32>
    %161 = arith.mulf %158, %121 : vector<2x32xf32>
    %162 = arith.mulf %157, %159 : vector<2x32xf32>
    %163 = arith.addf %161, %162 : vector<2x32xf32>
    %164 = math.tanh %163 : vector<2x32xf32>
    %165 = arith.mulf %160, %164 : vector<2x32xf32>
    %cst_52 = arith.constant dense<0.000000e+00> : vector<2x128xf32>
    %166 = tpu.matmul %165, %11, %cst_52 {dimension_numbers = #tpu.dot_dimension_numbers<[1], [0], [0], [1], [0, 0, 1, 1], [], []>} : vector<2x32xf32>, vector<32x128xf32>, vector<2x128xf32> -> vector<2x128xf32>
    %cst_53 = arith.constant dense<0.000000e+00> : vector<2x128xf32>
    %167 = tpu.matmul %145, %13, %cst_53 {dimension_numbers = #tpu.dot_dimension_numbers<[1], [0], [0], [1], [0, 0, 1, 1], [], []>} : vector<2x32xf32>, vector<32x128xf32>, vector<2x128xf32> -> vector<2x128xf32>
    %168 = arith.addf %166, %167 : vector<2x128xf32>
    %169 = vector.broadcast %15 : vector<1x128xf32> to vector<2x128xf32>
    %170 = arith.addf %168, %169 : vector<2x128xf32>
    %cst_54 = arith.constant 5.000000e-01 : f32
    %171 = vector.broadcast %cst_54 : f32 to vector<2x128xf32>
    %172 = arith.mulf %170, %171 : vector<2x128xf32>
    %173 = math.tanh %172 : vector<2x128xf32>
    %cst_55 = arith.constant 5.000000e-01 : f32
    %174 = vector.broadcast %cst_55 : f32 to vector<2x128xf32>
    %175 = arith.mulf %173, %174 : vector<2x128xf32>
    %cst_56 = arith.constant 5.000000e-01 : f32
    %176 = vector.broadcast %cst_56 : f32 to vector<2x128xf32>
    %177 = arith.addf %175, %176 : vector<2x128xf32>
    %178 = math.tanh %170 : vector<2x128xf32>
    %179 = vector.extract_strided_slice %177 {offsets = [0, 0], sizes = [2, 32], strides = [1, 1]} : vector<2x128xf32> to vector<2x32xf32>
    %180 = vector.extract_strided_slice %177 {offsets = [0, 32], sizes = [2, 32], strides = [1, 1]} : vector<2x128xf32> to vector<2x32xf32>
    %181 = vector.extract_strided_slice %178 {offsets = [0, 64], sizes = [2, 32], strides = [1, 1]} : vector<2x128xf32> to vector<2x32xf32>
    %182 = vector.extract_strided_slice %177 {offsets = [0, 96], sizes = [2, 32], strides = [1, 1]} : vector<2x128xf32> to vector<2x32xf32>
    %183 = arith.mulf %180, %143 : vector<2x32xf32>
    %184 = arith.mulf %179, %181 : vector<2x32xf32>
    %185 = arith.addf %183, %184 : vector<2x32xf32>
    %186 = math.tanh %185 : vector<2x32xf32>
    %187 = arith.mulf %182, %186 : vector<2x32xf32>
    %188 = vector.extract_strided_slice %7 {offsets = [8, 0], sizes = [2, 128], strides = [1, 1]} : vector<16x128xf32> to vector<2x128xf32>
    %cst_57 = arith.constant dense<0.000000e+00> : vector<2x128xf32>
    %189 = tpu.matmul %165, %9, %cst_57 {dimension_numbers = #tpu.dot_dimension_numbers<[1], [0], [0], [1], [0, 0, 1, 1], [], []>} : vector<2x32xf32>, vector<32x128xf32>, vector<2x128xf32> -> vector<2x128xf32>
    %190 = arith.addf %188, %189 : vector<2x128xf32>
    %cst_58 = arith.constant 5.000000e-01 : f32
    %191 = vector.broadcast %cst_58 : f32 to vector<2x128xf32>
    %192 = arith.mulf %190, %191 : vector<2x128xf32>
    %193 = math.tanh %192 : vector<2x128xf32>
    %cst_59 = arith.constant 5.000000e-01 : f32
    %194 = vector.broadcast %cst_59 : f32 to vector<2x128xf32>
    %195 = arith.mulf %193, %194 : vector<2x128xf32>
    %cst_60 = arith.constant 5.000000e-01 : f32
    %196 = vector.broadcast %cst_60 : f32 to vector<2x128xf32>
    %197 = arith.addf %195, %196 : vector<2x128xf32>
    %198 = math.tanh %190 : vector<2x128xf32>
    %199 = vector.extract_strided_slice %197 {offsets = [0, 0], sizes = [2, 32], strides = [1, 1]} : vector<2x128xf32> to vector<2x32xf32>
    %200 = vector.extract_strided_slice %197 {offsets = [0, 32], sizes = [2, 32], strides = [1, 1]} : vector<2x128xf32> to vector<2x32xf32>
    %201 = vector.extract_strided_slice %198 {offsets = [0, 64], sizes = [2, 32], strides = [1, 1]} : vector<2x128xf32> to vector<2x32xf32>
    %202 = vector.extract_strided_slice %197 {offsets = [0, 96], sizes = [2, 32], strides = [1, 1]} : vector<2x128xf32> to vector<2x32xf32>
    %203 = arith.mulf %200, %163 : vector<2x32xf32>
    %204 = arith.mulf %199, %201 : vector<2x32xf32>
    %205 = arith.addf %203, %204 : vector<2x32xf32>
    %206 = math.tanh %205 : vector<2x32xf32>
    %207 = arith.mulf %202, %206 : vector<2x32xf32>
    %cst_61 = arith.constant dense<0.000000e+00> : vector<2x128xf32>
    %208 = tpu.matmul %207, %11, %cst_61 {dimension_numbers = #tpu.dot_dimension_numbers<[1], [0], [0], [1], [0, 0, 1, 1], [], []>} : vector<2x32xf32>, vector<32x128xf32>, vector<2x128xf32> -> vector<2x128xf32>
    %cst_62 = arith.constant dense<0.000000e+00> : vector<2x128xf32>
    %209 = tpu.matmul %187, %13, %cst_62 {dimension_numbers = #tpu.dot_dimension_numbers<[1], [0], [0], [1], [0, 0, 1, 1], [], []>} : vector<2x32xf32>, vector<32x128xf32>, vector<2x128xf32> -> vector<2x128xf32>
    %210 = arith.addf %208, %209 : vector<2x128xf32>
    %211 = vector.broadcast %15 : vector<1x128xf32> to vector<2x128xf32>
    %212 = arith.addf %210, %211 : vector<2x128xf32>
    %cst_63 = arith.constant 5.000000e-01 : f32
    %213 = vector.broadcast %cst_63 : f32 to vector<2x128xf32>
    %214 = arith.mulf %212, %213 : vector<2x128xf32>
    %215 = math.tanh %214 : vector<2x128xf32>
    %cst_64 = arith.constant 5.000000e-01 : f32
    %216 = vector.broadcast %cst_64 : f32 to vector<2x128xf32>
    %217 = arith.mulf %215, %216 : vector<2x128xf32>
    %cst_65 = arith.constant 5.000000e-01 : f32
    %218 = vector.broadcast %cst_65 : f32 to vector<2x128xf32>
    %219 = arith.addf %217, %218 : vector<2x128xf32>
    %220 = math.tanh %212 : vector<2x128xf32>
    %221 = vector.extract_strided_slice %219 {offsets = [0, 0], sizes = [2, 32], strides = [1, 1]} : vector<2x128xf32> to vector<2x32xf32>
    %222 = vector.extract_strided_slice %219 {offsets = [0, 32], sizes = [2, 32], strides = [1, 1]} : vector<2x128xf32> to vector<2x32xf32>
    %223 = vector.extract_strided_slice %220 {offsets = [0, 64], sizes = [2, 32], strides = [1, 1]} : vector<2x128xf32> to vector<2x32xf32>
    %224 = vector.extract_strided_slice %219 {offsets = [0, 96], sizes = [2, 32], strides = [1, 1]} : vector<2x128xf32> to vector<2x32xf32>
    %225 = arith.mulf %222, %185 : vector<2x32xf32>
    %226 = arith.mulf %221, %223 : vector<2x32xf32>
    %227 = arith.addf %225, %226 : vector<2x32xf32>
    %228 = math.tanh %227 : vector<2x32xf32>
    %229 = arith.mulf %224, %228 : vector<2x32xf32>
    %230 = vector.extract_strided_slice %7 {offsets = [10, 0], sizes = [2, 128], strides = [1, 1]} : vector<16x128xf32> to vector<2x128xf32>
    %cst_66 = arith.constant dense<0.000000e+00> : vector<2x128xf32>
    %231 = tpu.matmul %207, %9, %cst_66 {dimension_numbers = #tpu.dot_dimension_numbers<[1], [0], [0], [1], [0, 0, 1, 1], [], []>} : vector<2x32xf32>, vector<32x128xf32>, vector<2x128xf32> -> vector<2x128xf32>
    %232 = arith.addf %230, %231 : vector<2x128xf32>
    %cst_67 = arith.constant 5.000000e-01 : f32
    %233 = vector.broadcast %cst_67 : f32 to vector<2x128xf32>
    %234 = arith.mulf %232, %233 : vector<2x128xf32>
    %235 = math.tanh %234 : vector<2x128xf32>
    %cst_68 = arith.constant 5.000000e-01 : f32
    %236 = vector.broadcast %cst_68 : f32 to vector<2x128xf32>
    %237 = arith.mulf %235, %236 : vector<2x128xf32>
    %cst_69 = arith.constant 5.000000e-01 : f32
    %238 = vector.broadcast %cst_69 : f32 to vector<2x128xf32>
    %239 = arith.addf %237, %238 : vector<2x128xf32>
    %240 = math.tanh %232 : vector<2x128xf32>
    %241 = vector.extract_strided_slice %239 {offsets = [0, 0], sizes = [2, 32], strides = [1, 1]} : vector<2x128xf32> to vector<2x32xf32>
    %242 = vector.extract_strided_slice %239 {offsets = [0, 32], sizes = [2, 32], strides = [1, 1]} : vector<2x128xf32> to vector<2x32xf32>
    %243 = vector.extract_strided_slice %240 {offsets = [0, 64], sizes = [2, 32], strides = [1, 1]} : vector<2x128xf32> to vector<2x32xf32>
    %244 = vector.extract_strided_slice %239 {offsets = [0, 96], sizes = [2, 32], strides = [1, 1]} : vector<2x128xf32> to vector<2x32xf32>
    %245 = arith.mulf %242, %205 : vector<2x32xf32>
    %246 = arith.mulf %241, %243 : vector<2x32xf32>
    %247 = arith.addf %245, %246 : vector<2x32xf32>
    %248 = math.tanh %247 : vector<2x32xf32>
    %249 = arith.mulf %244, %248 : vector<2x32xf32>
    %cst_70 = arith.constant dense<0.000000e+00> : vector<2x128xf32>
    %250 = tpu.matmul %249, %11, %cst_70 {dimension_numbers = #tpu.dot_dimension_numbers<[1], [0], [0], [1], [0, 0, 1, 1], [], []>} : vector<2x32xf32>, vector<32x128xf32>, vector<2x128xf32> -> vector<2x128xf32>
    %cst_71 = arith.constant dense<0.000000e+00> : vector<2x128xf32>
    %251 = tpu.matmul %229, %13, %cst_71 {dimension_numbers = #tpu.dot_dimension_numbers<[1], [0], [0], [1], [0, 0, 1, 1], [], []>} : vector<2x32xf32>, vector<32x128xf32>, vector<2x128xf32> -> vector<2x128xf32>
    %252 = arith.addf %250, %251 : vector<2x128xf32>
    %253 = vector.broadcast %15 : vector<1x128xf32> to vector<2x128xf32>
    %254 = arith.addf %252, %253 : vector<2x128xf32>
    %cst_72 = arith.constant 5.000000e-01 : f32
    %255 = vector.broadcast %cst_72 : f32 to vector<2x128xf32>
    %256 = arith.mulf %254, %255 : vector<2x128xf32>
    %257 = math.tanh %256 : vector<2x128xf32>
    %cst_73 = arith.constant 5.000000e-01 : f32
    %258 = vector.broadcast %cst_73 : f32 to vector<2x128xf32>
    %259 = arith.mulf %257, %258 : vector<2x128xf32>
    %cst_74 = arith.constant 5.000000e-01 : f32
    %260 = vector.broadcast %cst_74 : f32 to vector<2x128xf32>
    %261 = arith.addf %259, %260 : vector<2x128xf32>
    %262 = math.tanh %254 : vector<2x128xf32>
    %263 = vector.extract_strided_slice %261 {offsets = [0, 0], sizes = [2, 32], strides = [1, 1]} : vector<2x128xf32> to vector<2x32xf32>
    %264 = vector.extract_strided_slice %261 {offsets = [0, 32], sizes = [2, 32], strides = [1, 1]} : vector<2x128xf32> to vector<2x32xf32>
    %265 = vector.extract_strided_slice %262 {offsets = [0, 64], sizes = [2, 32], strides = [1, 1]} : vector<2x128xf32> to vector<2x32xf32>
    %266 = vector.extract_strided_slice %261 {offsets = [0, 96], sizes = [2, 32], strides = [1, 1]} : vector<2x128xf32> to vector<2x32xf32>
    %267 = arith.mulf %264, %227 : vector<2x32xf32>
    %268 = arith.mulf %263, %265 : vector<2x32xf32>
    %269 = arith.addf %267, %268 : vector<2x32xf32>
    %270 = math.tanh %269 : vector<2x32xf32>
    %271 = arith.mulf %266, %270 : vector<2x32xf32>
    %272 = vector.extract_strided_slice %7 {offsets = [12, 0], sizes = [2, 128], strides = [1, 1]} : vector<16x128xf32> to vector<2x128xf32>
    %cst_75 = arith.constant dense<0.000000e+00> : vector<2x128xf32>
    %273 = tpu.matmul %249, %9, %cst_75 {dimension_numbers = #tpu.dot_dimension_numbers<[1], [0], [0], [1], [0, 0, 1, 1], [], []>} : vector<2x32xf32>, vector<32x128xf32>, vector<2x128xf32> -> vector<2x128xf32>
    %274 = arith.addf %272, %273 : vector<2x128xf32>
    %cst_76 = arith.constant 5.000000e-01 : f32
    %275 = vector.broadcast %cst_76 : f32 to vector<2x128xf32>
    %276 = arith.mulf %274, %275 : vector<2x128xf32>
    %277 = math.tanh %276 : vector<2x128xf32>
    %cst_77 = arith.constant 5.000000e-01 : f32
    %278 = vector.broadcast %cst_77 : f32 to vector<2x128xf32>
    %279 = arith.mulf %277, %278 : vector<2x128xf32>
    %cst_78 = arith.constant 5.000000e-01 : f32
    %280 = vector.broadcast %cst_78 : f32 to vector<2x128xf32>
    %281 = arith.addf %279, %280 : vector<2x128xf32>
    %282 = math.tanh %274 : vector<2x128xf32>
    %283 = vector.extract_strided_slice %281 {offsets = [0, 0], sizes = [2, 32], strides = [1, 1]} : vector<2x128xf32> to vector<2x32xf32>
    %284 = vector.extract_strided_slice %281 {offsets = [0, 32], sizes = [2, 32], strides = [1, 1]} : vector<2x128xf32> to vector<2x32xf32>
    %285 = vector.extract_strided_slice %282 {offsets = [0, 64], sizes = [2, 32], strides = [1, 1]} : vector<2x128xf32> to vector<2x32xf32>
    %286 = vector.extract_strided_slice %281 {offsets = [0, 96], sizes = [2, 32], strides = [1, 1]} : vector<2x128xf32> to vector<2x32xf32>
    %287 = arith.mulf %284, %247 : vector<2x32xf32>
    %288 = arith.mulf %283, %285 : vector<2x32xf32>
    %289 = arith.addf %287, %288 : vector<2x32xf32>
    %290 = math.tanh %289 : vector<2x32xf32>
    %291 = arith.mulf %286, %290 : vector<2x32xf32>
    %cst_79 = arith.constant dense<0.000000e+00> : vector<2x128xf32>
    %292 = tpu.matmul %291, %11, %cst_79 {dimension_numbers = #tpu.dot_dimension_numbers<[1], [0], [0], [1], [0, 0, 1, 1], [], []>} : vector<2x32xf32>, vector<32x128xf32>, vector<2x128xf32> -> vector<2x128xf32>
    %cst_80 = arith.constant dense<0.000000e+00> : vector<2x128xf32>
    %293 = tpu.matmul %271, %13, %cst_80 {dimension_numbers = #tpu.dot_dimension_numbers<[1], [0], [0], [1], [0, 0, 1, 1], [], []>} : vector<2x32xf32>, vector<32x128xf32>, vector<2x128xf32> -> vector<2x128xf32>
    %294 = arith.addf %292, %293 : vector<2x128xf32>
    %295 = vector.broadcast %15 : vector<1x128xf32> to vector<2x128xf32>
    %296 = arith.addf %294, %295 : vector<2x128xf32>
    %cst_81 = arith.constant 5.000000e-01 : f32
    %297 = vector.broadcast %cst_81 : f32 to vector<2x128xf32>
    %298 = arith.mulf %296, %297 : vector<2x128xf32>
    %299 = math.tanh %298 : vector<2x128xf32>
    %cst_82 = arith.constant 5.000000e-01 : f32
    %300 = vector.broadcast %cst_82 : f32 to vector<2x128xf32>
    %301 = arith.mulf %299, %300 : vector<2x128xf32>
    %cst_83 = arith.constant 5.000000e-01 : f32
    %302 = vector.broadcast %cst_83 : f32 to vector<2x128xf32>
    %303 = arith.addf %301, %302 : vector<2x128xf32>
    %304 = math.tanh %296 : vector<2x128xf32>
    %305 = vector.extract_strided_slice %303 {offsets = [0, 0], sizes = [2, 32], strides = [1, 1]} : vector<2x128xf32> to vector<2x32xf32>
    %306 = vector.extract_strided_slice %303 {offsets = [0, 32], sizes = [2, 32], strides = [1, 1]} : vector<2x128xf32> to vector<2x32xf32>
    %307 = vector.extract_strided_slice %304 {offsets = [0, 64], sizes = [2, 32], strides = [1, 1]} : vector<2x128xf32> to vector<2x32xf32>
    %308 = vector.extract_strided_slice %303 {offsets = [0, 96], sizes = [2, 32], strides = [1, 1]} : vector<2x128xf32> to vector<2x32xf32>
    %309 = arith.mulf %306, %269 : vector<2x32xf32>
    %310 = arith.mulf %305, %307 : vector<2x32xf32>
    %311 = arith.addf %309, %310 : vector<2x32xf32>
    %312 = math.tanh %311 : vector<2x32xf32>
    %313 = arith.mulf %308, %312 : vector<2x32xf32>
    %314 = vector.extract_strided_slice %7 {offsets = [14, 0], sizes = [2, 128], strides = [1, 1]} : vector<16x128xf32> to vector<2x128xf32>
    %cst_84 = arith.constant dense<0.000000e+00> : vector<2x128xf32>
    %315 = tpu.matmul %291, %9, %cst_84 {dimension_numbers = #tpu.dot_dimension_numbers<[1], [0], [0], [1], [0, 0, 1, 1], [], []>} : vector<2x32xf32>, vector<32x128xf32>, vector<2x128xf32> -> vector<2x128xf32>
    %316 = arith.addf %314, %315 : vector<2x128xf32>
    %cst_85 = arith.constant 5.000000e-01 : f32
    %317 = vector.broadcast %cst_85 : f32 to vector<2x128xf32>
    %318 = arith.mulf %316, %317 : vector<2x128xf32>
    %319 = math.tanh %318 : vector<2x128xf32>
    %cst_86 = arith.constant 5.000000e-01 : f32
    %320 = vector.broadcast %cst_86 : f32 to vector<2x128xf32>
    %321 = arith.mulf %319, %320 : vector<2x128xf32>
    %cst_87 = arith.constant 5.000000e-01 : f32
    %322 = vector.broadcast %cst_87 : f32 to vector<2x128xf32>
    %323 = arith.addf %321, %322 : vector<2x128xf32>
    %324 = math.tanh %316 : vector<2x128xf32>
    %325 = vector.extract_strided_slice %323 {offsets = [0, 0], sizes = [2, 32], strides = [1, 1]} : vector<2x128xf32> to vector<2x32xf32>
    %326 = vector.extract_strided_slice %323 {offsets = [0, 32], sizes = [2, 32], strides = [1, 1]} : vector<2x128xf32> to vector<2x32xf32>
    %327 = vector.extract_strided_slice %324 {offsets = [0, 64], sizes = [2, 32], strides = [1, 1]} : vector<2x128xf32> to vector<2x32xf32>
    %328 = vector.extract_strided_slice %323 {offsets = [0, 96], sizes = [2, 32], strides = [1, 1]} : vector<2x128xf32> to vector<2x32xf32>
    %329 = arith.mulf %326, %289 : vector<2x32xf32>
    %330 = arith.mulf %325, %327 : vector<2x32xf32>
    %331 = arith.addf %329, %330 : vector<2x32xf32>
    %332 = math.tanh %331 : vector<2x32xf32>
    %333 = arith.mulf %328, %332 : vector<2x32xf32>
    %cst_88 = arith.constant dense<0.000000e+00> : vector<2x128xf32>
    %334 = tpu.matmul %333, %11, %cst_88 {dimension_numbers = #tpu.dot_dimension_numbers<[1], [0], [0], [1], [0, 0, 1, 1], [], []>} : vector<2x32xf32>, vector<32x128xf32>, vector<2x128xf32> -> vector<2x128xf32>
    %cst_89 = arith.constant dense<0.000000e+00> : vector<2x128xf32>
    %335 = tpu.matmul %313, %13, %cst_89 {dimension_numbers = #tpu.dot_dimension_numbers<[1], [0], [0], [1], [0, 0, 1, 1], [], []>} : vector<2x32xf32>, vector<32x128xf32>, vector<2x128xf32> -> vector<2x128xf32>
    %336 = arith.addf %334, %335 : vector<2x128xf32>
    %337 = vector.broadcast %15 : vector<1x128xf32> to vector<2x128xf32>
    %338 = arith.addf %336, %337 : vector<2x128xf32>
    %cst_90 = arith.constant 5.000000e-01 : f32
    %339 = vector.broadcast %cst_90 : f32 to vector<2x128xf32>
    %340 = arith.mulf %338, %339 : vector<2x128xf32>
    %341 = math.tanh %340 : vector<2x128xf32>
    %cst_91 = arith.constant 5.000000e-01 : f32
    %342 = vector.broadcast %cst_91 : f32 to vector<2x128xf32>
    %343 = arith.mulf %341, %342 : vector<2x128xf32>
    %cst_92 = arith.constant 5.000000e-01 : f32
    %344 = vector.broadcast %cst_92 : f32 to vector<2x128xf32>
    %345 = arith.addf %343, %344 : vector<2x128xf32>
    %346 = math.tanh %338 : vector<2x128xf32>
    %347 = vector.extract_strided_slice %345 {offsets = [0, 0], sizes = [2, 32], strides = [1, 1]} : vector<2x128xf32> to vector<2x32xf32>
    %348 = vector.extract_strided_slice %345 {offsets = [0, 32], sizes = [2, 32], strides = [1, 1]} : vector<2x128xf32> to vector<2x32xf32>
    %349 = vector.extract_strided_slice %346 {offsets = [0, 64], sizes = [2, 32], strides = [1, 1]} : vector<2x128xf32> to vector<2x32xf32>
    %350 = vector.extract_strided_slice %345 {offsets = [0, 96], sizes = [2, 32], strides = [1, 1]} : vector<2x128xf32> to vector<2x32xf32>
    %351 = arith.mulf %348, %311 : vector<2x32xf32>
    %352 = arith.mulf %347, %349 : vector<2x32xf32>
    %353 = arith.addf %351, %352 : vector<2x32xf32>
    %354 = math.tanh %353 : vector<2x32xf32>
    %355 = arith.mulf %350, %354 : vector<2x32xf32>
    %356 = tpu.concatenate %61, %103, %145, %187, %229, %271, %313, %355 in 0 : vector<2x32xf32>, vector<2x32xf32>, vector<2x32xf32>, vector<2x32xf32>, vector<2x32xf32>, vector<2x32xf32>, vector<2x32xf32>, vector<2x32xf32> -> vector<16x32xf32>
    %c0_93 = arith.constant 0 : index
    %c0_94 = arith.constant 0 : index
    %357 = vector.load %arg3[%c0_93, %c0_94] : memref<32x32xf32, #tpu.memory_space<vmem>>, vector<32x32xf32>
    %cst_95 = arith.constant dense<0.000000e+00> : vector<2x32xf32>
    %358 = tpu.matmul %353, %357, %cst_95 {dimension_numbers = #tpu.dot_dimension_numbers<[1], [0], [0], [1], [0, 0, 1, 1], [], []>} : vector<2x32xf32>, vector<32x32xf32>, vector<2x32xf32> -> vector<2x32xf32>
    %c0_96 = arith.constant 0 : index
    %c0_97 = arith.constant 0 : index
    %359 = vector.load %arg5[%c0_96, %c0_97] : memref<1x32xf32, #tpu.memory_space<vmem>>, vector<1x32xf32>
    %360 = vector.broadcast %359 : vector<1x32xf32> to vector<2x32xf32>
    %361 = arith.addf %358, %360 : vector<2x32xf32>
    %362 = tpu.concatenate %361, %361, %361, %361, %361, %361, %361, %361 in 0 : vector<2x32xf32>, vector<2x32xf32>, vector<2x32xf32>, vector<2x32xf32>, vector<2x32xf32>, vector<2x32xf32>, vector<2x32xf32>, vector<2x32xf32> -> vector<16x32xf32>
    %c0_98 = arith.constant 0 : index
    %c0_99 = arith.constant 0 : index
    %363 = vector.load %arg4[%c0_98, %c0_99] : memref<32x32xf32, #tpu.memory_space<vmem>>, vector<32x32xf32>
    %cst_100 = arith.constant dense<0.000000e+00> : vector<16x32xf32>
    %364 = tpu.matmul %356, %363, %cst_100 {dimension_numbers = #tpu.dot_dimension_numbers<[1], [0], [0], [1], [0, 0, 1, 1], [], []>} : vector<16x32xf32>, vector<32x32xf32>, vector<16x32xf32> -> vector<16x32xf32>
    %365 = arith.addf %364, %362 : vector<16x32xf32>
    %366 = math.tanh %365 : vector<16x32xf32>
    %c0_101 = arith.constant 0 : index
    %c0_102 = arith.constant 0 : index
    %367 = vector.load %arg6[%c0_101, %c0_102] : memref<32x1xf32, #tpu.memory_space<vmem>>, vector<32x1xf32>
    %cst_103 = arith.constant dense<0.000000e+00> : vector<16x1xf32>
    %368 = tpu.matmul %366, %367, %cst_103 {dimension_numbers = #tpu.dot_dimension_numbers<[1], [0], [0], [1], [0, 0, 1, 1], [], []>} : vector<16x32xf32>, vector<32x1xf32>, vector<16x1xf32> -> vector<16x1xf32>
    %c0_104 = arith.constant 0 : index
    %c0_105 = arith.constant 0 : index
    %369 = vector.load %arg7[%c0_104, %c0_105] : memref<1x1xf32, #tpu.memory_space<vmem>>, vector<1x1xf32>
    %370 = vector.broadcast %369 : vector<1x1xf32> to vector<16x1xf32>
    %371 = arith.addf %368, %370 : vector<16x1xf32>
    %372 = vector.extract_strided_slice %371 {offsets = [0, 0], sizes = [2, 1], strides = [1, 1]} : vector<16x1xf32> to vector<2x1xf32>
    %373 = vector.extract_strided_slice %371 {offsets = [2, 0], sizes = [2, 1], strides = [1, 1]} : vector<16x1xf32> to vector<2x1xf32>
    %374 = vector.extract_strided_slice %371 {offsets = [4, 0], sizes = [2, 1], strides = [1, 1]} : vector<16x1xf32> to vector<2x1xf32>
    %375 = vector.extract_strided_slice %371 {offsets = [6, 0], sizes = [2, 1], strides = [1, 1]} : vector<16x1xf32> to vector<2x1xf32>
    %376 = vector.extract_strided_slice %371 {offsets = [8, 0], sizes = [2, 1], strides = [1, 1]} : vector<16x1xf32> to vector<2x1xf32>
    %377 = vector.extract_strided_slice %371 {offsets = [10, 0], sizes = [2, 1], strides = [1, 1]} : vector<16x1xf32> to vector<2x1xf32>
    %378 = vector.extract_strided_slice %371 {offsets = [12, 0], sizes = [2, 1], strides = [1, 1]} : vector<16x1xf32> to vector<2x1xf32>
    %379 = vector.extract_strided_slice %371 {offsets = [14, 0], sizes = [2, 1], strides = [1, 1]} : vector<16x1xf32> to vector<2x1xf32>
    %380 = tpu.concatenate %372, %373, %374, %375, %376, %377, %378, %379 in 1 : vector<2x1xf32>, vector<2x1xf32>, vector<2x1xf32>, vector<2x1xf32>, vector<2x1xf32>, vector<2x1xf32>, vector<2x1xf32>, vector<2x1xf32> -> vector<2x8xf32>
    %cst_106 = arith.constant dense<0xFF800000> : vector<2xf32>
    %381 = vector.multi_reduction <maximumf>, %380, %cst_106 [1] : vector<2x8xf32> to vector<2xf32>
    %382 = vector.shape_cast %381 : vector<2xf32> to vector<2x1xf32>
    %383 = vector.broadcast %382 : vector<2x1xf32> to vector<2x8xf32>
    %384 = arith.subf %380, %383 : vector<2x8xf32>
    %385 = math.exp %384 : vector<2x8xf32>
    %cst_107 = arith.constant dense<0.000000e+00> : vector<2xf32>
    %386 = vector.multi_reduction <add>, %385, %cst_107 [1] : vector<2x8xf32> to vector<2xf32>
    %387 = vector.shape_cast %386 : vector<2xf32> to vector<2x1xf32>
    %388 = tpu.reciprocal %387 {approx = true} : vector<2x1xf32> -> vector<2x1xf32>
    %389 = vector.broadcast %388 : vector<2x1xf32> to vector<2x8xf32>
    %390 = arith.mulf %385, %389 : vector<2x8xf32>
    %c0_108 = arith.constant 0 : index
    %c0_109 = arith.constant 0 : index
    %391 = vector.load %arg11[%c0_108, %c0_109] : memref<2x8xf32, #tpu.memory_space<vmem>>, vector<2x8xf32>
    tpu.vector_store %arg11[%c0_108, %c0_109], %390 {strides = array<i32>} : memref<2x8xf32, #tpu.memory_space<vmem>>, vector<2x8xf32>,
    %cst_110 = arith.constant 0.000000e+00 : f32
    %392 = vector.broadcast %cst_110 : f32 to vector<2x32xf32>
    %393 = vector.extract_strided_slice %390 {offsets = [0, 0], sizes = [2, 1], strides = [1, 1]} : vector<2x8xf32> to vector<2x1xf32>
    %394 = vector.broadcast %393 : vector<2x1xf32> to vector<2x32xf32>
    %395 = arith.mulf %394, %61 : vector<2x32xf32>
    %396 = arith.addf %392, %395 : vector<2x32xf32>
    %397 = vector.extract_strided_slice %390 {offsets = [0, 1], sizes = [2, 1], strides = [1, 1]} : vector<2x8xf32> to vector<2x1xf32>
    %398 = vector.broadcast %397 : vector<2x1xf32> to vector<2x32xf32>
    %399 = arith.mulf %398, %103 : vector<2x32xf32>
    %400 = arith.addf %396, %399 : vector<2x32xf32>
    %401 = vector.extract_strided_slice %390 {offsets = [0, 2], sizes = [2, 1], strides = [1, 1]} : vector<2x8xf32> to vector<2x1xf32>
    %402 = vector.broadcast %401 : vector<2x1xf32> to vector<2x32xf32>
    %403 = arith.mulf %402, %145 : vector<2x32xf32>
    %404 = arith.addf %400, %403 : vector<2x32xf32>
    %405 = vector.extract_strided_slice %390 {offsets = [0, 3], sizes = [2, 1], strides = [1, 1]} : vector<2x8xf32> to vector<2x1xf32>
    %406 = vector.broadcast %405 : vector<2x1xf32> to vector<2x32xf32>
    %407 = arith.mulf %406, %187 : vector<2x32xf32>
    %408 = arith.addf %404, %407 : vector<2x32xf32>
    %409 = vector.extract_strided_slice %390 {offsets = [0, 4], sizes = [2, 1], strides = [1, 1]} : vector<2x8xf32> to vector<2x1xf32>
    %410 = vector.broadcast %409 : vector<2x1xf32> to vector<2x32xf32>
    %411 = arith.mulf %410, %229 : vector<2x32xf32>
    %412 = arith.addf %408, %411 : vector<2x32xf32>
    %413 = vector.extract_strided_slice %390 {offsets = [0, 5], sizes = [2, 1], strides = [1, 1]} : vector<2x8xf32> to vector<2x1xf32>
    %414 = vector.broadcast %413 : vector<2x1xf32> to vector<2x32xf32>
    %415 = arith.mulf %414, %271 : vector<2x32xf32>
    %416 = arith.addf %412, %415 : vector<2x32xf32>
    %417 = vector.extract_strided_slice %390 {offsets = [0, 6], sizes = [2, 1], strides = [1, 1]} : vector<2x8xf32> to vector<2x1xf32>
    %418 = vector.broadcast %417 : vector<2x1xf32> to vector<2x32xf32>
    %419 = arith.mulf %418, %313 : vector<2x32xf32>
    %420 = arith.addf %416, %419 : vector<2x32xf32>
    %421 = vector.extract_strided_slice %390 {offsets = [0, 7], sizes = [2, 1], strides = [1, 1]} : vector<2x8xf32> to vector<2x1xf32>
    %422 = vector.broadcast %421 : vector<2x1xf32> to vector<2x32xf32>
    %423 = arith.mulf %422, %355 : vector<2x32xf32>
    %424 = arith.addf %420, %423 : vector<2x32xf32>
    %c0_111 = arith.constant 0 : index
    %c0_112 = arith.constant 0 : index
    %425 = vector.load %arg8[%c0_111, %c0_112] : memref<32x1xf32, #tpu.memory_space<vmem>>, vector<32x1xf32>
    %cst_113 = arith.constant dense<0.000000e+00> : vector<2x1xf32>
    %426 = tpu.matmul %424, %425, %cst_113 {dimension_numbers = #tpu.dot_dimension_numbers<[1], [0], [0], [1], [0, 0, 1, 1], [], []>} : vector<2x32xf32>, vector<32x1xf32>, vector<2x1xf32> -> vector<2x1xf32>
    %c0_114 = arith.constant 0 : index
    %c0_115 = arith.constant 0 : index
    %427 = vector.load %arg9[%c0_114, %c0_115] : memref<32x1xf32, #tpu.memory_space<vmem>>, vector<32x1xf32>
    %cst_116 = arith.constant dense<0.000000e+00> : vector<2x1xf32>
    %428 = tpu.matmul %353, %427, %cst_116 {dimension_numbers = #tpu.dot_dimension_numbers<[1], [0], [0], [1], [0, 0, 1, 1], [], []>} : vector<2x32xf32>, vector<32x1xf32>, vector<2x1xf32> -> vector<2x1xf32>
    %429 = arith.addf %426, %428 : vector<2x1xf32>
    %c0_117 = arith.constant 0 : index
    %c0_118 = arith.constant 0 : index
    %430 = vector.load %arg10[%c0_117, %c0_118] : memref<1x1xf32, #tpu.memory_space<vmem>>, vector<1x1xf32>
    %431 = vector.broadcast %430 : vector<1x1xf32> to vector<2x1xf32>
    %432 = arith.addf %429, %431 : vector<2x1xf32>
    %c0_119 = arith.constant 0 : index
    %c0_120 = arith.constant 0 : index
    %433 = vector.load %arg12[%c0_119, %c0_120] : memref<2x1xf32, #tpu.memory_space<vmem>>, vector<2x1xf32>
    tpu.vector_store %arg12[%c0_119, %c0_120], %432 {strides = array<i32>} : memref<2x1xf32, #tpu.memory_space<vmem>>, vector<2x1xf32>,
    return
  }
}

</mosaic_0001>

<llo_original>
// kernel: tpu_custom_call.1
$region0: #{tpu_custom_call.1}
  #allocation0 [shape = 'u32[]', space=smem, size = 0x4, offset = 0x4, fixed_abs, tag = 'smem constant byte address 0x4 - core index']
  #allocation1 [shape = 'u32[144,128]{1,0:T(1,128)}', space=vmem, size = 0x12000, scoped, tag = 'internal scratch']
  #allocation2 [shape = 'f32[1,1]{1,0:T(1,128)S(1)}', space=vmem, size = 0x200, scoped, tag = 'scoped memory for tpu_custom_call.1']
  #allocation3 [shape = 'f32[1,1]{1,0:T(1,128)S(1)}', space=vmem, size = 0x200, scoped, tag = 'scoped memory for tpu_custom_call.1']
  %s0 = inlined_call_operand.vmem [shape: f32[16,32], index: 0, kind: input, shape index: {}]
  %s1 = inlined_call_operand.hbm [shape: f32[2,64,128], index: 1, kind: input, shape index: {}]
  %s2 = inlined_call_operand.vmem [shape: f32[2,1,128], index: 2, kind: input, shape index: {}]
  %s3 = inlined_call_operand.vmem [shape: f32[32,32], index: 3, kind: input, shape index: {}]
  %s4 = inlined_call_operand.vmem [shape: f32[32,32], index: 4, kind: input, shape index: {}]
  %s5 = inlined_call_operand.vmem [shape: f32[1,32], index: 5, kind: input, shape index: {}]
  %s6 = inlined_call_operand.vmem [shape: f32[32,1], index: 6, kind: input, shape index: {}]
  %s7 = inlined_call_operand.<no memory space> [shape: f32[1,1], index: 7, kind: input, shape index: {}]
  %s8 = inlined_call_operand.vmem [shape: f32[32,1], index: 8, kind: input, shape index: {}]
  %s9 = inlined_call_operand.vmem [shape: f32[32,1], index: 9, kind: input, shape index: {}]
  %s10 = inlined_call_operand.<no memory space> [shape: f32[1,1], index: 10, kind: input, shape index: {}]
  %s11 = inlined_call_operand.hbm [shape: f32[2,8], index: 11, kind: output, shape index: {0}]
  %s12 = inlined_call_operand.vmem [shape: f32[2,1], index: 12, kind: output, shape index: {1}]
  %13 = xla_tuple %s11, %s12
  %s14 = sld [smem:[#allocation0]]
  $region66: #{tpu_custom_call.1} parent=0
    _
  %s16 = ssub.s32 1, %s14
  %s17 = scalar_select 0, %s16, %s14
  %v18 = vstv %s7
  %19 = vst [vmem:[#allocation2] sm:$0x1] %v18
  %v20 = vstv %s10
  %21 = vst [vmem:[#allocation3] sm:$0x1] %v20
  $region1: #{tpu_custom_call.1} parent=0
    #allocation4 [shape = 'u8[65536]{0}', space=vmem, size = 0x10000, scoped, tag = 'input window, operand 1, single buffered']
    #allocation5 [shape = 's32[1]{0}', space=sflag, size = 0x4, scoped, tag = 'scoped memory for tpu_custom_call.1']
    #allocation6 [shape = 's32[1]{0}', space=sflag, size = 0x4, scoped, tag = 'scoped memory for tpu_custom_call.1']
    #allocation7 [shape = 'u8[1024]{0}', space=vmem, size = 0x400, scoped, tag = 'output window, operand 0, single buffered']
    %22 = vsyncpa [#allocation5], 0
    %23 = vsyncpa [#allocation6], 0
    // Predicated region
    $region2: #{tpu_custom_call.1} parent=1 // pred_check
      _
    $region3: #{tpu_custom_call.1} parent=1 // pred_check_branch
      %25 = sbr.rel (0) target = $region5
    $region4: #{tpu_custom_call.1} parent=1 // pred_region
      _
    $region5: #{tpu_custom_call.1} parent=1 // pred_fallthru
      _
    // Predicated region
    $region6: #{tpu_custom_call.1} parent=1 // pred_check
      _
    $region7: #{tpu_custom_call.1} parent=1 // pred_check_branch
      %27 = sbr.rel (0) target = $region9
    $region8: #{tpu_custom_call.1} parent=1 // pred_region
      %s29 = ssub.s32 2048, 2048
      %30 = vsyncadd [#allocation5], %s29
      %s31 = sshll.u32 [#allocation4], 4
      %s32 = int_to_ptr.vmem [resolvable:$true] %s31
      %37 = dma.hbm_to_vmem [thread:$0]  %s1, 2048, %s32, [#allocation5], 128, 128, 8
    $region9: #{tpu_custom_call.1} parent=1 // pred_fallthru
      _
    // Predicated region
    $region10: #{tpu_custom_call.1} parent=1 // pred_check
      _
    $region11: #{tpu_custom_call.1} parent=1 // pred_check_branch
      %39 = sbr.rel (0) target = $region13
    $region12: #{tpu_custom_call.1} parent=1 // pred_region
      _
    $region13: #{tpu_custom_call.1} parent=1 // pred_fallthru
      _
    // Predicated region
    $region14: #{tpu_custom_call.1} parent=1 // pred_check
      _
    $region15: #{tpu_custom_call.1} parent=1 // pred_check_branch
      %41 = sbr.rel (0) target = $region17
    $region16: #{tpu_custom_call.1} parent=1 // pred_region
      _
    $region17: #{tpu_custom_call.1} parent=1 // pred_fallthru
      _
    // Predicated region
    $region18: #{tpu_custom_call.1} parent=1 // pred_check
      _
    $region19: #{tpu_custom_call.1} parent=1 // pred_check_branch
      %43 = sbr.rel (0) target = $region21
    $region20: #{tpu_custom_call.1} parent=1 // pred_region
      _
    $region21: #{tpu_custom_call.1} parent=1 // pred_fallthru
      _
    // Predicated region
    $region22: #{tpu_custom_call.1} parent=1 // pred_check
      _
    $region23: #{tpu_custom_call.1} parent=1 // pred_check_branch
      %45 = sbr.rel (0) target = $region25
    $region24: #{tpu_custom_call.1} parent=1 // pred_region
      _
    $region25: #{tpu_custom_call.1} parent=1 // pred_fallthru
      _
    // Predicated region
    $region26: #{tpu_custom_call.1} parent=1 // pred_check
      _
    $region27: #{tpu_custom_call.1} parent=1 // pred_check_branch
      %47 = sbr.rel (0) target = $region29
    $region28: #{tpu_custom_call.1} parent=1 // pred_region
      _
    $region29: #{tpu_custom_call.1} parent=1 // pred_fallthru
      _
    // Predicated region
    $region30: #{tpu_custom_call.1} parent=1 // pred_check
      _
    $region31: #{tpu_custom_call.1} parent=1 // pred_check_branch
      %49 = sbr.rel (0) target = $region33
    $region32: #{tpu_custom_call.1} parent=1 // pred_region
      _
    $region33: #{tpu_custom_call.1} parent=1 // pred_fallthru
      _
    // Predicated region
    $region34: #{tpu_custom_call.1} parent=1 // pred_check
      _
    $region35: #{tpu_custom_call.1} parent=1 // pred_check_branch
      %51 = sbr.rel (0) target = $region37
    $region36: #{tpu_custom_call.1} parent=1 // pred_region
      _
    $region37: #{tpu_custom_call.1} parent=1 // pred_fallthru
      _
    // Predicated region
    $region38: #{tpu_custom_call.1} parent=1 // pred_check
      _
    $region39: #{tpu_custom_call.1} parent=1 // pred_check_branch
      %53 = sbr.rel (0) target = $region41
    $region40: #{tpu_custom_call.1} parent=1 // pred_region
      _
    $region41: #{tpu_custom_call.1} parent=1 // pred_fallthru
      _
    // Predicated region
    $region42: #{tpu_custom_call.1} parent=1 // pred_check
      _
    $region43: #{tpu_custom_call.1} parent=1 // pred_check_branch
      %55 = sbr.rel (0) target = $region45
    $region44: #{tpu_custom_call.1} parent=1 // pred_region
      _
    $region45: #{tpu_custom_call.1} parent=1 // pred_fallthru
      _
    // Predicated region
    $region46: #{tpu_custom_call.1} parent=1 // pred_check
      _
    $region47: #{tpu_custom_call.1} parent=1 // pred_check_branch
      %57 = sbr.rel (0) target = $region49
    $region48: #{tpu_custom_call.1} parent=1 // pred_region
      %58 = dma.done [#allocation5], 2048
    $region49: #{tpu_custom_call.1} parent=1 // pred_fallthru
      _
    %v59 = vld [vmem:[#allocation4] sm:$0xff]
    %v60 = vld [vmem:[#allocation4 + $0x8] sm:$0xff]
    %v61 = vld [vmem:[#allocation4 + $0x10] sm:$0xff]
    %v62 = vld [vmem:[#allocation4 + $0x18] sm:$0xff]
    %v63 = vld [vmem:[%s0] sm:$0xff]
    %v64 = vld [vmem:[%s0 + $0x8] sm:$0xff]
    %v65 = vld [vmem:[%s2] sm:$0x1]
    %v67 = vlaneseq
    %v68 = vshrl.u32 %v67, 7
    %v69 = vsub.s32 0, %v68
    %v70 = vrot.slane %v65, %v69
    %vm72 = vcmask 261120
    %v74 = vsel %vm72, %v63, 0
    %v77 = vsel %vm72, %v64, 0
    %79 = vmatprep.subr.mxu0 0.0
    %80 = vmatpush1.msra.mxu0 %v59
    %81 = vmatprep.subr.mxu0 0.0
    %82 = vmatpush1.msra.mxu0 %v60
    %83 = vmatprep.subr.mxu0 0.0
    %84 = vmatpush1.msra.mxu0 %v61
    %85 = vmatprep.subr.mxu0 0.0
    %86 = vmatpush1.msra.mxu0 %v62
    %87 = vmatprep.subr.mxu0 0.0
    %88 = vmatpush1.msra.mxu0 0.0
    %89 = vmatprep.subr.mxu0 0.0
    %90 = vmatpush1.msra.mxu0 0.0
    %91 = vmatprep.subr.mxu0 0.0
    %92 = vmatpush1.msra.mxu0 0.0
    %93 = vmatprep.subr.mxu0 0.0
    %94 = vmatpush1.msra.mxu0 0.0
    %95 = vmatprep.subr.mxu0 0.0
    %96 = vmatpush1.msra.mxu0 0.0
    %97 = vmatprep.subr.mxu0 0.0
    %98 = vmatpush1.msra.mxu0 0.0
    %99 = vmatprep.subr.mxu0 0.0
    %100 = vmatpush1.msra.mxu0 0.0
    %101 = vmatprep.subr.mxu0 0.0
    %102 = vmatpush1.msra.mxu0 0.0
    %103 = vmatprep.subr.mxu0 0.0
    %104 = vmatpush1.msra.mxu0 0.0
    %105 = vmatprep.subr.mxu0 0.0
    %106 = vmatpush1.msra.mxu0 0.0
    %107 = vmatprep.subr.mxu0 0.0
    %108 = vmatpush1.msra.mxu0 0.0
    %109 = vmatprep.subr.mxu0 0.0
    %110 = vmatpush1.msra.mxu0 0.0
    %111 = vmatprep.subr.mxu0 0.0
    %112 = vmatpush1.msra.mxu0 0.0
    %113 = vmatprep.subr.mxu0 0.0
    %114 = vmatpush1.msra.mxu0 0.0
    %115 = vmatprep.subr.mxu0 0.0
    %116 = vmatpush1.msra.mxu0 0.0
    %117 = vmatprep.subr.mxu0 0.0
    %118 = vmatpush1.msra.mxu0 0.0
    %119 = vmatprep.subr.mxu0 0.0
    %120 = vmatpush1.msra.mxu0 0.0
    %121 = vmatprep.subr.mxu0 0.0
    %122 = vmatpush1.msra.mxu0 0.0
    %123 = vmatprep.subr.mxu0 0.0
    %124 = vmatpush1.msra.mxu0 0.0
    %125 = vmatprep.subr.mxu0 0.0
    %126 = vmatpush1.msra.mxu0 0.0
    %127 = vmatprep.subr.mxu0 0.0
    %128 = vmatpush1.msra.mxu0 0.0
    %129 = vmatprep.subr.mxu0 0.0
    %130 = vmatpush1.msra.mxu0 0.0
    %131 = vmatprep.subr.mxu0 0.0
    %132 = vmatpush1.msra.mxu0 0.0
    %133 = vmatprep.subr.mxu0 0.0
    %134 = vmatpush1.msra.mxu0 0.0
    %135 = vmatprep.subr.mxu0 0.0
    %136 = vmatpush1.msra.mxu0 0.0
    %137 = vmatprep.subr.mxu0 0.0
    %138 = vmatpush1.msra.mxu0 0.0
    %139 = vmatprep.subr.mxu0 0.0
    %140 = vmatpush1.msra.mxu0 0.0
    %141 = vmatprep.subr.mxu0 0.0
    %142 = vmatpush1.msra.mxu0 0.0
    %143 = vmatprep.mubr.f32.mxu0 0.0
    %144 = vmatmul.mubr.f32.gmra.mrb[0].mxu0 %v74
    %v145 = vpop.f32.mrb[0].mxu0
    %v146 = vadd.f32 %v70, %v145
    %v147 = vpop.f32.mrb[0].mxu0
    %148 = vmatprep.mubr.f32.mxu0 0.0
    %149 = vmatmul.mubr.f32.gmra.mrb[0].mxu0 %v77
    %v150 = vpop.f32.mrb[0].mxu0
    %v151 = vadd.f32 %v70, %v150
    %v152 = vpop.f32.mrb[0].mxu0
    %153 = vdwg.mxu0
    %v154 = vld [vmem:[#allocation4 + $0x20] sm:$0xff]
    %v155 = vld [vmem:[#allocation4 + $0x28] sm:$0xff]
    %v156 = vld [vmem:[#allocation4 + $0x30] sm:$0xff]
    %v157 = vld [vmem:[#allocation4 + $0x38] sm:$0xff]
    %s158 = scalar_lea.vmem [#allocation4], 64
    %v159 = vld [vmem:[%s158] sm:$0xff]
    %v160 = vld [vmem:[%s158 + $0x8] sm:$0xff]
    %v161 = vld [vmem:[%s158 + $0x10] sm:$0xff]
    %v162 = vld [vmem:[%s158 + $0x18] sm:$0xff]
    %v163 = vld [vmem:[%s158 + $0x20] sm:$0xff]
    %v164 = vld [vmem:[%s158 + $0x28] sm:$0xff]
    %v165 = vld [vmem:[%s158 + $0x30] sm:$0xff]
    %v166 = vld [vmem:[%s158 + $0x38] sm:$0xff]
    %s167 = scalar_lea.vmem %s2, 1
    %v168 = vld [vmem:[%s167] sm:$0x1]
    %v170 = vsel %vm72, 0.0, 0
    %172 = vmatprep.subr.mxu0 0.0
    %173 = vmatpush1.msra.mxu0 %v154
    %174 = vmatprep.subr.mxu0 0.0
    %175 = vmatpush1.msra.mxu0 %v155
    %176 = vmatprep.subr.mxu0 0.0
    %177 = vmatpush1.msra.mxu0 %v156
    %178 = vmatprep.subr.mxu0 0.0
    %179 = vmatpush1.msra.mxu0 %v157
    %180 = vmatprep.subr.mxu0 0.0
    %181 = vmatpush1.msra.mxu0 0.0
    %182 = vmatprep.subr.mxu0 0.0
    %183 = vmatpush1.msra.mxu0 0.0
    %184 = vmatprep.subr.mxu0 0.0
    %185 = vmatpush1.msra.mxu0 0.0
    %186 = vmatprep.subr.mxu0 0.0
    %187 = vmatpush1.msra.mxu0 0.0
    %188 = vmatprep.subr.mxu0 0.0
    %189 = vmatpush1.msra.mxu0 0.0
    %190 = vmatprep.subr.mxu0 0.0
    %191 = vmatpush1.msra.mxu0 0.0
    %192 = vmatprep.subr.mxu0 0.0
    %193 = vmatpush1.msra.mxu0 0.0
    %194 = vmatprep.subr.mxu0 0.0
    %195 = vmatpush1.msra.mxu0 0.0
    %196 = vmatprep.subr.mxu0 0.0
    %197 = vmatpush1.msra.mxu0 0.0
    %198 = vmatprep.subr.mxu0 0.0
    %199 = vmatpush1.msra.mxu0 0.0
    %200 = vmatprep.subr.mxu0 0.0
    %201 = vmatpush1.msra.mxu0 0.0
    %202 = vmatprep.subr.mxu0 0.0
    %203 = vmatpush1.msra.mxu0 0.0
    %204 = vmatprep.subr.mxu0 0.0
    %205 = vmatpush1.msra.mxu0 0.0
    %206 = vmatprep.subr.mxu0 0.0
    %207 = vmatpush1.msra.mxu0 0.0
    %208 = vmatprep.subr.mxu0 0.0
    %209 = vmatpush1.msra.mxu0 0.0
    %210 = vmatprep.subr.mxu0 0.0
    %211 = vmatpush1.msra.mxu0 0.0
    %212 = vmatprep.subr.mxu0 0.0
    %213 = vmatpush1.msra.mxu0 0.0
    %214 = vmatprep.subr.mxu0 0.0
    %215 = vmatpush1.msra.mxu0 0.0
    %216 = vmatprep.subr.mxu0 0.0
    %217 = vmatpush1.msra.mxu0 0.0
    %218 = vmatprep.subr.mxu0 0.0
    %219 = vmatpush1.msra.mxu0 0.0
    %220 = vmatprep.subr.mxu0 0.0
    %221 = vmatpush1.msra.mxu0 0.0
    %222 = vmatprep.subr.mxu0 0.0
    %223 = vmatpush1.msra.mxu0 0.0
    %224 = vmatprep.subr.mxu0 0.0
    %225 = vmatpush1.msra.mxu0 0.0
    %226 = vmatprep.subr.mxu0 0.0
    %227 = vmatpush1.msra.mxu0 0.0
    %228 = vmatprep.subr.mxu0 0.0
    %229 = vmatpush1.msra.mxu0 0.0
    %230 = vmatprep.subr.mxu0 0.0
    %231 = vmatpush1.msra.mxu0 0.0
    %232 = vmatprep.subr.mxu0 0.0
    %233 = vmatpush1.msra.mxu0 0.0
    %234 = vmatprep.subr.mxu0 0.0
    %235 = vmatpush1.msra.mxu0 0.0
    %236 = vmatprep.mubr.f32.mxu0 0.0
    %237 = vmatmul.mubr.f32.gmra.mrb[0].mxu0 %v170
    %v238 = vpop.f32.mrb[0].mxu0
    %v239 = vadd.f32 0.0, %v238
    %v240 = vpop.f32.mrb[0].mxu0
    %241 = vdwg.mxu0
    %v242 = vadd.f32 %v146, %v239
    %v243 = vmul.f32 %v242, 0.5
    %v244 = vtanh.pop %v243
    %v245 = vmul.f32 %v244, 0.5
    %v246 = vadd.f32 %v245, 0.5
    %v247 = vtanh.pop %v242
    %v248 = vmul.f32 %v246, 0.0
    %250 = vrot.lane.b32.xlu0 %v247, 64
    %v251 = vpop.permute.xlu0 %250
    %v253 = vmul.f32 %v246, %v251
    %255 = vrot.lane.b32.xlu0 %v253, 32
    %v256 = vpop.permute.xlu0 %255
    %v258 = vadd.f32 %v248, %v256
    %v259 = vtanh.pop %v258
    %261 = vrot.lane.b32.xlu0 %v259, 64
    %v262 = vpop.permute.xlu0 %261
    %v264 = vmul.f32 %v246, %v262
    %265 = vmatprep.subr.mxu0 0.0
    %266 = vmatpush1.msra.mxu0 %v163
    %267 = vmatprep.subr.mxu0 0.0
    %268 = vmatpush1.msra.mxu0 %v164
    %269 = vmatprep.subr.mxu0 0.0
    %270 = vmatpush1.msra.mxu0 %v165
    %271 = vmatprep.subr.mxu0 0.0
    %272 = vmatpush1.msra.mxu0 %v166
    %273 = vmatprep.subr.mxu0 0.0
    %274 = vmatpush1.msra.mxu0 0.0
    %275 = vmatprep.subr.mxu0 0.0
    %276 = vmatpush1.msra.mxu0 0.0
    %277 = vmatprep.subr.mxu0 0.0
    %278 = vmatpush1.msra.mxu0 0.0
    %279 = vmatprep.subr.mxu0 0.0
    %280 = vmatpush1.msra.mxu0 0.0
    %281 = vmatprep.subr.mxu0 0.0
    %282 = vmatpush1.msra.mxu0 0.0
    %283 = vmatprep.subr.mxu0 0.0
    %284 = vmatpush1.msra.mxu0 0.0
    %285 = vmatprep.subr.mxu0 0.0
    %286 = vmatpush1.msra.mxu0 0.0
    %287 = vmatprep.subr.mxu0 0.0
    %288 = vmatpush1.msra.mxu0 0.0
    %289 = vmatprep.subr.mxu0 0.0
    %290 = vmatpush1.msra.mxu0 0.0
    %291 = vmatprep.subr.mxu0 0.0
    %292 = vmatpush1.msra.mxu0 0.0
    %293 = vmatprep.subr.mxu0 0.0
    %294 = vmatpush1.msra.mxu0 0.0
    %295 = vmatprep.subr.mxu0 0.0
    %296 = vmatpush1.msra.mxu0 0.0
    %297 = vmatprep.subr.mxu0 0.0
    %298 = vmatpush1.msra.mxu0 0.0
    %299 = vmatprep.subr.mxu0 0.0
    %300 = vmatpush1.msra.mxu0 0.0
    %301 = vmatprep.subr.mxu0 0.0
    %302 = vmatpush1.msra.mxu0 0.0
    %303 = vmatprep.subr.mxu0 0.0
    %304 = vmatpush1.msra.mxu0 0.0
    %305 = vmatprep.subr.mxu0 0.0
    %306 = vmatpush1.msra.mxu0 0.0
    %307 = vmatprep.subr.mxu0 0.0
    %308 = vmatpush1.msra.mxu0 0.0
    %309 = vmatprep.subr.mxu0 0.0
    %310 = vmatpush1.msra.mxu0 0.0
    %311 = vmatprep.subr.mxu0 0.0
    %312 = vmatpush1.msra.mxu0 0.0
    %313 = vmatprep.subr.mxu0 0.0
    %314 = vmatpush1.msra.mxu0 0.0
    %315 = vmatprep.subr.mxu0 0.0
    %316 = vmatpush1.msra.mxu0 0.0
    %317 = vmatprep.subr.mxu0 0.0
    %318 = vmatpush1.msra.mxu0 0.0
    %319 = vmatprep.subr.mxu0 0.0
    %320 = vmatpush1.msra.mxu0 0.0
    %321 = vmatprep.subr.mxu0 0.0
    %322 = vmatpush1.msra.mxu0 0.0
    %323 = vmatprep.subr.mxu0 0.0
    %324 = vmatpush1.msra.mxu0 0.0
    %325 = vmatprep.subr.mxu0 0.0
    %326 = vmatpush1.msra.mxu0 0.0
    %327 = vmatprep.subr.mxu0 0.0
    %328 = vmatpush1.msra.mxu0 0.0
    %329 = vmatprep.mubr.f32.mxu0 0.0
    %330 = vmatmul.mubr.f32.gmra.mrb[0].mxu0 %v170
    %v331 = vpop.f32.mrb[0].mxu0
    %v332 = vadd.f32 0.0, %v331
    %v333 = vpop.f32.mrb[0].mxu0
    %334 = vdwg.mxu0
    %336 = vrot.lane.b32.xlu0 %v264, 32
    %v337 = vpop.permute.xlu0 %336
    %v338 = vsel %vm72, %v337, 0
    %340 = vmatprep.subr.mxu0 0.0
    %341 = vmatpush1.msra.mxu0 %v159
    %342 = vmatprep.subr.mxu0 0.0
    %343 = vmatpush1.msra.mxu0 %v160
    %344 = vmatprep.subr.mxu0 0.0
    %345 = vmatpush1.msra.mxu0 %v161
    %346 = vmatprep.subr.mxu0 0.0
    %347 = vmatpush1.msra.mxu0 %v162
    %348 = vmatprep.subr.mxu0 0.0
    %349 = vmatpush1.msra.mxu0 0.0
    %350 = vmatprep.subr.mxu0 0.0
    %351 = vmatpush1.msra.mxu0 0.0
    %352 = vmatprep.subr.mxu0 0.0
    %353 = vmatpush1.msra.mxu0 0.0
    %354 = vmatprep.subr.mxu0 0.0
    %355 = vmatpush1.msra.mxu0 0.0
    %356 = vmatprep.subr.mxu0 0.0
    %357 = vmatpush1.msra.mxu0 0.0
    %358 = vmatprep.subr.mxu0 0.0
    %359 = vmatpush1.msra.mxu0 0.0
    %360 = vmatprep.subr.mxu0 0.0
    %361 = vmatpush1.msra.mxu0 0.0
    %362 = vmatprep.subr.mxu0 0.0
    %363 = vmatpush1.msra.mxu0 0.0
    %364 = vmatprep.subr.mxu0 0.0
    %365 = vmatpush1.msra.mxu0 0.0
    %366 = vmatprep.subr.mxu0 0.0
    %367 = vmatpush1.msra.mxu0 0.0
    %368 = vmatprep.subr.mxu0 0.0
    %369 = vmatpush1.msra.mxu0 0.0
    %370 = vmatprep.subr.mxu0 0.0
    %371 = vmatpush1.msra.mxu0 0.0
    %372 = vmatprep.subr.mxu0 0.0
    %373 = vmatpush1.msra.mxu0 0.0
    %374 = vmatprep.subr.mxu0 0.0
    %375 = vmatpush1.msra.mxu0 0.0
    %376 = vmatprep.subr.mxu0 0.0
    %377 = vmatpush1.msra.mxu0 0.0
    %378 = vmatprep.subr.mxu0 0.0
    %379 = vmatpush1.msra.mxu0 0.0
    %380 = vmatprep.subr.mxu0 0.0
    %381 = vmatpush1.msra.mxu0 0.0
    %382 = vmatprep.subr.mxu0 0.0
    %383 = vmatpush1.msra.mxu0 0.0
    %384 = vmatprep.subr.mxu0 0.0
    %385 = vmatpush1.msra.mxu0 0.0
    %386 = vmatprep.subr.mxu0 0.0
    %387 = vmatpush1.msra.mxu0 0.0
    %388 = vmatprep.subr.mxu0 0.0
    %389 = vmatpush1.msra.mxu0 0.0
    %390 = vmatprep.subr.mxu0 0.0
    %391 = vmatpush1.msra.mxu0 0.0
    %392 = vmatprep.subr.mxu0 0.0
    %393 = vmatpush1.msra.mxu0 0.0
    %394 = vmatprep.subr.mxu0 0.0
    %395 = vmatpush1.msra.mxu0 0.0
    %396 = vmatprep.subr.mxu0 0.0
    %397 = vmatpush1.msra.mxu0 0.0
    %398 = vmatprep.subr.mxu0 0.0
    %399 = vmatpush1.msra.mxu0 0.0
    %400 = vmatprep.subr.mxu0 0.0
    %401 = vmatpush1.msra.mxu0 0.0
    %402 = vmatprep.subr.mxu0 0.0
    %403 = vmatpush1.msra.mxu0 0.0
    %404 = vmatprep.mubr.f32.mxu0 0.0
    %405 = vmatmul.mubr.f32.gmra.mrb[0].mxu0 %v338
    %v406 = vpop.f32.mrb[0].mxu0
    %v407 = vadd.f32 %v332, %v406
    %v408 = vpop.f32.mrb[0].mxu0
    %409 = vdwg.mxu0
    %v411 = vlaneseq
    %v412 = vshrl.u32 %v411, 7
    %v413 = vsub.s32 0, %v412
    %v414 = vrot.slane %v168, %v413
    %v416 = vadd.f32 %v407, %v414
    %v417 = vmul.f32 %v416, 0.5
    %v418 = vtanh.pop %v417
    %v419 = vmul.f32 %v418, 0.5
    %v420 = vadd.f32 %v419, 0.5
    %v421 = vtanh.pop %v416
    %v422 = vmul.f32 %v420, 0.0
    %424 = vrot.lane.b32.xlu0 %v421, 64
    %v425 = vpop.permute.xlu0 %424
    %v427 = vmul.f32 %v420, %v425
    %429 = vrot.lane.b32.xlu0 %v427, 32
    %v430 = vpop.permute.xlu0 %429
    %v432 = vadd.f32 %v422, %v430
    %v433 = vtanh.pop %v432
    %435 = vrot.lane.b32.xlu0 %v433, 64
    %v436 = vpop.permute.xlu0 %435
    %v438 = vmul.f32 %v420, %v436
    %439 = vmatprep.subr.mxu0 0.0
    %440 = vmatpush1.msra.mxu0 %v154
    %441 = vmatprep.subr.mxu0 0.0
    %442 = vmatpush1.msra.mxu0 %v155
    %443 = vmatprep.subr.mxu0 0.0
    %444 = vmatpush1.msra.mxu0 %v156
    %445 = vmatprep.subr.mxu0 0.0
    %446 = vmatpush1.msra.mxu0 %v157
    %447 = vmatprep.subr.mxu0 0.0
    %448 = vmatpush1.msra.mxu0 0.0
    %449 = vmatprep.subr.mxu0 0.0
    %450 = vmatpush1.msra.mxu0 0.0
    %451 = vmatprep.subr.mxu0 0.0
    %452 = vmatpush1.msra.mxu0 0.0
    %453 = vmatprep.subr.mxu0 0.0
    %454 = vmatpush1.msra.mxu0 0.0
    %455 = vmatprep.subr.mxu0 0.0
    %456 = vmatpush1.msra.mxu0 0.0
    %457 = vmatprep.subr.mxu0 0.0
    %458 = vmatpush1.msra.mxu0 0.0
    %459 = vmatprep.subr.mxu0 0.0
    %460 = vmatpush1.msra.mxu0 0.0
    %461 = vmatprep.subr.mxu0 0.0
    %462 = vmatpush1.msra.mxu0 0.0
    %463 = vmatprep.subr.mxu0 0.0
    %464 = vmatpush1.msra.mxu0 0.0
    %465 = vmatprep.subr.mxu0 0.0
    %466 = vmatpush1.msra.mxu0 0.0
    %467 = vmatprep.subr.mxu0 0.0
    %468 = vmatpush1.msra.mxu0 0.0
    %469 = vmatprep.subr.mxu0 0.0
    %470 = vmatpush1.msra.mxu0 0.0
    %471 = vmatprep.subr.mxu0 0.0
    %472 = vmatpush1.msra.mxu0 0.0
    %473 = vmatprep.subr.mxu0 0.0
    %474 = vmatpush1.msra.mxu0 0.0
    %475 = vmatprep.subr.mxu0 0.0
    %476 = vmatpush1.msra.mxu0 0.0
    %477 = vmatprep.subr.mxu0 0.0
    %478 = vmatpush1.msra.mxu0 0.0
    %479 = vmatprep.subr.mxu0 0.0
    %480 = vmatpush1.msra.mxu0 0.0
    %481 = vmatprep.subr.mxu0 0.0
    %482 = vmatpush1.msra.mxu0 0.0
    %483 = vmatprep.subr.mxu0 0.0
    %484 = vmatpush1.msra.mxu0 0.0
    %485 = vmatprep.subr.mxu0 0.0
    %486 = vmatpush1.msra.mxu0 0.0
    %487 = vmatprep.subr.mxu0 0.0
    %488 = vmatpush1.msra.mxu0 0.0
    %489 = vmatprep.subr.mxu0 0.0
    %490 = vmatpush1.msra.mxu0 0.0
    %491 = vmatprep.subr.mxu0 0.0
    %492 = vmatpush1.msra.mxu0 0.0
    %493 = vmatprep.subr.mxu0 0.0
    %494 = vmatpush1.msra.mxu0 0.0
    %495 = vmatprep.subr.mxu0 0.0
    %496 = vmatpush1.msra.mxu0 0.0
    %497 = vmatprep.subr.mxu0 0.0
    %498 = vmatpush1.msra.mxu0 0.0
    %499 = vmatprep.subr.mxu0 0.0
    %500 = vmatpush1.msra.mxu0 0.0
    %501 = vmatprep.subr.mxu0 0.0
    %502 = vmatpush1.msra.mxu0 0.0
    %503 = vmatprep.mubr.f32.mxu0 0.0
    %504 = vmatmul.mubr.f32.gmra.mrb[0].mxu0 %v338
    %v505 = vpop.f32.mrb[0].mxu0
    %v506 = vadd.f32 0.0, %v505
    %v507 = vpop.f32.mrb[0].mxu0
    %508 = vdwg.mxu0
    %v510 = vrot.slane %v506, 6
    %v512 = vadd.f32 %v146, %v510
    %v513 = vmul.f32 %v512, 0.5
    %v514 = vtanh.pop %v513
    %v515 = vmul.f32 %v514, 0.5
    %v516 = vadd.f32 %v515, 0.5
    %v517 = vtanh.pop %v512
    %v519 = vrot.slane %v258, 6
    %v521 = vmul.f32 %v516, %v519
    %523 = vrot.lane.b32.xlu0 %v517, 64
    %v524 = vpop.permute.xlu0 %523
    %v526 = vmul.f32 %v516, %v524
    %528 = vrot.lane.b32.xlu0 %v526, 32
    %v529 = vpop.permute.xlu0 %528
    %v531 = vadd.f32 %v521, %v529
    %v532 = vtanh.pop %v531
    %534 = vrot.lane.b32.xlu0 %v532, 64
    %v535 = vpop.permute.xlu0 %534
    %v537 = vmul.f32 %v516, %v535
    %539 = vrot.lane.b32.xlu0 %v438, 32
    %v540 = vpop.permute.xlu0 %539
    %v541 = vsel %vm72, %v540, 0
    %543 = vmatprep.subr.mxu0 0.0
    %544 = vmatpush1.msra.mxu0 %v163
    %545 = vmatprep.subr.mxu0 0.0
    %546 = vmatpush1.msra.mxu0 %v164
    %547 = vmatprep.subr.mxu0 0.0
    %548 = vmatpush1.msra.mxu0 %v165
    %549 = vmatprep.subr.mxu0 0.0
    %550 = vmatpush1.msra.mxu0 %v166
    %551 = vmatprep.subr.mxu0 0.0
    %552 = vmatpush1.msra.mxu0 0.0
    %553 = vmatprep.subr.mxu0 0.0
    %554 = vmatpush1.msra.mxu0 0.0
    %555 = vmatprep.subr.mxu0 0.0
    %556 = vmatpush1.msra.mxu0 0.0
    %557 = vmatprep.subr.mxu0 0.0
    %558 = vmatpush1.msra.mxu0 0.0
    %559 = vmatprep.subr.mxu0 0.0
    %560 = vmatpush1.msra.mxu0 0.0
    %561 = vmatprep.subr.mxu0 0.0
    %562 = vmatpush1.msra.mxu0 0.0
    %563 = vmatprep.subr.mxu0 0.0
    %564 = vmatpush1.msra.mxu0 0.0
    %565 = vmatprep.subr.mxu0 0.0
    %566 = vmatpush1.msra.mxu0 0.0
    %567 = vmatprep.subr.mxu0 0.0
    %568 = vmatpush1.msra.mxu0 0.0
    %569 = vmatprep.subr.mxu0 0.0
    %570 = vmatpush1.msra.mxu0 0.0
    %571 = vmatprep.subr.mxu0 0.0
    %572 = vmatpush1.msra.mxu0 0.0
    %573 = vmatprep.subr.mxu0 0.0
    %574 = vmatpush1.msra.mxu0 0.0
    %575 = vmatprep.subr.mxu0 0.0
    %576 = vmatpush1.msra.mxu0 0.0
    %577 = vmatprep.subr.mxu0 0.0
    %578 = vmatpush1.msra.mxu0 0.0
    %579 = vmatprep.subr.mxu0 0.0
    %580 = vmatpush1.msra.mxu0 0.0
    %581 = vmatprep.subr.mxu0 0.0
    %582 = vmatpush1.msra.mxu0 0.0
    %583 = vmatprep.subr.mxu0 0.0
    %584 = vmatpush1.msra.mxu0 0.0
    %585 = vmatprep.subr.mxu0 0.0
    %586 = vmatpush1.msra.mxu0 0.0
    %587 = vmatprep.subr.mxu0 0.0
    %588 = vmatpush1.msra.mxu0 0.0
    %589 = vmatprep.subr.mxu0 0.0
    %590 = vmatpush1.msra.mxu0 0.0
    %591 = vmatprep.subr.mxu0 0.0
    %592 = vmatpush1.msra.mxu0 0.0
    %593 = vmatprep.subr.mxu0 0.0
    %594 = vmatpush1.msra.mxu0 0.0
    %595 = vmatprep.subr.mxu0 0.0
    %596 = vmatpush1.msra.mxu0 0.0
    %597 = vmatprep.subr.mxu0 0.0
    %598 = vmatpush1.msra.mxu0 0.0
    %599 = vmatprep.subr.mxu0 0.0
    %600 = vmatpush1.msra.mxu0 0.0
    %601 = vmatprep.subr.mxu0 0.0
    %602 = vmatpush1.msra.mxu0 0.0
    %603 = vmatprep.subr.mxu0 0.0
    %604 = vmatpush1.msra.mxu0 0.0
    %605 = vmatprep.subr.mxu0 0.0
    %606 = vmatpush1.msra.mxu0 0.0
    %607 = vmatprep.mubr.f32.mxu0 0.0
    %608 = vmatmul.mubr.f32.gmra.mrb[0].mxu0 %v541
    %v609 = vpop.f32.mrb[0].mxu0
    %v610 = vadd.f32 0.0, %v609
    %v611 = vpop.f32.mrb[0].mxu0
    %612 = vdwg.mxu0
    %v614 = vrot.slane %v537, 2
    %615 = vrot.lane.b32.xlu0 %v614, 32
    %v616 = vpop.permute.xlu0 %615
    %v617 = vsel %vm72, %v616, 0
    %619 = vmatprep.subr.mxu0 0.0
    %620 = vmatpush1.msra.mxu0 %v159
    %621 = vmatprep.subr.mxu0 0.0
    %622 = vmatpush1.msra.mxu0 %v160
    %623 = vmatprep.subr.mxu0 0.0
    %624 = vmatpush1.msra.mxu0 %v161
    %625 = vmatprep.subr.mxu0 0.0
    %626 = vmatpush1.msra.mxu0 %v162
    %627 = vmatprep.subr.mxu0 0.0
    %628 = vmatpush1.msra.mxu0 0.0
    %629 = vmatprep.subr.mxu0 0.0
    %630 = vmatpush1.msra.mxu0 0.0
    %631 = vmatprep.subr.mxu0 0.0
    %632 = vmatpush1.msra.mxu0 0.0
    %633 = vmatprep.subr.mxu0 0.0
    %634 = vmatpush1.msra.mxu0 0.0
    %635 = vmatprep.subr.mxu0 0.0
    %636 = vmatpush1.msra.mxu0 0.0
    %637 = vmatprep.subr.mxu0 0.0
    %638 = vmatpush1.msra.mxu0 0.0
    %639 = vmatprep.subr.mxu0 0.0
    %640 = vmatpush1.msra.mxu0 0.0
    %641 = vmatprep.subr.mxu0 0.0
    %642 = vmatpush1.msra.mxu0 0.0
    %643 = vmatprep.subr.mxu0 0.0
    %644 = vmatpush1.msra.mxu0 0.0
    %645 = vmatprep.subr.mxu0 0.0
    %646 = vmatpush1.msra.mxu0 0.0
    %647 = vmatprep.subr.mxu0 0.0
    %648 = vmatpush1.msra.mxu0 0.0
    %649 = vmatprep.subr.mxu0 0.0
    %650 = vmatpush1.msra.mxu0 0.0
    %651 = vmatprep.subr.mxu0 0.0
    %652 = vmatpush1.msra.mxu0 0.0
    %653 = vmatprep.subr.mxu0 0.0
    %654 = vmatpush1.msra.mxu0 0.0
    %655 = vmatprep.subr.mxu0 0.0
    %656 = vmatpush1.msra.mxu0 0.0
    %657 = vmatprep.subr.mxu0 0.0
    %658 = vmatpush1.msra.mxu0 0.0
    %659 = vmatprep.subr.mxu0 0.0
    %660 = vmatpush1.msra.mxu0 0.0
    %661 = vmatprep.subr.mxu0 0.0
    %662 = vmatpush1.msra.mxu0 0.0
    %663 = vmatprep.subr.mxu0 0.0
    %664 = vmatpush1.msra.mxu0 0.0
    %665 = vmatprep.subr.mxu0 0.0
    %666 = vmatpush1.msra.mxu0 0.0
    %667 = vmatprep.subr.mxu0 0.0
    %668 = vmatpush1.msra.mxu0 0.0
    %669 = vmatprep.subr.mxu0 0.0
    %670 = vmatpush1.msra.mxu0 0.0
    %671 = vmatprep.subr.mxu0 0.0
    %672 = vmatpush1.msra.mxu0 0.0
    %673 = vmatprep.subr.mxu0 0.0
    %674 = vmatpush1.msra.mxu0 0.0
    %675 = vmatprep.subr.mxu0 0.0
    %676 = vmatpush1.msra.mxu0 0.0
    %677 = vmatprep.subr.mxu0 0.0
    %678 = vmatpush1.msra.mxu0 0.0
    %679 = vmatprep.subr.mxu0 0.0
    %680 = vmatpush1.msra.mxu0 0.0
    %681 = vmatprep.subr.mxu0 0.0
    %682 = vmatpush1.msra.mxu0 0.0
    %683 = vmatprep.mubr.f32.mxu0 0.0
    %684 = vmatmul.mubr.f32.gmra.mrb[0].mxu0 %v617
    %v685 = vpop.f32.mrb[0].mxu0
    %v686 = vadd.f32 %v610, %v685
    %v687 = vpop.f32.mrb[0].mxu0
    %688 = vdwg.mxu0
    %v689 = vadd.f32 %v686, %v414
    %v690 = vmul.f32 %v689, 0.5
    %v691 = vtanh.pop %v690
    %v692 = vmul.f32 %v691, 0.5
    %v693 = vadd.f32 %v692, 0.5
    %v694 = vtanh.pop %v689
    %v695 = vmul.f32 %v693, %v432
    %697 = vrot.lane.b32.xlu0 %v694, 64
    %v698 = vpop.permute.xlu0 %697
    %v700 = vmul.f32 %v693, %v698
    %702 = vrot.lane.b32.xlu0 %v700, 32
    %v703 = vpop.permute.xlu0 %702
    %v705 = vadd.f32 %v695, %v703
    %v706 = vtanh.pop %v705
    %708 = vrot.lane.b32.xlu0 %v706, 64
    %v709 = vpop.permute.xlu0 %708
    %v711 = vmul.f32 %v693, %v709
    %712 = vmatprep.subr.mxu0 0.0
    %713 = vmatpush1.msra.mxu0 %v154
    %714 = vmatprep.subr.mxu0 0.0
    %715 = vmatpush1.msra.mxu0 %v155
    %716 = vmatprep.subr.mxu0 0.0
    %717 = vmatpush1.msra.mxu0 %v156
    %718 = vmatprep.subr.mxu0 0.0
    %719 = vmatpush1.msra.mxu0 %v157
    %720 = vmatprep.subr.mxu0 0.0
    %721 = vmatpush1.msra.mxu0 0.0
    %722 = vmatprep.subr.mxu0 0.0
    %723 = vmatpush1.msra.mxu0 0.0
    %724 = vmatprep.subr.mxu0 0.0
    %725 = vmatpush1.msra.mxu0 0.0
    %726 = vmatprep.subr.mxu0 0.0
    %727 = vmatpush1.msra.mxu0 0.0
    %728 = vmatprep.subr.mxu0 0.0
    %729 = vmatpush1.msra.mxu0 0.0
    %730 = vmatprep.subr.mxu0 0.0
    %731 = vmatpush1.msra.mxu0 0.0
    %732 = vmatprep.subr.mxu0 0.0
    %733 = vmatpush1.msra.mxu0 0.0
    %734 = vmatprep.subr.mxu0 0.0
    %735 = vmatpush1.msra.mxu0 0.0
    %736 = vmatprep.subr.mxu0 0.0
    %737 = vmatpush1.msra.mxu0 0.0
    %738 = vmatprep.subr.mxu0 0.0
    %739 = vmatpush1.msra.mxu0 0.0
    %740 = vmatprep.subr.mxu0 0.0
    %741 = vmatpush1.msra.mxu0 0.0
    %742 = vmatprep.subr.mxu0 0.0
    %743 = vmatpush1.msra.mxu0 0.0
    %744 = vmatprep.subr.mxu0 0.0
    %745 = vmatpush1.msra.mxu0 0.0
    %746 = vmatprep.subr.mxu0 0.0
    %747 = vmatpush1.msra.mxu0 0.0
    %748 = vmatprep.subr.mxu0 0.0
    %749 = vmatpush1.msra.mxu0 0.0
    %750 = vmatprep.subr.mxu0 0.0
    %751 = vmatpush1.msra.mxu0 0.0
    %752 = vmatprep.subr.mxu0 0.0
    %753 = vmatpush1.msra.mxu0 0.0
    %754 = vmatprep.subr.mxu0 0.0
    %755 = vmatpush1.msra.mxu0 0.0
    %756 = vmatprep.subr.mxu0 0.0
    %757 = vmatpush1.msra.mxu0 0.0
    %758 = vmatprep.subr.mxu0 0.0
    %759 = vmatpush1.msra.mxu0 0.0
    %760 = vmatprep.subr.mxu0 0.0
    %761 = vmatpush1.msra.mxu0 0.0
    %762 = vmatprep.subr.mxu0 0.0
    %763 = vmatpush1.msra.mxu0 0.0
    %764 = vmatprep.subr.mxu0 0.0
    %765 = vmatpush1.msra.mxu0 0.0
    %766 = vmatprep.subr.mxu0 0.0
    %767 = vmatpush1.msra.mxu0 0.0
    %768 = vmatprep.subr.mxu0 0.0
    %769 = vmatpush1.msra.mxu0 0.0
    %770 = vmatprep.subr.mxu0 0.0
    %771 = vmatpush1.msra.mxu0 0.0
    %772 = vmatprep.subr.mxu0 0.0
    %773 = vmatpush1.msra.mxu0 0.0
    %774 = vmatprep.subr.mxu0 0.0
    %775 = vmatpush1.msra.mxu0 0.0
    %776 = vmatprep.mubr.f32.mxu0 0.0
    %777 = vmatmul.mubr.f32.gmra.mrb[0].mxu0 %v617
    %v778 = vpop.f32.mrb[0].mxu0
    %v779 = vadd.f32 0.0, %v778
    %v780 = vpop.f32.mrb[0].mxu0
    %781 = vdwg.mxu0
    %v783 = vrot.slane %v779, 4
    %v785 = vadd.f32 %v146, %v783
    %v786 = vmul.f32 %v785, 0.5
    %v787 = vtanh.pop %v786
    %v788 = vmul.f32 %v787, 0.5
    %v789 = vadd.f32 %v788, 0.5
    %v790 = vtanh.pop %v785
    %v792 = vrot.slane %v531, 6
    %v794 = vmul.f32 %v789, %v792
    %796 = vrot.lane.b32.xlu0 %v790, 64
    %v797 = vpop.permute.xlu0 %796
    %v799 = vmul.f32 %v789, %v797
    %801 = vrot.lane.b32.xlu0 %v799, 32
    %v802 = vpop.permute.xlu0 %801
    %v804 = vadd.f32 %v794, %v802
    %v805 = vtanh.pop %v804
    %807 = vrot.lane.b32.xlu0 %v805, 64
    %v808 = vpop.permute.xlu0 %807
    %v810 = vmul.f32 %v789, %v808
    %812 = vrot.lane.b32.xlu0 %v711, 32
    %v813 = vpop.permute.xlu0 %812
    %v814 = vsel %vm72, %v813, 0
    %816 = vmatprep.subr.mxu0 0.0
    %817 = vmatpush1.msra.mxu0 %v163
    %818 = vmatprep.subr.mxu0 0.0
    %819 = vmatpush1.msra.mxu0 %v164
    %820 = vmatprep.subr.mxu0 0.0
    %821 = vmatpush1.msra.mxu0 %v165
    %822 = vmatprep.subr.mxu0 0.0
    %823 = vmatpush1.msra.mxu0 %v166
    %824 = vmatprep.subr.mxu0 0.0
    %825 = vmatpush1.msra.mxu0 0.0
    %826 = vmatprep.subr.mxu0 0.0
    %827 = vmatpush1.msra.mxu0 0.0
    %828 = vmatprep.subr.mxu0 0.0
    %829 = vmatpush1.msra.mxu0 0.0
    %830 = vmatprep.subr.mxu0 0.0
    %831 = vmatpush1.msra.mxu0 0.0
    %832 = vmatprep.subr.mxu0 0.0
    %833 = vmatpush1.msra.mxu0 0.0
    %834 = vmatprep.subr.mxu0 0.0
    %835 = vmatpush1.msra.mxu0 0.0
    %836 = vmatprep.subr.mxu0 0.0
    %837 = vmatpush1.msra.mxu0 0.0
    %838 = vmatprep.subr.mxu0 0.0
    %839 = vmatpush1.msra.mxu0 0.0
    %840 = vmatprep.subr.mxu0 0.0
    %841 = vmatpush1.msra.mxu0 0.0
    %842 = vmatprep.subr.mxu0 0.0
    %843 = vmatpush1.msra.mxu0 0.0
    %844 = vmatprep.subr.mxu0 0.0
    %845 = vmatpush1.msra.mxu0 0.0
    %846 = vmatprep.subr.mxu0 0.0
    %847 = vmatpush1.msra.mxu0 0.0
    %848 = vmatprep.subr.mxu0 0.0
    %849 = vmatpush1.msra.mxu0 0.0
    %850 = vmatprep.subr.mxu0 0.0
    %851 = vmatpush1.msra.mxu0 0.0
    %852 = vmatprep.subr.mxu0 0.0
    %853 = vmatpush1.msra.mxu0 0.0
    %854 = vmatprep.subr.mxu0 0.0
    %855 = vmatpush1.msra.mxu0 0.0
    %856 = vmatprep.subr.mxu0 0.0
    %857 = vmatpush1.msra.mxu0 0.0
    %858 = vmatprep.subr.mxu0 0.0
    %859 = vmatpush1.msra.mxu0 0.0
    %860 = vmatprep.subr.mxu0 0.0
    %861 = vmatpush1.msra.mxu0 0.0
    %862 = vmatprep.subr.mxu0 0.0
    %863 = vmatpush1.msra.mxu0 0.0
    %864 = vmatprep.subr.mxu0 0.0
    %865 = vmatpush1.msra.mxu0 0.0
    %866 = vmatprep.subr.mxu0 0.0
    %867 = vmatpush1.msra.mxu0 0.0
    %868 = vmatprep.subr.mxu0 0.0
    %869 = vmatpush1.msra.mxu0 0.0
    %870 = vmatprep.subr.mxu0 0.0
    %871 = vmatpush1.msra.mxu0 0.0
    %872 = vmatprep.subr.mxu0 0.0
    %873 = vmatpush1.msra.mxu0 0.0
    %874 = vmatprep.subr.mxu0 0.0
    %875 = vmatpush1.msra.mxu0 0.0
    %876 = vmatprep.subr.mxu0 0.0
    %877 = vmatpush1.msra.mxu0 0.0
    %878 = vmatprep.subr.mxu0 0.0
    %879 = vmatpush1.msra.mxu0 0.0
    %880 = vmatprep.mubr.f32.mxu0 0.0
    %881 = vmatmul.mubr.f32.gmra.mrb[0].mxu0 %v814
    %v882 = vpop.f32.mrb[0].mxu0
    %v883 = vadd.f32 0.0, %v882
    %v884 = vpop.f32.mrb[0].mxu0
    %885 = vdwg.mxu0
    %v887 = vrot.slane %v810, 4
    %888 = vrot.lane.b32.xlu0 %v887, 32
    %v889 = vpop.permute.xlu0 %888
    %v890 = vsel %vm72, %v889, 0
    %892 = vmatprep.subr.mxu0 0.0
    %893 = vmatpush1.msra.mxu0 %v159
    %894 = vmatprep.subr.mxu0 0.0
    %895 = vmatpush1.msra.mxu0 %v160
    %896 = vmatprep.subr.mxu0 0.0
    %897 = vmatpush1.msra.mxu0 %v161
    %898 = vmatprep.subr.mxu0 0.0
    %899 = vmatpush1.msra.mxu0 %v162
    %900 = vmatprep.subr.mxu0 0.0
    %901 = vmatpush1.msra.mxu0 0.0
    %902 = vmatprep.subr.mxu0 0.0
    %903 = vmatpush1.msra.mxu0 0.0
    %904 = vmatprep.subr.mxu0 0.0
    %905 = vmatpush1.msra.mxu0 0.0
    %906 = vmatprep.subr.mxu0 0.0
    %907 = vmatpush1.msra.mxu0 0.0
    %908 = vmatprep.subr.mxu0 0.0
    %909 = vmatpush1.msra.mxu0 0.0
    %910 = vmatprep.subr.mxu0 0.0
    %911 = vmatpush1.msra.mxu0 0.0
    %912 = vmatprep.subr.mxu0 0.0
    %913 = vmatpush1.msra.mxu0 0.0
    %914 = vmatprep.subr.mxu0 0.0
    %915 = vmatpush1.msra.mxu0 0.0
    %916 = vmatprep.subr.mxu0 0.0
    %917 = vmatpush1.msra.mxu0 0.0
    %918 = vmatprep.subr.mxu0 0.0
    %919 = vmatpush1.msra.mxu0 0.0
    %920 = vmatprep.subr.mxu0 0.0
    %921 = vmatpush1.msra.mxu0 0.0
    %922 = vmatprep.subr.mxu0 0.0
    %923 = vmatpush1.msra.mxu0 0.0
    %924 = vmatprep.subr.mxu0 0.0
    %925 = vmatpush1.msra.mxu0 0.0
    %926 = vmatprep.subr.mxu0 0.0
    %927 = vmatpush1.msra.mxu0 0.0
    %928 = vmatprep.subr.mxu0 0.0
    %929 = vmatpush1.msra.mxu0 0.0
    %930 = vmatprep.subr.mxu0 0.0
    %931 = vmatpush1.msra.mxu0 0.0
    %932 = vmatprep.subr.mxu0 0.0
    %933 = vmatpush1.msra.mxu0 0.0
    %934 = vmatprep.subr.mxu0 0.0
    %935 = vmatpush1.msra.mxu0 0.0
    %936 = vmatprep.subr.mxu0 0.0
    %937 = vmatpush1.msra.mxu0 0.0
    %938 = vmatprep.subr.mxu0 0.0
    %939 = vmatpush1.msra.mxu0 0.0
    %940 = vmatprep.subr.mxu0 0.0
    %941 = vmatpush1.msra.mxu0 0.0
    %942 = vmatprep.subr.mxu0 0.0
    %943 = vmatpush1.msra.mxu0 0.0
    %944 = vmatprep.subr.mxu0 0.0
    %945 = vmatpush1.msra.mxu0 0.0
    %946 = vmatprep.subr.mxu0 0.0
    %947 = vmatpush1.msra.mxu0 0.0
    %948 = vmatprep.subr.mxu0 0.0
    %949 = vmatpush1.msra.mxu0 0.0
    %950 = vmatprep.subr.mxu0 0.0
    %951 = vmatpush1.msra.mxu0 0.0
    %952 = vmatprep.subr.mxu0 0.0
    %953 = vmatpush1.msra.mxu0 0.0
    %954 = vmatprep.subr.mxu0 0.0
    %955 = vmatpush1.msra.mxu0 0.0
    %956 = vmatprep.mubr.f32.mxu0 0.0
    %957 = vmatmul.mubr.f32.gmra.mrb[0].mxu0 %v890
    %v958 = vpop.f32.mrb[0].mxu0
    %v959 = vadd.f32 %v883, %v958
    %v960 = vpop.f32.mrb[0].mxu0
    %961 = vdwg.mxu0
    %v962 = vadd.f32 %v959, %v414
    %v963 = vmul.f32 %v962, 0.5
    %v964 = vtanh.pop %v963
    %v965 = vmul.f32 %v964, 0.5
    %v966 = vadd.f32 %v965, 0.5
    %v967 = vtanh.pop %v962
    %v968 = vmul.f32 %v966, %v705
    %970 = vrot.lane.b32.xlu0 %v967, 64
    %v971 = vpop.permute.xlu0 %970
    %v973 = vmul.f32 %v966, %v971
    %975 = vrot.lane.b32.xlu0 %v973, 32
    %v976 = vpop.permute.xlu0 %975
    %v978 = vadd.f32 %v968, %v976
    %v979 = vtanh.pop %v978
    %981 = vrot.lane.b32.xlu0 %v979, 64
    %v982 = vpop.permute.xlu0 %981
    %v984 = vmul.f32 %v966, %v982
    %985 = vmatprep.subr.mxu0 0.0
    %986 = vmatpush1.msra.mxu0 %v154
    %987 = vmatprep.subr.mxu0 0.0
    %988 = vmatpush1.msra.mxu0 %v155
    %989 = vmatprep.subr.mxu0 0.0
    %990 = vmatpush1.msra.mxu0 %v156
    %991 = vmatprep.subr.mxu0 0.0
    %992 = vmatpush1.msra.mxu0 %v157
    %993 = vmatprep.subr.mxu0 0.0
    %994 = vmatpush1.msra.mxu0 0.0
    %995 = vmatprep.subr.mxu0 0.0
    %996 = vmatpush1.msra.mxu0 0.0
    %997 = vmatprep.subr.mxu0 0.0
    %998 = vmatpush1.msra.mxu0 0.0
    %999 = vmatprep.subr.mxu0 0.0
    %1000 = vmatpush1.msra.mxu0 0.0
    %1001 = vmatprep.subr.mxu0 0.0
    %1002 = vmatpush1.msra.mxu0 0.0
    %1003 = vmatprep.subr.mxu0 0.0
    %1004 = vmatpush1.msra.mxu0 0.0
    %1005 = vmatprep.subr.mxu0 0.0
    %1006 = vmatpush1.msra.mxu0 0.0
    %1007 = vmatprep.subr.mxu0 0.0
    %1008 = vmatpush1.msra.mxu0 0.0
    %1009 = vmatprep.subr.mxu0 0.0
    %1010 = vmatpush1.msra.mxu0 0.0
    %1011 = vmatprep.subr.mxu0 0.0
    %1012 = vmatpush1.msra.mxu0 0.0
    %1013 = vmatprep.subr.mxu0 0.0
    %1014 = vmatpush1.msra.mxu0 0.0
    %1015 = vmatprep.subr.mxu0 0.0
    %1016 = vmatpush1.msra.mxu0 0.0
    %1017 = vmatprep.subr.mxu0 0.0
    %1018 = vmatpush1.msra.mxu0 0.0
    %1019 = vmatprep.subr.mxu0 0.0
    %1020 = vmatpush1.msra.mxu0 0.0
    %1021 = vmatprep.subr.mxu0 0.0
    %1022 = vmatpush1.msra.mxu0 0.0
    %1023 = vmatprep.subr.mxu0 0.0
    %1024 = vmatpush1.msra.mxu0 0.0
    %1025 = vmatprep.subr.mxu0 0.0
    %1026 = vmatpush1.msra.mxu0 0.0
    %1027 = vmatprep.subr.mxu0 0.0
    %1028 = vmatpush1.msra.mxu0 0.0
    %1029 = vmatprep.subr.mxu0 0.0
    %1030 = vmatpush1.msra.mxu0 0.0
    %1031 = vmatprep.subr.mxu0 0.0
    %1032 = vmatpush1.msra.mxu0 0.0
    %1033 = vmatprep.subr.mxu0 0.0
    %1034 = vmatpush1.msra.mxu0 0.0
    %1035 = vmatprep.subr.mxu0 0.0
    %1036 = vmatpush1.msra.mxu0 0.0
    %1037 = vmatprep.subr.mxu0 0.0
    %1038 = vmatpush1.msra.mxu0 0.0
    %1039 = vmatprep.subr.mxu0 0.0
    %1040 = vmatpush1.msra.mxu0 0.0
    %1041 = vmatprep.subr.mxu0 0.0
    %1042 = vmatpush1.msra.mxu0 0.0
    %1043 = vmatprep.subr.mxu0 0.0
    %1044 = vmatpush1.msra.mxu0 0.0
    %1045 = vmatprep.subr.mxu0 0.0
    %1046 = vmatpush1.msra.mxu0 0.0
    %1047 = vmatprep.subr.mxu0 0.0
    %1048 = vmatpush1.msra.mxu0 0.0
    %1049 = vmatprep.mubr.f32.mxu0 0.0
    %1050 = vmatmul.mubr.f32.gmra.mrb[0].mxu0 %v890
    %v1051 = vpop.f32.mrb[0].mxu0
    %v1052 = vadd.f32 0.0, %v1051
    %v1053 = vpop.f32.mrb[0].mxu0
    %1054 = vdwg.mxu0
    %v1056 = vrot.slane %v1052, 2
    %v1058 = vadd.f32 %v146, %v1056
    %v1059 = vmul.f32 %v1058, 0.5
    %v1060 = vtanh.pop %v1059
    %v1061 = vmul.f32 %v1060, 0.5
    %v1062 = vadd.f32 %v1061, 0.5
    %v1063 = vtanh.pop %v1058
    %v1065 = vrot.slane %v804, 6
    %v1067 = vmul.f32 %v1062, %v1065
    %1069 = vrot.lane.b32.xlu0 %v1063, 64
    %v1070 = vpop.permute.xlu0 %1069
    %v1072 = vmul.f32 %v1062, %v1070
    %1074 = vrot.lane.b32.xlu0 %v1072, 32
    %v1075 = vpop.permute.xlu0 %1074
    %v1077 = vadd.f32 %v1067, %v1075
    %v1078 = vtanh.pop %v1077
    %1080 = vrot.lane.b32.xlu0 %v1078, 64
    %v1081 = vpop.permute.xlu0 %1080
    %v1083 = vmul.f32 %v1062, %v1081
    %1085 = vrot.lane.b32.xlu0 %v984, 32
    %v1086 = vpop.permute.xlu0 %1085
    %v1087 = vsel %vm72, %v1086, 0
    %1089 = vmatprep.subr.mxu0 0.0
    %1090 = vmatpush1.msra.mxu0 %v163
    %1091 = vmatprep.subr.mxu0 0.0
    %1092 = vmatpush1.msra.mxu0 %v164
    %1093 = vmatprep.subr.mxu0 0.0
    %1094 = vmatpush1.msra.mxu0 %v165
    %1095 = vmatprep.subr.mxu0 0.0
    %1096 = vmatpush1.msra.mxu0 %v166
    %1097 = vmatprep.subr.mxu0 0.0
    %1098 = vmatpush1.msra.mxu0 0.0
    %1099 = vmatprep.subr.mxu0 0.0
    %1100 = vmatpush1.msra.mxu0 0.0
    %1101 = vmatprep.subr.mxu0 0.0
    %1102 = vmatpush1.msra.mxu0 0.0
    %1103 = vmatprep.subr.mxu0 0.0
    %1104 = vmatpush1.msra.mxu0 0.0
    %1105 = vmatprep.subr.mxu0 0.0
    %1106 = vmatpush1.msra.mxu0 0.0
    %1107 = vmatprep.subr.mxu0 0.0
    %1108 = vmatpush1.msra.mxu0 0.0
    %1109 = vmatprep.subr.mxu0 0.0
    %1110 = vmatpush1.msra.mxu0 0.0
    %1111 = vmatprep.subr.mxu0 0.0
    %1112 = vmatpush1.msra.mxu0 0.0
    %1113 = vmatprep.subr.mxu0 0.0
    %1114 = vmatpush1.msra.mxu0 0.0
    %1115 = vmatprep.subr.mxu0 0.0
    %1116 = vmatpush1.msra.mxu0 0.0
    %1117 = vmatprep.subr.mxu0 0.0
    %1118 = vmatpush1.msra.mxu0 0.0
    %1119 = vmatprep.subr.mxu0 0.0
    %1120 = vmatpush1.msra.mxu0 0.0
    %1121 = vmatprep.subr.mxu0 0.0
    %1122 = vmatpush1.msra.mxu0 0.0
    %1123 = vmatprep.subr.mxu0 0.0
    %1124 = vmatpush1.msra.mxu0 0.0
    %1125 = vmatprep.subr.mxu0 0.0
    %1126 = vmatpush1.msra.mxu0 0.0
    %1127 = vmatprep.subr.mxu0 0.0
    %1128 = vmatpush1.msra.mxu0 0.0
    %1129 = vmatprep.subr.mxu0 0.0
    %1130 = vmatpush1.msra.mxu0 0.0
    %1131 = vmatprep.subr.mxu0 0.0
    %1132 = vmatpush1.msra.mxu0 0.0
    %1133 = vmatprep.subr.mxu0 0.0
    %1134 = vmatpush1.msra.mxu0 0.0
    %1135 = vmatprep.subr.mxu0 0.0
    %1136 = vmatpush1.msra.mxu0 0.0
    %1137 = vmatprep.subr.mxu0 0.0
    %1138 = vmatpush1.msra.mxu0 0.0
    %1139 = vmatprep.subr.mxu0 0.0
    %1140 = vmatpush1.msra.mxu0 0.0
    %1141 = vmatprep.subr.mxu0 0.0
    %1142 = vmatpush1.msra.mxu0 0.0
    %1143 = vmatprep.subr.mxu0 0.0
    %1144 = vmatpush1.msra.mxu0 0.0
    %1145 = vmatprep.subr.mxu0 0.0
    %1146 = vmatpush1.msra.mxu0 0.0
    %1147 = vmatprep.subr.mxu0 0.0
    %1148 = vmatpush1.msra.mxu0 0.0
    %1149 = vmatprep.subr.mxu0 0.0
    %1150 = vmatpush1.msra.mxu0 0.0
    %1151 = vmatprep.subr.mxu0 0.0
    %1152 = vmatpush1.msra.mxu0 0.0
    %1153 = vmatprep.mubr.f32.mxu0 0.0
    %1154 = vmatmul.mubr.f32.gmra.mrb[0].mxu0 %v1087
    %v1155 = vpop.f32.mrb[0].mxu0
    %v1156 = vadd.f32 0.0, %v1155
    %v1157 = vpop.f32.mrb[0].mxu0
    %1158 = vdwg.mxu0
    %v1160 = vrot.slane %v1083, 6
    %1161 = vrot.lane.b32.xlu0 %v1160, 32
    %v1162 = vpop.permute.xlu0 %1161
    %v1163 = vsel %vm72, %v1162, 0
    %1165 = vmatprep.subr.mxu0 0.0
    %1166 = vmatpush1.msra.mxu0 %v159
    %1167 = vmatprep.subr.mxu0 0.0
    %1168 = vmatpush1.msra.mxu0 %v160
    %1169 = vmatprep.subr.mxu0 0.0
    %1170 = vmatpush1.msra.mxu0 %v161
    %1171 = vmatprep.subr.mxu0 0.0
    %1172 = vmatpush1.msra.mxu0 %v162
    %1173 = vmatprep.subr.mxu0 0.0
    %1174 = vmatpush1.msra.mxu0 0.0
    %1175 = vmatprep.subr.mxu0 0.0
    %1176 = vmatpush1.msra.mxu0 0.0
    %1177 = vmatprep.subr.mxu0 0.0
    %1178 = vmatpush1.msra.mxu0 0.0
    %1179 = vmatprep.subr.mxu0 0.0
    %1180 = vmatpush1.msra.mxu0 0.0
    %1181 = vmatprep.subr.mxu0 0.0
    %1182 = vmatpush1.msra.mxu0 0.0
    %1183 = vmatprep.subr.mxu0 0.0
    %1184 = vmatpush1.msra.mxu0 0.0
    %1185 = vmatprep.subr.mxu0 0.0
    %1186 = vmatpush1.msra.mxu0 0.0
    %1187 = vmatprep.subr.mxu0 0.0
    %1188 = vmatpush1.msra.mxu0 0.0
    %1189 = vmatprep.subr.mxu0 0.0
    %1190 = vmatpush1.msra.mxu0 0.0
    %1191 = vmatprep.subr.mxu0 0.0
    %1192 = vmatpush1.msra.mxu0 0.0
    %1193 = vmatprep.subr.mxu0 0.0
    %1194 = vmatpush1.msra.mxu0 0.0
    %1195 = vmatprep.subr.mxu0 0.0
    %1196 = vmatpush1.msra.mxu0 0.0
    %1197 = vmatprep.subr.mxu0 0.0
    %1198 = vmatpush1.msra.mxu0 0.0
    %1199 = vmatprep.subr.mxu0 0.0
    %1200 = vmatpush1.msra.mxu0 0.0
    %1201 = vmatprep.subr.mxu0 0.0
    %1202 = vmatpush1.msra.mxu0 0.0
    %1203 = vmatprep.subr.mxu0 0.0
    %1204 = vmatpush1.msra.mxu0 0.0
    %1205 = vmatprep.subr.mxu0 0.0
    %1206 = vmatpush1.msra.mxu0 0.0
    %1207 = vmatprep.subr.mxu0 0.0
    %1208 = vmatpush1.msra.mxu0 0.0
    %1209 = vmatprep.subr.mxu0 0.0
    %1210 = vmatpush1.msra.mxu0 0.0
    %1211 = vmatprep.subr.mxu0 0.0
    %1212 = vmatpush1.msra.mxu0 0.0
    %1213 = vmatprep.subr.mxu0 0.0
    %1214 = vmatpush1.msra.mxu0 0.0
    %1215 = vmatprep.subr.mxu0 0.0
    %1216 = vmatpush1.msra.mxu0 0.0
    %1217 = vmatprep.subr.mxu0 0.0
    %1218 = vmatpush1.msra.mxu0 0.0
    %1219 = vmatprep.subr.mxu0 0.0
    %1220 = vmatpush1.msra.mxu0 0.0
    %1221 = vmatprep.subr.mxu0 0.0
    %1222 = vmatpush1.msra.mxu0 0.0
    %1223 = vmatprep.subr.mxu0 0.0
    %1224 = vmatpush1.msra.mxu0 0.0
    %1225 = vmatprep.subr.mxu0 0.0
    %1226 = vmatpush1.msra.mxu0 0.0
    %1227 = vmatprep.subr.mxu0 0.0
    %1228 = vmatpush1.msra.mxu0 0.0
    %1229 = vmatprep.mubr.f32.mxu0 0.0
    %1230 = vmatmul.mubr.f32.gmra.mrb[0].mxu0 %v1163
    %v1231 = vpop.f32.mrb[0].mxu0
    %v1232 = vadd.f32 %v1156, %v1231
    %v1233 = vpop.f32.mrb[0].mxu0
    %1234 = vdwg.mxu0
    %v1235 = vadd.f32 %v1232, %v414
    %v1236 = vmul.f32 %v1235, 0.5
    %v1237 = vtanh.pop %v1236
    %v1238 = vmul.f32 %v1237, 0.5
    %v1239 = vadd.f32 %v1238, 0.5
    %v1240 = vtanh.pop %v1235
    %v1241 = vmul.f32 %v1239, %v978
    %1243 = vrot.lane.b32.xlu0 %v1240, 64
    %v1244 = vpop.permute.xlu0 %1243
    %v1246 = vmul.f32 %v1239, %v1244
    %1248 = vrot.lane.b32.xlu0 %v1246, 32
    %v1249 = vpop.permute.xlu0 %1248
    %v1251 = vadd.f32 %v1241, %v1249
    %v1252 = vtanh.pop %v1251
    %1254 = vrot.lane.b32.xlu0 %v1252, 64
    %v1255 = vpop.permute.xlu0 %1254
    %v1257 = vmul.f32 %v1239, %v1255
    %1258 = vmatprep.subr.mxu0 0.0
    %1259 = vmatpush1.msra.mxu0 %v154
    %1260 = vmatprep.subr.mxu0 0.0
    %1261 = vmatpush1.msra.mxu0 %v155
    %1262 = vmatprep.subr.mxu0 0.0
    %1263 = vmatpush1.msra.mxu0 %v156
    %1264 = vmatprep.subr.mxu0 0.0
    %1265 = vmatpush1.msra.mxu0 %v157
    %1266 = vmatprep.subr.mxu0 0.0
    %1267 = vmatpush1.msra.mxu0 0.0
    %1268 = vmatprep.subr.mxu0 0.0
    %1269 = vmatpush1.msra.mxu0 0.0
    %1270 = vmatprep.subr.mxu0 0.0
    %1271 = vmatpush1.msra.mxu0 0.0
    %1272 = vmatprep.subr.mxu0 0.0
    %1273 = vmatpush1.msra.mxu0 0.0
    %1274 = vmatprep.subr.mxu0 0.0
    %1275 = vmatpush1.msra.mxu0 0.0
    %1276 = vmatprep.subr.mxu0 0.0
    %1277 = vmatpush1.msra.mxu0 0.0
    %1278 = vmatprep.subr.mxu0 0.0
    %1279 = vmatpush1.msra.mxu0 0.0
    %1280 = vmatprep.subr.mxu0 0.0
    %1281 = vmatpush1.msra.mxu0 0.0
    %1282 = vmatprep.subr.mxu0 0.0
    %1283 = vmatpush1.msra.mxu0 0.0
    %1284 = vmatprep.subr.mxu0 0.0
    %1285 = vmatpush1.msra.mxu0 0.0
    %1286 = vmatprep.subr.mxu0 0.0
    %1287 = vmatpush1.msra.mxu0 0.0
    %1288 = vmatprep.subr.mxu0 0.0
    %1289 = vmatpush1.msra.mxu0 0.0
    %1290 = vmatprep.subr.mxu0 0.0
    %1291 = vmatpush1.msra.mxu0 0.0
    %1292 = vmatprep.subr.mxu0 0.0
    %1293 = vmatpush1.msra.mxu0 0.0
    %1294 = vmatprep.subr.mxu0 0.0
    %1295 = vmatpush1.msra.mxu0 0.0
    %1296 = vmatprep.subr.mxu0 0.0
    %1297 = vmatpush1.msra.mxu0 0.0
    %1298 = vmatprep.subr.mxu0 0.0
    %1299 = vmatpush1.msra.mxu0 0.0
    %1300 = vmatprep.subr.mxu0 0.0
    %1301 = vmatpush1.msra.mxu0 0.0
    %1302 = vmatprep.subr.mxu0 0.0
    %1303 = vmatpush1.msra.mxu0 0.0
    %1304 = vmatprep.subr.mxu0 0.0
    %1305 = vmatpush1.msra.mxu0 0.0
    %1306 = vmatprep.subr.mxu0 0.0
    %1307 = vmatpush1.msra.mxu0 0.0
    %1308 = vmatprep.subr.mxu0 0.0
    %1309 = vmatpush1.msra.mxu0 0.0
    %1310 = vmatprep.subr.mxu0 0.0
    %1311 = vmatpush1.msra.mxu0 0.0
    %1312 = vmatprep.subr.mxu0 0.0
    %1313 = vmatpush1.msra.mxu0 0.0
    %1314 = vmatprep.subr.mxu0 0.0
    %1315 = vmatpush1.msra.mxu0 0.0
    %1316 = vmatprep.subr.mxu0 0.0
    %1317 = vmatpush1.msra.mxu0 0.0
    %1318 = vmatprep.subr.mxu0 0.0
    %1319 = vmatpush1.msra.mxu0 0.0
    %1320 = vmatprep.subr.mxu0 0.0
    %1321 = vmatpush1.msra.mxu0 0.0
    %1322 = vmatprep.mubr.f32.mxu0 0.0
    %1323 = vmatmul.mubr.f32.gmra.mrb[0].mxu0 %v1163
    %v1324 = vpop.f32.mrb[0].mxu0
    %v1325 = vadd.f32 0.0, %v1324
    %v1326 = vpop.f32.mrb[0].mxu0
    %1327 = vdwg.mxu0
    %v1328 = vadd.f32 %v151, %v1325
    %v1329 = vmul.f32 %v1328, 0.5
    %v1330 = vtanh.pop %v1329
    %v1331 = vmul.f32 %v1330, 0.5
    %v1332 = vadd.f32 %v1331, 0.5
    %v1333 = vtanh.pop %v1328
    %v1335 = vrot.slane %v1077, 6
    %v1337 = vmul.f32 %v1332, %v1335
    %1339 = vrot.lane.b32.xlu0 %v1333, 64
    %v1340 = vpop.permute.xlu0 %1339
    %v1342 = vmul.f32 %v1332, %v1340
    %1344 = vrot.lane.b32.xlu0 %v1342, 32
    %v1345 = vpop.permute.xlu0 %1344
    %v1347 = vadd.f32 %v1337, %v1345
    %v1348 = vtanh.pop %v1347
    %1350 = vrot.lane.b32.xlu0 %v1348, 64
    %v1351 = vpop.permute.xlu0 %1350
    %v1353 = vmul.f32 %v1332, %v1351
    %1355 = vrot.lane.b32.xlu0 %v1257, 32
    %v1356 = vpop.permute.xlu0 %1355
    %v1357 = vsel %vm72, %v1356, 0
    %1359 = vmatprep.subr.mxu0 0.0
    %1360 = vmatpush1.msra.mxu0 %v163
    %1361 = vmatprep.subr.mxu0 0.0
    %1362 = vmatpush1.msra.mxu0 %v164
    %1363 = vmatprep.subr.mxu0 0.0
    %1364 = vmatpush1.msra.mxu0 %v165
    %1365 = vmatprep.subr.mxu0 0.0
    %1366 = vmatpush1.msra.mxu0 %v166
    %1367 = vmatprep.subr.mxu0 0.0
    %1368 = vmatpush1.msra.mxu0 0.0
    %1369 = vmatprep.subr.mxu0 0.0
    %1370 = vmatpush1.msra.mxu0 0.0
    %1371 = vmatprep.subr.mxu0 0.0
    %1372 = vmatpush1.msra.mxu0 0.0
    %1373 = vmatprep.subr.mxu0 0.0
    %1374 = vmatpush1.msra.mxu0 0.0
    %1375 = vmatprep.subr.mxu0 0.0
    %1376 = vmatpush1.msra.mxu0 0.0
    %1377 = vmatprep.subr.mxu0 0.0
    %1378 = vmatpush1.msra.mxu0 0.0
    %1379 = vmatprep.subr.mxu0 0.0
    %1380 = vmatpush1.msra.mxu0 0.0
    %1381 = vmatprep.subr.mxu0 0.0
    %1382 = vmatpush1.msra.mxu0 0.0
    %1383 = vmatprep.subr.mxu0 0.0
    %1384 = vmatpush1.msra.mxu0 0.0
    %1385 = vmatprep.subr.mxu0 0.0
    %1386 = vmatpush1.msra.mxu0 0.0
    %1387 = vmatprep.subr.mxu0 0.0
    %1388 = vmatpush1.msra.mxu0 0.0
    %1389 = vmatprep.subr.mxu0 0.0
    %1390 = vmatpush1.msra.mxu0 0.0
    %1391 = vmatprep.subr.mxu0 0.0
    %1392 = vmatpush1.msra.mxu0 0.0
    %1393 = vmatprep.subr.mxu0 0.0
    %1394 = vmatpush1.msra.mxu0 0.0
    %1395 = vmatprep.subr.mxu0 0.0
    %1396 = vmatpush1.msra.mxu0 0.0
    %1397 = vmatprep.subr.mxu0 0.0
    %1398 = vmatpush1.msra.mxu0 0.0
    %1399 = vmatprep.subr.mxu0 0.0
    %1400 = vmatpush1.msra.mxu0 0.0
    %1401 = vmatprep.subr.mxu0 0.0
    %1402 = vmatpush1.msra.mxu0 0.0
    %1403 = vmatprep.subr.mxu0 0.0
    %1404 = vmatpush1.msra.mxu0 0.0
    %1405 = vmatprep.subr.mxu0 0.0
    %1406 = vmatpush1.msra.mxu0 0.0
    %1407 = vmatprep.subr.mxu0 0.0
    %1408 = vmatpush1.msra.mxu0 0.0
    %1409 = vmatprep.subr.mxu0 0.0
    %1410 = vmatpush1.msra.mxu0 0.0
    %1411 = vmatprep.subr.mxu0 0.0
    %1412 = vmatpush1.msra.mxu0 0.0
    %1413 = vmatprep.subr.mxu0 0.0
    %1414 = vmatpush1.msra.mxu0 0.0
    %1415 = vmatprep.subr.mxu0 0.0
    %1416 = vmatpush1.msra.mxu0 0.0
    %1417 = vmatprep.subr.mxu0 0.0
    %1418 = vmatpush1.msra.mxu0 0.0
    %1419 = vmatprep.subr.mxu0 0.0
    %1420 = vmatpush1.msra.mxu0 0.0
    %1421 = vmatprep.subr.mxu0 0.0
    %1422 = vmatpush1.msra.mxu0 0.0
    %1423 = vmatprep.mubr.f32.mxu0 0.0
    %1424 = vmatmul.mubr.f32.gmra.mrb[0].mxu0 %v1357
    %v1425 = vpop.f32.mrb[0].mxu0
    %v1426 = vadd.f32 0.0, %v1425
    %v1427 = vpop.f32.mrb[0].mxu0
    %1428 = vdwg.mxu0
    %1430 = vrot.lane.b32.xlu0 %v1353, 32
    %v1431 = vpop.permute.xlu0 %1430
    %v1432 = vsel %vm72, %v1431, 0
    %1434 = vmatprep.subr.mxu0 0.0
    %1435 = vmatpush1.msra.mxu0 %v159
    %1436 = vmatprep.subr.mxu0 0.0
    %1437 = vmatpush1.msra.mxu0 %v160
    %1438 = vmatprep.subr.mxu0 0.0
    %1439 = vmatpush1.msra.mxu0 %v161
    %1440 = vmatprep.subr.mxu0 0.0
    %1441 = vmatpush1.msra.mxu0 %v162
    %1442 = vmatprep.subr.mxu0 0.0
    %1443 = vmatpush1.msra.mxu0 0.0
    %1444 = vmatprep.subr.mxu0 0.0
    %1445 = vmatpush1.msra.mxu0 0.0
    %1446 = vmatprep.subr.mxu0 0.0
    %1447 = vmatpush1.msra.mxu0 0.0
    %1448 = vmatprep.subr.mxu0 0.0
    %1449 = vmatpush1.msra.mxu0 0.0
    %1450 = vmatprep.subr.mxu0 0.0
    %1451 = vmatpush1.msra.mxu0 0.0
    %1452 = vmatprep.subr.mxu0 0.0
    %1453 = vmatpush1.msra.mxu0 0.0
    %1454 = vmatprep.subr.mxu0 0.0
    %1455 = vmatpush1.msra.mxu0 0.0
    %1456 = vmatprep.subr.mxu0 0.0
    %1457 = vmatpush1.msra.mxu0 0.0
    %1458 = vmatprep.subr.mxu0 0.0
    %1459 = vmatpush1.msra.mxu0 0.0
    %1460 = vmatprep.subr.mxu0 0.0
    %1461 = vmatpush1.msra.mxu0 0.0
    %1462 = vmatprep.subr.mxu0 0.0
    %1463 = vmatpush1.msra.mxu0 0.0
    %1464 = vmatprep.subr.mxu0 0.0
    %1465 = vmatpush1.msra.mxu0 0.0
    %1466 = vmatprep.subr.mxu0 0.0
    %1467 = vmatpush1.msra.mxu0 0.0
    %1468 = vmatprep.subr.mxu0 0.0
    %1469 = vmatpush1.msra.mxu0 0.0
    %1470 = vmatprep.subr.mxu0 0.0
    %1471 = vmatpush1.msra.mxu0 0.0
    %1472 = vmatprep.subr.mxu0 0.0
    %1473 = vmatpush1.msra.mxu0 0.0
    %1474 = vmatprep.subr.mxu0 0.0
    %1475 = vmatpush1.msra.mxu0 0.0
    %1476 = vmatprep.subr.mxu0 0.0
    %1477 = vmatpush1.msra.mxu0 0.0
    %1478 = vmatprep.subr.mxu0 0.0
    %1479 = vmatpush1.msra.mxu0 0.0
    %1480 = vmatprep.subr.mxu0 0.0
    %1481 = vmatpush1.msra.mxu0 0.0
    %1482 = vmatprep.subr.mxu0 0.0
    %1483 = vmatpush1.msra.mxu0 0.0
    %1484 = vmatprep.subr.mxu0 0.0
    %1485 = vmatpush1.msra.mxu0 0.0
    %1486 = vmatprep.subr.mxu0 0.0
    %1487 = vmatpush1.msra.mxu0 0.0
    %1488 = vmatprep.subr.mxu0 0.0
    %1489 = vmatpush1.msra.mxu0 0.0
    %1490 = vmatprep.subr.mxu0 0.0
    %1491 = vmatpush1.msra.mxu0 0.0
    %1492 = vmatprep.subr.mxu0 0.0
    %1493 = vmatpush1.msra.mxu0 0.0
    %1494 = vmatprep.subr.mxu0 0.0
    %1495 = vmatpush1.msra.mxu0 0.0
    %1496 = vmatprep.subr.mxu0 0.0
    %1497 = vmatpush1.msra.mxu0 0.0
    %1498 = vmatprep.mubr.f32.mxu0 0.0
    %1499 = vmatmul.mubr.f32.gmra.mrb[0].mxu0 %v1432
    %v1500 = vpop.f32.mrb[0].mxu0
    %v1501 = vadd.f32 %v1426, %v1500
    %v1502 = vpop.f32.mrb[0].mxu0
    %1503 = vdwg.mxu0
    %v1504 = vadd.f32 %v1501, %v414
    %v1505 = vmul.f32 %v1504, 0.5
    %v1506 = vtanh.pop %v1505
    %v1507 = vmul.f32 %v1506, 0.5
    %v1508 = vadd.f32 %v1507, 0.5
    %v1509 = vtanh.pop %v1504
    %v1510 = vmul.f32 %v1508, %v1251
    %1512 = vrot.lane.b32.xlu0 %v1509, 64
    %v1513 = vpop.permute.xlu0 %1512
    %v1515 = vmul.f32 %v1508, %v1513
    %1517 = vrot.lane.b32.xlu0 %v1515, 32
    %v1518 = vpop.permute.xlu0 %1517
    %v1520 = vadd.f32 %v1510, %v1518
    %v1521 = vtanh.pop %v1520
    %1523 = vrot.lane.b32.xlu0 %v1521, 64
    %v1524 = vpop.permute.xlu0 %1523
    %v1526 = vmul.f32 %v1508, %v1524
    %1527 = vmatprep.subr.mxu0 0.0
    %1528 = vmatpush1.msra.mxu0 %v154
    %1529 = vmatprep.subr.mxu0 0.0
    %1530 = vmatpush1.msra.mxu0 %v155
    %1531 = vmatprep.subr.mxu0 0.0
    %1532 = vmatpush1.msra.mxu0 %v156
    %1533 = vmatprep.subr.mxu0 0.0
    %1534 = vmatpush1.msra.mxu0 %v157
    %1535 = vmatprep.subr.mxu0 0.0
    %1536 = vmatpush1.msra.mxu0 0.0
    %1537 = vmatprep.subr.mxu0 0.0
    %1538 = vmatpush1.msra.mxu0 0.0
    %1539 = vmatprep.subr.mxu0 0.0
    %1540 = vmatpush1.msra.mxu0 0.0
    %1541 = vmatprep.subr.mxu0 0.0
    %1542 = vmatpush1.msra.mxu0 0.0
    %1543 = vmatprep.subr.mxu0 0.0
    %1544 = vmatpush1.msra.mxu0 0.0
    %1545 = vmatprep.subr.mxu0 0.0
    %1546 = vmatpush1.msra.mxu0 0.0
    %1547 = vmatprep.subr.mxu0 0.0
    %1548 = vmatpush1.msra.mxu0 0.0
    %1549 = vmatprep.subr.mxu0 0.0
    %1550 = vmatpush1.msra.mxu0 0.0
    %1551 = vmatprep.subr.mxu0 0.0
    %1552 = vmatpush1.msra.mxu0 0.0
    %1553 = vmatprep.subr.mxu0 0.0
    %1554 = vmatpush1.msra.mxu0 0.0
    %1555 = vmatprep.subr.mxu0 0.0
    %1556 = vmatpush1.msra.mxu0 0.0
    %1557 = vmatprep.subr.mxu0 0.0
    %1558 = vmatpush1.msra.mxu0 0.0
    %1559 = vmatprep.subr.mxu0 0.0
    %1560 = vmatpush1.msra.mxu0 0.0
    %1561 = vmatprep.subr.mxu0 0.0
    %1562 = vmatpush1.msra.mxu0 0.0
    %1563 = vmatprep.subr.mxu0 0.0
    %1564 = vmatpush1.msra.mxu0 0.0
    %1565 = vmatprep.subr.mxu0 0.0
    %1566 = vmatpush1.msra.mxu0 0.0
    %1567 = vmatprep.subr.mxu0 0.0
    %1568 = vmatpush1.msra.mxu0 0.0
    %1569 = vmatprep.subr.mxu0 0.0
    %1570 = vmatpush1.msra.mxu0 0.0
    %1571 = vmatprep.subr.mxu0 0.0
    %1572 = vmatpush1.msra.mxu0 0.0
    %1573 = vmatprep.subr.mxu0 0.0
    %1574 = vmatpush1.msra.mxu0 0.0
    %1575 = vmatprep.subr.mxu0 0.0
    %1576 = vmatpush1.msra.mxu0 0.0
    %1577 = vmatprep.subr.mxu0 0.0
    %1578 = vmatpush1.msra.mxu0 0.0
    %1579 = vmatprep.subr.mxu0 0.0
    %1580 = vmatpush1.msra.mxu0 0.0
    %1581 = vmatprep.subr.mxu0 0.0
    %1582 = vmatpush1.msra.mxu0 0.0
    %1583 = vmatprep.subr.mxu0 0.0
    %1584 = vmatpush1.msra.mxu0 0.0
    %1585 = vmatprep.subr.mxu0 0.0
    %1586 = vmatpush1.msra.mxu0 0.0
    %1587 = vmatprep.subr.mxu0 0.0
    %1588 = vmatpush1.msra.mxu0 0.0
    %1589 = vmatprep.subr.mxu0 0.0
    %1590 = vmatpush1.msra.mxu0 0.0
    %1591 = vmatprep.mubr.f32.mxu0 0.0
    %1592 = vmatmul.mubr.f32.gmra.mrb[0].mxu0 %v1432
    %v1593 = vpop.f32.mrb[0].mxu0
    %v1594 = vadd.f32 0.0, %v1593
    %v1595 = vpop.f32.mrb[0].mxu0
    %1596 = vdwg.mxu0
    %v1598 = vrot.slane %v1594, 6
    %v1600 = vadd.f32 %v151, %v1598
    %v1601 = vmul.f32 %v1600, 0.5
    %v1602 = vtanh.pop %v1601
    %v1603 = vmul.f32 %v1602, 0.5
    %v1604 = vadd.f32 %v1603, 0.5
    %v1605 = vtanh.pop %v1600
    %v1607 = vrot.slane %v1347, 6
    %v1609 = vmul.f32 %v1604, %v1607
    %1611 = vrot.lane.b32.xlu0 %v1605, 64
    %v1612 = vpop.permute.xlu0 %1611
    %v1614 = vmul.f32 %v1604, %v1612
    %1616 = vrot.lane.b32.xlu0 %v1614, 32
    %v1617 = vpop.permute.xlu0 %1616
    %v1619 = vadd.f32 %v1609, %v1617
    %v1620 = vtanh.pop %v1619
    %1622 = vrot.lane.b32.xlu0 %v1620, 64
    %v1623 = vpop.permute.xlu0 %1622
    %v1625 = vmul.f32 %v1604, %v1623
    %1627 = vrot.lane.b32.xlu0 %v1526, 32
    %v1628 = vpop.permute.xlu0 %1627
    %v1629 = vsel %vm72, %v1628, 0
    %1631 = vmatprep.subr.mxu0 0.0
    %1632 = vmatpush1.msra.mxu0 %v163
    %1633 = vmatprep.subr.mxu0 0.0
    %1634 = vmatpush1.msra.mxu0 %v164
    %1635 = vmatprep.subr.mxu0 0.0
    %1636 = vmatpush1.msra.mxu0 %v165
    %1637 = vmatprep.subr.mxu0 0.0
    %1638 = vmatpush1.msra.mxu0 %v166
    %1639 = vmatprep.subr.mxu0 0.0
    %1640 = vmatpush1.msra.mxu0 0.0
    %1641 = vmatprep.subr.mxu0 0.0
    %1642 = vmatpush1.msra.mxu0 0.0
    %1643 = vmatprep.subr.mxu0 0.0
    %1644 = vmatpush1.msra.mxu0 0.0
    %1645 = vmatprep.subr.mxu0 0.0
    %1646 = vmatpush1.msra.mxu0 0.0
    %1647 = vmatprep.subr.mxu0 0.0
    %1648 = vmatpush1.msra.mxu0 0.0
    %1649 = vmatprep.subr.mxu0 0.0
    %1650 = vmatpush1.msra.mxu0 0.0
    %1651 = vmatprep.subr.mxu0 0.0
    %1652 = vmatpush1.msra.mxu0 0.0
    %1653 = vmatprep.subr.mxu0 0.0
    %1654 = vmatpush1.msra.mxu0 0.0
    %1655 = vmatprep.subr.mxu0 0.0
    %1656 = vmatpush1.msra.mxu0 0.0
    %1657 = vmatprep.subr.mxu0 0.0
    %1658 = vmatpush1.msra.mxu0 0.0
    %1659 = vmatprep.subr.mxu0 0.0
    %1660 = vmatpush1.msra.mxu0 0.0
    %1661 = vmatprep.subr.mxu0 0.0
    %1662 = vmatpush1.msra.mxu0 0.0
    %1663 = vmatprep.subr.mxu0 0.0
    %1664 = vmatpush1.msra.mxu0 0.0
    %1665 = vmatprep.subr.mxu0 0.0
    %1666 = vmatpush1.msra.mxu0 0.0
    %1667 = vmatprep.subr.mxu0 0.0
    %1668 = vmatpush1.msra.mxu0 0.0
    %1669 = vmatprep.subr.mxu0 0.0
    %1670 = vmatpush1.msra.mxu0 0.0
    %1671 = vmatprep.subr.mxu0 0.0
    %1672 = vmatpush1.msra.mxu0 0.0
    %1673 = vmatprep.subr.mxu0 0.0
    %1674 = vmatpush1.msra.mxu0 0.0
    %1675 = vmatprep.subr.mxu0 0.0
    %1676 = vmatpush1.msra.mxu0 0.0
    %1677 = vmatprep.subr.mxu0 0.0
    %1678 = vmatpush1.msra.mxu0 0.0
    %1679 = vmatprep.subr.mxu0 0.0
    %1680 = vmatpush1.msra.mxu0 0.0
    %1681 = vmatprep.subr.mxu0 0.0
    %1682 = vmatpush1.msra.mxu0 0.0
    %1683 = vmatprep.subr.mxu0 0.0
    %1684 = vmatpush1.msra.mxu0 0.0
    %1685 = vmatprep.subr.mxu0 0.0
    %1686 = vmatpush1.msra.mxu0 0.0
    %1687 = vmatprep.subr.mxu0 0.0
    %1688 = vmatpush1.msra.mxu0 0.0
    %1689 = vmatprep.subr.mxu0 0.0
    %1690 = vmatpush1.msra.mxu0 0.0
    %1691 = vmatprep.subr.mxu0 0.0
    %1692 = vmatpush1.msra.mxu0 0.0
    %1693 = vmatprep.subr.mxu0 0.0
    %1694 = vmatpush1.msra.mxu0 0.0
    %1695 = vmatprep.mubr.f32.mxu0 0.0
    %1696 = vmatmul.mubr.f32.gmra.mrb[0].mxu0 %v1629
    %v1697 = vpop.f32.mrb[0].mxu0
    %v1698 = vadd.f32 0.0, %v1697
    %v1699 = vpop.f32.mrb[0].mxu0
    %1700 = vdwg.mxu0
    %v1702 = vrot.slane %v1625, 2
    %1703 = vrot.lane.b32.xlu0 %v1702, 32
    %v1704 = vpop.permute.xlu0 %1703
    %v1705 = vsel %vm72, %v1704, 0
    %1707 = vmatprep.subr.mxu0 0.0
    %1708 = vmatpush1.msra.mxu0 %v159
    %1709 = vmatprep.subr.mxu0 0.0
    %1710 = vmatpush1.msra.mxu0 %v160
    %1711 = vmatprep.subr.mxu0 0.0
    %1712 = vmatpush1.msra.mxu0 %v161
    %1713 = vmatprep.subr.mxu0 0.0
    %1714 = vmatpush1.msra.mxu0 %v162
    %1715 = vmatprep.subr.mxu0 0.0
    %1716 = vmatpush1.msra.mxu0 0.0
    %1717 = vmatprep.subr.mxu0 0.0
    %1718 = vmatpush1.msra.mxu0 0.0
    %1719 = vmatprep.subr.mxu0 0.0
    %1720 = vmatpush1.msra.mxu0 0.0
    %1721 = vmatprep.subr.mxu0 0.0
    %1722 = vmatpush1.msra.mxu0 0.0
    %1723 = vmatprep.subr.mxu0 0.0
    %1724 = vmatpush1.msra.mxu0 0.0
    %1725 = vmatprep.subr.mxu0 0.0
    %1726 = vmatpush1.msra.mxu0 0.0
    %1727 = vmatprep.subr.mxu0 0.0
    %1728 = vmatpush1.msra.mxu0 0.0
    %1729 = vmatprep.subr.mxu0 0.0
    %1730 = vmatpush1.msra.mxu0 0.0
    %1731 = vmatprep.subr.mxu0 0.0
    %1732 = vmatpush1.msra.mxu0 0.0
    %1733 = vmatprep.subr.mxu0 0.0
    %1734 = vmatpush1.msra.mxu0 0.0
    %1735 = vmatprep.subr.mxu0 0.0
    %1736 = vmatpush1.msra.mxu0 0.0
    %1737 = vmatprep.subr.mxu0 0.0
    %1738 = vmatpush1.msra.mxu0 0.0
    %1739 = vmatprep.subr.mxu0 0.0
    %1740 = vmatpush1.msra.mxu0 0.0
    %1741 = vmatprep.subr.mxu0 0.0
    %1742 = vmatpush1.msra.mxu0 0.0
    %1743 = vmatprep.subr.mxu0 0.0
    %1744 = vmatpush1.msra.mxu0 0.0
    %1745 = vmatprep.subr.mxu0 0.0
    %1746 = vmatpush1.msra.mxu0 0.0
    %1747 = vmatprep.subr.mxu0 0.0
    %1748 = vmatpush1.msra.mxu0 0.0
    %1749 = vmatprep.subr.mxu0 0.0
    %1750 = vmatpush1.msra.mxu0 0.0
    %1751 = vmatprep.subr.mxu0 0.0
    %1752 = vmatpush1.msra.mxu0 0.0
    %1753 = vmatprep.subr.mxu0 0.0
    %1754 = vmatpush1.msra.mxu0 0.0
    %1755 = vmatprep.subr.mxu0 0.0
    %1756 = vmatpush1.msra.mxu0 0.0
    %1757 = vmatprep.subr.mxu0 0.0
    %1758 = vmatpush1.msra.mxu0 0.0
    %1759 = vmatprep.subr.mxu0 0.0
    %1760 = vmatpush1.msra.mxu0 0.0
    %1761 = vmatprep.subr.mxu0 0.0
    %1762 = vmatpush1.msra.mxu0 0.0
    %1763 = vmatprep.subr.mxu0 0.0
    %1764 = vmatpush1.msra.mxu0 0.0
    %1765 = vmatprep.subr.mxu0 0.0
    %1766 = vmatpush1.msra.mxu0 0.0
    %1767 = vmatprep.subr.mxu0 0.0
    %1768 = vmatpush1.msra.mxu0 0.0
    %1769 = vmatprep.subr.mxu0 0.0
    %1770 = vmatpush1.msra.mxu0 0.0
    %1771 = vmatprep.mubr.f32.mxu0 0.0
    %1772 = vmatmul.mubr.f32.gmra.mrb[0].mxu0 %v1705
    %v1773 = vpop.f32.mrb[0].mxu0
    %v1774 = vadd.f32 %v1698, %v1773
    %v1775 = vpop.f32.mrb[0].mxu0
    %1776 = vdwg.mxu0
    %v1777 = vadd.f32 %v1774, %v414
    %v1778 = vmul.f32 %v1777, 0.5
    %v1779 = vtanh.pop %v1778
    %v1780 = vmul.f32 %v1779, 0.5
    %v1781 = vadd.f32 %v1780, 0.5
    %v1782 = vtanh.pop %v1777
    %v1783 = vmul.f32 %v1781, %v1520
    %1785 = vrot.lane.b32.xlu0 %v1782, 64
    %v1786 = vpop.permute.xlu0 %1785
    %v1788 = vmul.f32 %v1781, %v1786
    %1790 = vrot.lane.b32.xlu0 %v1788, 32
    %v1791 = vpop.permute.xlu0 %1790
    %v1793 = vadd.f32 %v1783, %v1791
    %v1794 = vtanh.pop %v1793
    %1796 = vrot.lane.b32.xlu0 %v1794, 64
    %v1797 = vpop.permute.xlu0 %1796
    %v1799 = vmul.f32 %v1781, %v1797
    %1800 = vmatprep.subr.mxu0 0.0
    %1801 = vmatpush1.msra.mxu0 %v154
    %1802 = vmatprep.subr.mxu0 0.0
    %1803 = vmatpush1.msra.mxu0 %v155
    %1804 = vmatprep.subr.mxu0 0.0
    %1805 = vmatpush1.msra.mxu0 %v156
    %1806 = vmatprep.subr.mxu0 0.0
    %1807 = vmatpush1.msra.mxu0 %v157
    %1808 = vmatprep.subr.mxu0 0.0
    %1809 = vmatpush1.msra.mxu0 0.0
    %1810 = vmatprep.subr.mxu0 0.0
    %1811 = vmatpush1.msra.mxu0 0.0
    %1812 = vmatprep.subr.mxu0 0.0
    %1813 = vmatpush1.msra.mxu0 0.0
    %1814 = vmatprep.subr.mxu0 0.0
    %1815 = vmatpush1.msra.mxu0 0.0
    %1816 = vmatprep.subr.mxu0 0.0
    %1817 = vmatpush1.msra.mxu0 0.0
    %1818 = vmatprep.subr.mxu0 0.0
    %1819 = vmatpush1.msra.mxu0 0.0
    %1820 = vmatprep.subr.mxu0 0.0
    %1821 = vmatpush1.msra.mxu0 0.0
    %1822 = vmatprep.subr.mxu0 0.0
    %1823 = vmatpush1.msra.mxu0 0.0
    %1824 = vmatprep.subr.mxu0 0.0
    %1825 = vmatpush1.msra.mxu0 0.0
    %1826 = vmatprep.subr.mxu0 0.0
    %1827 = vmatpush1.msra.mxu0 0.0
    %1828 = vmatprep.subr.mxu0 0.0
    %1829 = vmatpush1.msra.mxu0 0.0
    %1830 = vmatprep.subr.mxu0 0.0
    %1831 = vmatpush1.msra.mxu0 0.0
    %1832 = vmatprep.subr.mxu0 0.0
    %1833 = vmatpush1.msra.mxu0 0.0
    %1834 = vmatprep.subr.mxu0 0.0
    %1835 = vmatpush1.msra.mxu0 0.0
    %1836 = vmatprep.subr.mxu0 0.0
    %1837 = vmatpush1.msra.mxu0 0.0
    %1838 = vmatprep.subr.mxu0 0.0
    %1839 = vmatpush1.msra.mxu0 0.0
    %1840 = vmatprep.subr.mxu0 0.0
    %1841 = vmatpush1.msra.mxu0 0.0
    %1842 = vmatprep.subr.mxu0 0.0
    %1843 = vmatpush1.msra.mxu0 0.0
    %1844 = vmatprep.subr.mxu0 0.0
    %1845 = vmatpush1.msra.mxu0 0.0
    %1846 = vmatprep.subr.mxu0 0.0
    %1847 = vmatpush1.msra.mxu0 0.0
    %1848 = vmatprep.subr.mxu0 0.0
    %1849 = vmatpush1.msra.mxu0 0.0
    %1850 = vmatprep.subr.mxu0 0.0
    %1851 = vmatpush1.msra.mxu0 0.0
    %1852 = vmatprep.subr.mxu0 0.0
    %1853 = vmatpush1.msra.mxu0 0.0
    %1854 = vmatprep.subr.mxu0 0.0
    %1855 = vmatpush1.msra.mxu0 0.0
    %1856 = vmatprep.subr.mxu0 0.0
    %1857 = vmatpush1.msra.mxu0 0.0
    %1858 = vmatprep.subr.mxu0 0.0
    %1859 = vmatpush1.msra.mxu0 0.0
    %1860 = vmatprep.subr.mxu0 0.0
    %1861 = vmatpush1.msra.mxu0 0.0
    %1862 = vmatprep.subr.mxu0 0.0
    %1863 = vmatpush1.msra.mxu0 0.0
    %1864 = vmatprep.mubr.f32.mxu0 0.0
    %1865 = vmatmul.mubr.f32.gmra.mrb[0].mxu0 %v1705
    %v1866 = vpop.f32.mrb[0].mxu0
    %v1867 = vadd.f32 0.0, %v1866
    %v1868 = vpop.f32.mrb[0].mxu0
    %1869 = vdwg.mxu0
    %v1871 = vrot.slane %v1867, 4
    %v1873 = vadd.f32 %v151, %v1871
    %v1874 = vmul.f32 %v1873, 0.5
    %v1875 = vtanh.pop %v1874
    %v1876 = vmul.f32 %v1875, 0.5
    %v1877 = vadd.f32 %v1876, 0.5
    %v1878 = vtanh.pop %v1873
    %v1880 = vrot.slane %v1619, 6
    %v1882 = vmul.f32 %v1877, %v1880
    %1884 = vrot.lane.b32.xlu0 %v1878, 64
    %v1885 = vpop.permute.xlu0 %1884
    %v1887 = vmul.f32 %v1877, %v1885
    %1889 = vrot.lane.b32.xlu0 %v1887, 32
    %v1890 = vpop.permute.xlu0 %1889
    %v1892 = vadd.f32 %v1882, %v1890
    %v1893 = vtanh.pop %v1892
    %1895 = vrot.lane.b32.xlu0 %v1893, 64
    %v1896 = vpop.permute.xlu0 %1895
    %v1898 = vmul.f32 %v1877, %v1896
    %1900 = vrot.lane.b32.xlu0 %v1799, 32
    %v1901 = vpop.permute.xlu0 %1900
    %v1902 = vsel %vm72, %v1901, 0
    %1904 = vmatprep.subr.mxu0 0.0
    %1905 = vmatpush1.msra.mxu0 %v163
    %1906 = vmatprep.subr.mxu0 0.0
    %1907 = vmatpush1.msra.mxu0 %v164
    %1908 = vmatprep.subr.mxu0 0.0
    %1909 = vmatpush1.msra.mxu0 %v165
    %1910 = vmatprep.subr.mxu0 0.0
    %1911 = vmatpush1.msra.mxu0 %v166
    %1912 = vmatprep.subr.mxu0 0.0
    %1913 = vmatpush1.msra.mxu0 0.0
    %1914 = vmatprep.subr.mxu0 0.0
    %1915 = vmatpush1.msra.mxu0 0.0
    %1916 = vmatprep.subr.mxu0 0.0
    %1917 = vmatpush1.msra.mxu0 0.0
    %1918 = vmatprep.subr.mxu0 0.0
    %1919 = vmatpush1.msra.mxu0 0.0
    %1920 = vmatprep.subr.mxu0 0.0
    %1921 = vmatpush1.msra.mxu0 0.0
    %1922 = vmatprep.subr.mxu0 0.0
    %1923 = vmatpush1.msra.mxu0 0.0
    %1924 = vmatprep.subr.mxu0 0.0
    %1925 = vmatpush1.msra.mxu0 0.0
    %1926 = vmatprep.subr.mxu0 0.0
    %1927 = vmatpush1.msra.mxu0 0.0
    %1928 = vmatprep.subr.mxu0 0.0
    %1929 = vmatpush1.msra.mxu0 0.0
    %1930 = vmatprep.subr.mxu0 0.0
    %1931 = vmatpush1.msra.mxu0 0.0
    %1932 = vmatprep.subr.mxu0 0.0
    %1933 = vmatpush1.msra.mxu0 0.0
    %1934 = vmatprep.subr.mxu0 0.0
    %1935 = vmatpush1.msra.mxu0 0.0
    %1936 = vmatprep.subr.mxu0 0.0
    %1937 = vmatpush1.msra.mxu0 0.0
    %1938 = vmatprep.subr.mxu0 0.0
    %1939 = vmatpush1.msra.mxu0 0.0
    %1940 = vmatprep.subr.mxu0 0.0
    %1941 = vmatpush1.msra.mxu0 0.0
    %1942 = vmatprep.subr.mxu0 0.0
    %1943 = vmatpush1.msra.mxu0 0.0
    %1944 = vmatprep.subr.mxu0 0.0
    %1945 = vmatpush1.msra.mxu0 0.0
    %1946 = vmatprep.subr.mxu0 0.0
    %1947 = vmatpush1.msra.mxu0 0.0
    %1948 = vmatprep.subr.mxu0 0.0
    %1949 = vmatpush1.msra.mxu0 0.0
    %1950 = vmatprep.subr.mxu0 0.0
    %1951 = vmatpush1.msra.mxu0 0.0
    %1952 = vmatprep.subr.mxu0 0.0
    %1953 = vmatpush1.msra.mxu0 0.0
    %1954 = vmatprep.subr.mxu0 0.0
    %1955 = vmatpush1.msra.mxu0 0.0
    %1956 = vmatprep.subr.mxu0 0.0
    %1957 = vmatpush1.msra.mxu0 0.0
    %1958 = vmatprep.subr.mxu0 0.0
    %1959 = vmatpush1.msra.mxu0 0.0
    %1960 = vmatprep.subr.mxu0 0.0
    %1961 = vmatpush1.msra.mxu0 0.0
    %1962 = vmatprep.subr.mxu0 0.0
    %1963 = vmatpush1.msra.mxu0 0.0
    %1964 = vmatprep.subr.mxu0 0.0
    %1965 = vmatpush1.msra.mxu0 0.0
    %1966 = vmatprep.subr.mxu0 0.0
    %1967 = vmatpush1.msra.mxu0 0.0
    %1968 = vmatprep.mubr.f32.mxu0 0.0
    %1969 = vmatmul.mubr.f32.gmra.mrb[0].mxu0 %v1902
    %v1970 = vpop.f32.mrb[0].mxu0
    %v1971 = vadd.f32 0.0, %v1970
    %v1972 = vpop.f32.mrb[0].mxu0
    %1973 = vdwg.mxu0
    %v1975 = vrot.slane %v1898, 4
    %1976 = vrot.lane.b32.xlu0 %v1975, 32
    %v1977 = vpop.permute.xlu0 %1976
    %v1978 = vsel %vm72, %v1977, 0
    %1980 = vmatprep.subr.mxu0 0.0
    %1981 = vmatpush1.msra.mxu0 %v159
    %1982 = vmatprep.subr.mxu0 0.0
    %1983 = vmatpush1.msra.mxu0 %v160
    %1984 = vmatprep.subr.mxu0 0.0
    %1985 = vmatpush1.msra.mxu0 %v161
    %1986 = vmatprep.subr.mxu0 0.0
    %1987 = vmatpush1.msra.mxu0 %v162
    %1988 = vmatprep.subr.mxu0 0.0
    %1989 = vmatpush1.msra.mxu0 0.0
    %1990 = vmatprep.subr.mxu0 0.0
    %1991 = vmatpush1.msra.mxu0 0.0
    %1992 = vmatprep.subr.mxu0 0.0
    %1993 = vmatpush1.msra.mxu0 0.0
    %1994 = vmatprep.subr.mxu0 0.0
    %1995 = vmatpush1.msra.mxu0 0.0
    %1996 = vmatprep.subr.mxu0 0.0
    %1997 = vmatpush1.msra.mxu0 0.0
    %1998 = vmatprep.subr.mxu0 0.0
    %1999 = vmatpush1.msra.mxu0 0.0
    %2000 = vmatprep.subr.mxu0 0.0
    %2001 = vmatpush1.msra.mxu0 0.0
    %2002 = vmatprep.subr.mxu0 0.0
    %2003 = vmatpush1.msra.mxu0 0.0
    %2004 = vmatprep.subr.mxu0 0.0
    %2005 = vmatpush1.msra.mxu0 0.0
    %2006 = vmatprep.subr.mxu0 0.0
    %2007 = vmatpush1.msra.mxu0 0.0
    %2008 = vmatprep.subr.mxu0 0.0
    %2009 = vmatpush1.msra.mxu0 0.0
    %2010 = vmatprep.subr.mxu0 0.0
    %2011 = vmatpush1.msra.mxu0 0.0
    %2012 = vmatprep.subr.mxu0 0.0
    %2013 = vmatpush1.msra.mxu0 0.0
    %2014 = vmatprep.subr.mxu0 0.0
    %2015 = vmatpush1.msra.mxu0 0.0
    %2016 = vmatprep.subr.mxu0 0.0
    %2017 = vmatpush1.msra.mxu0 0.0
    %2018 = vmatprep.subr.mxu0 0.0
    %2019 = vmatpush1.msra.mxu0 0.0
    %2020 = vmatprep.subr.mxu0 0.0
    %2021 = vmatpush1.msra.mxu0 0.0
    %2022 = vmatprep.subr.mxu0 0.0
    %2023 = vmatpush1.msra.mxu0 0.0
    %2024 = vmatprep.subr.mxu0 0.0
    %2025 = vmatpush1.msra.mxu0 0.0
    %2026 = vmatprep.subr.mxu0 0.0
    %2027 = vmatpush1.msra.mxu0 0.0
    %2028 = vmatprep.subr.mxu0 0.0
    %2029 = vmatpush1.msra.mxu0 0.0
    %2030 = vmatprep.subr.mxu0 0.0
    %2031 = vmatpush1.msra.mxu0 0.0
    %2032 = vmatprep.subr.mxu0 0.0
    %2033 = vmatpush1.msra.mxu0 0.0
    %2034 = vmatprep.subr.mxu0 0.0
    %2035 = vmatpush1.msra.mxu0 0.0
    %2036 = vmatprep.subr.mxu0 0.0
    %2037 = vmatpush1.msra.mxu0 0.0
    %2038 = vmatprep.subr.mxu0 0.0
    %2039 = vmatpush1.msra.mxu0 0.0
    %2040 = vmatprep.subr.mxu0 0.0
    %2041 = vmatpush1.msra.mxu0 0.0
    %2042 = vmatprep.subr.mxu0 0.0
    %2043 = vmatpush1.msra.mxu0 0.0
    %2044 = vmatprep.mubr.f32.mxu0 0.0
    %2045 = vmatmul.mubr.f32.gmra.mrb[0].mxu0 %v1978
    %v2046 = vpop.f32.mrb[0].mxu0
    %v2047 = vadd.f32 %v1971, %v2046
    %v2048 = vpop.f32.mrb[0].mxu0
    %2049 = vdwg.mxu0
    %v2050 = vadd.f32 %v2047, %v414
    %v2051 = vmul.f32 %v2050, 0.5
    %v2052 = vtanh.pop %v2051
    %v2053 = vmul.f32 %v2052, 0.5
    %v2054 = vadd.f32 %v2053, 0.5
    %v2055 = vtanh.pop %v2050
    %v2056 = vmul.f32 %v2054, %v1793
    %2058 = vrot.lane.b32.xlu0 %v2055, 64
    %v2059 = vpop.permute.xlu0 %2058
    %v2061 = vmul.f32 %v2054, %v2059
    %2063 = vrot.lane.b32.xlu0 %v2061, 32
    %v2064 = vpop.permute.xlu0 %2063
    %v2066 = vadd.f32 %v2056, %v2064
    %v2067 = vtanh.pop %v2066
    %2069 = vrot.lane.b32.xlu0 %v2067, 64
    %v2070 = vpop.permute.xlu0 %2069
    %v2072 = vmul.f32 %v2054, %v2070
    %2073 = vmatprep.subr.mxu0 0.0
    %2074 = vmatpush1.msra.mxu0 %v154
    %2075 = vmatprep.subr.mxu0 0.0
    %2076 = vmatpush1.msra.mxu0 %v155
    %2077 = vmatprep.subr.mxu0 0.0
    %2078 = vmatpush1.msra.mxu0 %v156
    %2079 = vmatprep.subr.mxu0 0.0
    %2080 = vmatpush1.msra.mxu0 %v157
    %2081 = vmatprep.subr.mxu0 0.0
    %2082 = vmatpush1.msra.mxu0 0.0
    %2083 = vmatprep.subr.mxu0 0.0
    %2084 = vmatpush1.msra.mxu0 0.0
    %2085 = vmatprep.subr.mxu0 0.0
    %2086 = vmatpush1.msra.mxu0 0.0
    %2087 = vmatprep.subr.mxu0 0.0
    %2088 = vmatpush1.msra.mxu0 0.0
    %2089 = vmatprep.subr.mxu0 0.0
    %2090 = vmatpush1.msra.mxu0 0.0
    %2091 = vmatprep.subr.mxu0 0.0
    %2092 = vmatpush1.msra.mxu0 0.0
    %2093 = vmatprep.subr.mxu0 0.0
    %2094 = vmatpush1.msra.mxu0 0.0
    %2095 = vmatprep.subr.mxu0 0.0
    %2096 = vmatpush1.msra.mxu0 0.0
    %2097 = vmatprep.subr.mxu0 0.0
    %2098 = vmatpush1.msra.mxu0 0.0
    %2099 = vmatprep.subr.mxu0 0.0
    %2100 = vmatpush1.msra.mxu0 0.0
    %2101 = vmatprep.subr.mxu0 0.0
    %2102 = vmatpush1.msra.mxu0 0.0
    %2103 = vmatprep.subr.mxu0 0.0
    %2104 = vmatpush1.msra.mxu0 0.0
    %2105 = vmatprep.subr.mxu0 0.0
    %2106 = vmatpush1.msra.mxu0 0.0
    %2107 = vmatprep.subr.mxu0 0.0
    %2108 = vmatpush1.msra.mxu0 0.0
    %2109 = vmatprep.subr.mxu0 0.0
    %2110 = vmatpush1.msra.mxu0 0.0
    %2111 = vmatprep.subr.mxu0 0.0
    %2112 = vmatpush1.msra.mxu0 0.0
    %2113 = vmatprep.subr.mxu0 0.0
    %2114 = vmatpush1.msra.mxu0 0.0
    %2115 = vmatprep.subr.mxu0 0.0
    %2116 = vmatpush1.msra.mxu0 0.0
    %2117 = vmatprep.subr.mxu0 0.0
    %2118 = vmatpush1.msra.mxu0 0.0
    %2119 = vmatprep.subr.mxu0 0.0
    %2120 = vmatpush1.msra.mxu0 0.0
    %2121 = vmatprep.subr.mxu0 0.0
    %2122 = vmatpush1.msra.mxu0 0.0
    %2123 = vmatprep.subr.mxu0 0.0
    %2124 = vmatpush1.msra.mxu0 0.0
    %2125 = vmatprep.subr.mxu0 0.0
    %2126 = vmatpush1.msra.mxu0 0.0
    %2127 = vmatprep.subr.mxu0 0.0
    %2128 = vmatpush1.msra.mxu0 0.0
    %2129 = vmatprep.subr.mxu0 0.0
    %2130 = vmatpush1.msra.mxu0 0.0
    %2131 = vmatprep.subr.mxu0 0.0
    %2132 = vmatpush1.msra.mxu0 0.0
    %2133 = vmatprep.subr.mxu0 0.0
    %2134 = vmatpush1.msra.mxu0 0.0
    %2135 = vmatprep.subr.mxu0 0.0
    %2136 = vmatpush1.msra.mxu0 0.0
    %2137 = vmatprep.mubr.f32.mxu0 0.0
    %2138 = vmatmul.mubr.f32.gmra.mrb[0].mxu0 %v1978
    %v2139 = vpop.f32.mrb[0].mxu0
    %v2140 = vadd.f32 0.0, %v2139
    %v2141 = vpop.f32.mrb[0].mxu0
    %2142 = vdwg.mxu0
    %v2144 = vrot.slane %v2140, 2
    %v2146 = vadd.f32 %v151, %v2144
    %v2147 = vmul.f32 %v2146, 0.5
    %v2148 = vtanh.pop %v2147
    %v2149 = vmul.f32 %v2148, 0.5
    %v2150 = vadd.f32 %v2149, 0.5
    %v2151 = vtanh.pop %v2146
    %v2153 = vrot.slane %v1892, 6
    %v2155 = vmul.f32 %v2150, %v2153
    %2157 = vrot.lane.b32.xlu0 %v2151, 64
    %v2158 = vpop.permute.xlu0 %2157
    %v2160 = vmul.f32 %v2150, %v2158
    %2162 = vrot.lane.b32.xlu0 %v2160, 32
    %v2163 = vpop.permute.xlu0 %2162
    %v2165 = vadd.f32 %v2155, %v2163
    %v2166 = vtanh.pop %v2165
    %2168 = vrot.lane.b32.xlu0 %v2166, 64
    %v2169 = vpop.permute.xlu0 %2168
    %v2171 = vmul.f32 %v2150, %v2169
    %2173 = vrot.lane.b32.xlu0 %v2072, 32
    %v2174 = vpop.permute.xlu0 %2173
    %v2175 = vsel %vm72, %v2174, 0
    %2177 = vmatprep.subr.mxu0 0.0
    %2178 = vmatpush1.msra.mxu0 %v163
    %2179 = vmatprep.subr.mxu0 0.0
    %2180 = vmatpush1.msra.mxu0 %v164
    %2181 = vmatprep.subr.mxu0 0.0
    %2182 = vmatpush1.msra.mxu0 %v165
    %2183 = vmatprep.subr.mxu0 0.0
    %2184 = vmatpush1.msra.mxu0 %v166
    %2185 = vmatprep.subr.mxu0 0.0
    %2186 = vmatpush1.msra.mxu0 0.0
    %2187 = vmatprep.subr.mxu0 0.0
    %2188 = vmatpush1.msra.mxu0 0.0
    %2189 = vmatprep.subr.mxu0 0.0
    %2190 = vmatpush1.msra.mxu0 0.0
    %2191 = vmatprep.subr.mxu0 0.0
    %2192 = vmatpush1.msra.mxu0 0.0
    %2193 = vmatprep.subr.mxu0 0.0
    %2194 = vmatpush1.msra.mxu0 0.0
    %2195 = vmatprep.subr.mxu0 0.0
    %2196 = vmatpush1.msra.mxu0 0.0
    %2197 = vmatprep.subr.mxu0 0.0
    %2198 = vmatpush1.msra.mxu0 0.0
    %2199 = vmatprep.subr.mxu0 0.0
    %2200 = vmatpush1.msra.mxu0 0.0
    %2201 = vmatprep.subr.mxu0 0.0
    %2202 = vmatpush1.msra.mxu0 0.0
    %2203 = vmatprep.subr.mxu0 0.0
    %2204 = vmatpush1.msra.mxu0 0.0
    %2205 = vmatprep.subr.mxu0 0.0
    %2206 = vmatpush1.msra.mxu0 0.0
    %2207 = vmatprep.subr.mxu0 0.0
    %2208 = vmatpush1.msra.mxu0 0.0
    %2209 = vmatprep.subr.mxu0 0.0
    %2210 = vmatpush1.msra.mxu0 0.0
    %2211 = vmatprep.subr.mxu0 0.0
    %2212 = vmatpush1.msra.mxu0 0.0
    %2213 = vmatprep.subr.mxu0 0.0
    %2214 = vmatpush1.msra.mxu0 0.0
    %2215 = vmatprep.subr.mxu0 0.0
    %2216 = vmatpush1.msra.mxu0 0.0
    %2217 = vmatprep.subr.mxu0 0.0
    %2218 = vmatpush1.msra.mxu0 0.0
    %2219 = vmatprep.subr.mxu0 0.0
    %2220 = vmatpush1.msra.mxu0 0.0
    %2221 = vmatprep.subr.mxu0 0.0
    %2222 = vmatpush1.msra.mxu0 0.0
    %2223 = vmatprep.subr.mxu0 0.0
    %2224 = vmatpush1.msra.mxu0 0.0
    %2225 = vmatprep.subr.mxu0 0.0
    %2226 = vmatpush1.msra.mxu0 0.0
    %2227 = vmatprep.subr.mxu0 0.0
    %2228 = vmatpush1.msra.mxu0 0.0
    %2229 = vmatprep.subr.mxu0 0.0
    %2230 = vmatpush1.msra.mxu0 0.0
    %2231 = vmatprep.subr.mxu0 0.0
    %2232 = vmatpush1.msra.mxu0 0.0
    %2233 = vmatprep.subr.mxu0 0.0
    %2234 = vmatpush1.msra.mxu0 0.0
    %2235 = vmatprep.subr.mxu0 0.0
    %2236 = vmatpush1.msra.mxu0 0.0
    %2237 = vmatprep.subr.mxu0 0.0
    %2238 = vmatpush1.msra.mxu0 0.0
    %2239 = vmatprep.subr.mxu0 0.0
    %2240 = vmatpush1.msra.mxu0 0.0
    %2241 = vmatprep.mubr.f32.mxu0 0.0
    %2242 = vmatmul.mubr.f32.gmra.mrb[0].mxu0 %v2175
    %v2243 = vpop.f32.mrb[0].mxu0
    %v2244 = vadd.f32 0.0, %v2243
    %v2245 = vpop.f32.mrb[0].mxu0
    %2246 = vdwg.mxu0
    %v2248 = vrot.slane %v2171, 6
    %2249 = vrot.lane.b32.xlu0 %v2248, 32
    %v2250 = vpop.permute.xlu0 %2249
    %v2251 = vsel %vm72, %v2250, 0
    %2253 = vmatprep.subr.mxu0 0.0
    %2254 = vmatpush1.msra.mxu0 %v159
    %2255 = vmatprep.subr.mxu0 0.0
    %2256 = vmatpush1.msra.mxu0 %v160
    %2257 = vmatprep.subr.mxu0 0.0
    %2258 = vmatpush1.msra.mxu0 %v161
    %2259 = vmatprep.subr.mxu0 0.0
    %2260 = vmatpush1.msra.mxu0 %v162
    %2261 = vmatprep.subr.mxu0 0.0
    %2262 = vmatpush1.msra.mxu0 0.0
    %2263 = vmatprep.subr.mxu0 0.0
    %2264 = vmatpush1.msra.mxu0 0.0
    %2265 = vmatprep.subr.mxu0 0.0
    %2266 = vmatpush1.msra.mxu0 0.0
    %2267 = vmatprep.subr.mxu0 0.0
    %2268 = vmatpush1.msra.mxu0 0.0
    %2269 = vmatprep.subr.mxu0 0.0
    %2270 = vmatpush1.msra.mxu0 0.0
    %2271 = vmatprep.subr.mxu0 0.0
    %2272 = vmatpush1.msra.mxu0 0.0
    %2273 = vmatprep.subr.mxu0 0.0
    %2274 = vmatpush1.msra.mxu0 0.0
    %2275 = vmatprep.subr.mxu0 0.0
    %2276 = vmatpush1.msra.mxu0 0.0
    %2277 = vmatprep.subr.mxu0 0.0
    %2278 = vmatpush1.msra.mxu0 0.0
    %2279 = vmatprep.subr.mxu0 0.0
    %2280 = vmatpush1.msra.mxu0 0.0
    %2281 = vmatprep.subr.mxu0 0.0
    %2282 = vmatpush1.msra.mxu0 0.0
    %2283 = vmatprep.subr.mxu0 0.0
    %2284 = vmatpush1.msra.mxu0 0.0
    %2285 = vmatprep.subr.mxu0 0.0
    %2286 = vmatpush1.msra.mxu0 0.0
    %2287 = vmatprep.subr.mxu0 0.0
    %2288 = vmatpush1.msra.mxu0 0.0
    %2289 = vmatprep.subr.mxu0 0.0
    %2290 = vmatpush1.msra.mxu0 0.0
    %2291 = vmatprep.subr.mxu0 0.0
    %2292 = vmatpush1.msra.mxu0 0.0
    %2293 = vmatprep.subr.mxu0 0.0
    %2294 = vmatpush1.msra.mxu0 0.0
    %2295 = vmatprep.subr.mxu0 0.0
    %2296 = vmatpush1.msra.mxu0 0.0
    %2297 = vmatprep.subr.mxu0 0.0
    %2298 = vmatpush1.msra.mxu0 0.0
    %2299 = vmatprep.subr.mxu0 0.0
    %2300 = vmatpush1.msra.mxu0 0.0
    %2301 = vmatprep.subr.mxu0 0.0
    %2302 = vmatpush1.msra.mxu0 0.0
    %2303 = vmatprep.subr.mxu0 0.0
    %2304 = vmatpush1.msra.mxu0 0.0
    %2305 = vmatprep.subr.mxu0 0.0
    %2306 = vmatpush1.msra.mxu0 0.0
    %2307 = vmatprep.subr.mxu0 0.0
    %2308 = vmatpush1.msra.mxu0 0.0
    %2309 = vmatprep.subr.mxu0 0.0
    %2310 = vmatpush1.msra.mxu0 0.0
    %2311 = vmatprep.subr.mxu0 0.0
    %2312 = vmatpush1.msra.mxu0 0.0
    %2313 = vmatprep.subr.mxu0 0.0
    %2314 = vmatpush1.msra.mxu0 0.0
    %2315 = vmatprep.subr.mxu0 0.0
    %2316 = vmatpush1.msra.mxu0 0.0
    %2317 = vmatprep.mubr.f32.mxu0 0.0
    %2318 = vmatmul.mubr.f32.gmra.mrb[0].mxu0 %v2251
    %v2319 = vpop.f32.mrb[0].mxu0
    %v2320 = vadd.f32 %v2244, %v2319
    %v2321 = vpop.f32.mrb[0].mxu0
    %2322 = vdwg.mxu0
    %v2323 = vadd.f32 %v2320, %v414
    %v2324 = vmul.f32 %v2323, 0.5
    %v2325 = vtanh.pop %v2324
    %v2326 = vmul.f32 %v2325, 0.5
    %v2327 = vadd.f32 %v2326, 0.5
    %v2328 = vtanh.pop %v2323
    %v2329 = vmul.f32 %v2327, %v2066
    %2331 = vrot.lane.b32.xlu0 %v2328, 64
    %v2332 = vpop.permute.xlu0 %2331
    %v2334 = vmul.f32 %v2327, %v2332
    %2336 = vrot.lane.b32.xlu0 %v2334, 32
    %v2337 = vpop.permute.xlu0 %2336
    %v2339 = vadd.f32 %v2329, %v2337
    %v2340 = vtanh.pop %v2339
    %2342 = vrot.lane.b32.xlu0 %v2340, 64
    %v2343 = vpop.permute.xlu0 %2342
    %v2345 = vmul.f32 %v2327, %v2343
    %v2346 = vrot.slane %v711, 6
    %v2348 = vrot.slane %v984, 4
    %v2350 = vrot.slane %v1257, 2
    %v2352 = vrot.slane %v1799, 6
    %v2354 = vrot.slane %v2072, 4
    %v2357 = vrot.slane %v2345, 2
    %vm2359 = vcmask 1041408
    %v2360 = vsel %vm2359, %v438, %v2346
    %vm2361 = vcmask 1043456
    %v2362 = vsel %vm2361, %v2360, %v2348
    %vm2363 = vcmask 1045504
    %v2364 = vsel %vm2363, %v2362, %v2350
    %v2365 = vsel %vm2359, %v1526, %v2352
    %v2366 = vsel %vm2361, %v2365, %v2354
    %v2367 = vsel %vm2363, %v2366, %v2357
    %v2368 = vld [vmem:[%s3] sm:$0xff]
    %v2369 = vld [vmem:[%s3 + $0x8] sm:$0xff]
    %v2370 = vld [vmem:[%s3 + $0x10] sm:$0xff]
    %v2371 = vld [vmem:[%s3 + $0x18] sm:$0xff]
    %v2372 = vld [vmem:[%s5] sm:$0x1]
    %v2374 = vlaneseq
    %v2375 = vshrl.u32 %v2374, 7
    %v2376 = vsub.s32 0, %v2375
    %v2377 = vrot.slane %v2372, %v2376
    %2380 = vrot.lane.b32.xlu0 %v2339, 96
    %v2381 = vpop.permute.xlu0 %2380
    %v2382 = vsel %vm72, %v2381, 0
    %2384 = vmatprep.subr.mxu0 0.0
    %2385 = vmatpush1.msra.mxu0 %v2368
    %2386 = vmatprep.subr.mxu0 0.0
    %2387 = vmatpush1.msra.mxu0 %v2369
    %2388 = vmatprep.subr.mxu0 0.0
    %2389 = vmatpush1.msra.mxu0 %v2370
    %2390 = vmatprep.subr.mxu0 0.0
    %2391 = vmatpush1.msra.mxu0 %v2371
    %2392 = vmatprep.subr.mxu0 0.0
    %2393 = vmatpush1.msra.mxu0 0.0
    %2394 = vmatprep.subr.mxu0 0.0
    %2395 = vmatpush1.msra.mxu0 0.0
    %2396 = vmatprep.subr.mxu0 0.0
    %2397 = vmatpush1.msra.mxu0 0.0
    %2398 = vmatprep.subr.mxu0 0.0
    %2399 = vmatpush1.msra.mxu0 0.0
    %2400 = vmatprep.subr.mxu0 0.0
    %2401 = vmatpush1.msra.mxu0 0.0
    %2402 = vmatprep.subr.mxu0 0.0
    %2403 = vmatpush1.msra.mxu0 0.0
    %2404 = vmatprep.subr.mxu0 0.0
    %2405 = vmatpush1.msra.mxu0 0.0
    %2406 = vmatprep.subr.mxu0 0.0
    %2407 = vmatpush1.msra.mxu0 0.0
    %2408 = vmatprep.subr.mxu0 0.0
    %2409 = vmatpush1.msra.mxu0 0.0
    %2410 = vmatprep.subr.mxu0 0.0
    %2411 = vmatpush1.msra.mxu0 0.0
    %2412 = vmatprep.subr.mxu0 0.0
    %2413 = vmatpush1.msra.mxu0 0.0
    %2414 = vmatprep.subr.mxu0 0.0
    %2415 = vmatpush1.msra.mxu0 0.0
    %2416 = vmatprep.subr.mxu0 0.0
    %2417 = vmatpush1.msra.mxu0 0.0
    %2418 = vmatprep.subr.mxu0 0.0
    %2419 = vmatpush1.msra.mxu0 0.0
    %2420 = vmatprep.subr.mxu0 0.0
    %2421 = vmatpush1.msra.mxu0 0.0
    %2422 = vmatprep.subr.mxu0 0.0
    %2423 = vmatpush1.msra.mxu0 0.0
    %2424 = vmatprep.subr.mxu0 0.0
    %2425 = vmatpush1.msra.mxu0 0.0
    %2426 = vmatprep.subr.mxu0 0.0
    %2427 = vmatpush1.msra.mxu0 0.0
    %2428 = vmatprep.subr.mxu0 0.0
    %2429 = vmatpush1.msra.mxu0 0.0
    %2430 = vmatprep.subr.mxu0 0.0
    %2431 = vmatpush1.msra.mxu0 0.0
    %2432 = vmatprep.subr.mxu0 0.0
    %2433 = vmatpush1.msra.mxu0 0.0
    %2434 = vmatprep.subr.mxu0 0.0
    %2435 = vmatpush1.msra.mxu0 0.0
    %2436 = vmatprep.subr.mxu0 0.0
    %2437 = vmatpush1.msra.mxu0 0.0
    %2438 = vmatprep.subr.mxu0 0.0
    %2439 = vmatpush1.msra.mxu0 0.0
    %2440 = vmatprep.subr.mxu0 0.0
    %2441 = vmatpush1.msra.mxu0 0.0
    %2442 = vmatprep.subr.mxu0 0.0
    %2443 = vmatpush1.msra.mxu0 0.0
    %2444 = vmatprep.subr.mxu0 0.0
    %2445 = vmatpush1.msra.mxu0 0.0
    %2446 = vmatprep.subr.mxu0 0.0
    %2447 = vmatpush1.msra.mxu0 0.0
    %2448 = vmatprep.mubr.f32.mxu0 0.0
    %2449 = vmatmul.mubr.f32.gmra.mrb[0].mxu0 %v2382
    %v2450 = vpop.f32.mrb[0].mxu0
    %v2451 = vadd.f32 %v2377, %v2450
    %v2452 = vpop.f32.mrb[0].mxu0
    %2453 = vdwg.mxu0
    %v2455 = vrot.slane %v2451, 6
    %v2457 = vrot.slane %v2451, 4
    %v2459 = vrot.slane %v2451, 2
    %v2461 = vsel %vm2359, %v2451, %v2455
    %v2462 = vsel %vm2361, %v2461, %v2457
    %v2463 = vsel %vm2363, %v2462, %v2459
    %v2464 = vld [vmem:[%s4] sm:$0xff]
    %v2465 = vld [vmem:[%s4 + $0x8] sm:$0xff]
    %v2466 = vld [vmem:[%s4 + $0x10] sm:$0xff]
    %v2467 = vld [vmem:[%s4 + $0x18] sm:$0xff]
    %2470 = vrot.lane.b32.xlu0 %v2364, 32
    %v2471 = vpop.permute.xlu0 %2470
    %2472 = vrot.lane.b32.xlu0 %v2367, 32
    %v2473 = vpop.permute.xlu0 %2472
    %v2474 = vsel %vm72, %v2471, 0
    %v2476 = vsel %vm72, %v2473, 0
    %2478 = vmatprep.subr.mxu0 0.0
    %2479 = vmatpush1.msra.mxu0 %v2464
    %2480 = vmatprep.subr.mxu0 0.0
    %2481 = vmatpush1.msra.mxu0 %v2465
    %2482 = vmatprep.subr.mxu0 0.0
    %2483 = vmatpush1.msra.mxu0 %v2466
    %2484 = vmatprep.subr.mxu0 0.0
    %2485 = vmatpush1.msra.mxu0 %v2467
    %2486 = vmatprep.subr.mxu0 0.0
    %2487 = vmatpush1.msra.mxu0 0.0
    %2488 = vmatprep.subr.mxu0 0.0
    %2489 = vmatpush1.msra.mxu0 0.0
    %2490 = vmatprep.subr.mxu0 0.0
    %2491 = vmatpush1.msra.mxu0 0.0
    %2492 = vmatprep.subr.mxu0 0.0
    %2493 = vmatpush1.msra.mxu0 0.0
    %2494 = vmatprep.subr.mxu0 0.0
    %2495 = vmatpush1.msra.mxu0 0.0
    %2496 = vmatprep.subr.mxu0 0.0
    %2497 = vmatpush1.msra.mxu0 0.0
    %2498 = vmatprep.subr.mxu0 0.0
    %2499 = vmatpush1.msra.mxu0 0.0
    %2500 = vmatprep.subr.mxu0 0.0
    %2501 = vmatpush1.msra.mxu0 0.0
    %2502 = vmatprep.subr.mxu0 0.0
    %2503 = vmatpush1.msra.mxu0 0.0
    %2504 = vmatprep.subr.mxu0 0.0
    %2505 = vmatpush1.msra.mxu0 0.0
    %2506 = vmatprep.subr.mxu0 0.0
    %2507 = vmatpush1.msra.mxu0 0.0
    %2508 = vmatprep.subr.mxu0 0.0
    %2509 = vmatpush1.msra.mxu0 0.0
    %2510 = vmatprep.subr.mxu0 0.0
    %2511 = vmatpush1.msra.mxu0 0.0
    %2512 = vmatprep.subr.mxu0 0.0
    %2513 = vmatpush1.msra.mxu0 0.0
    %2514 = vmatprep.subr.mxu0 0.0
    %2515 = vmatpush1.msra.mxu0 0.0
    %2516 = vmatprep.subr.mxu0 0.0
    %2517 = vmatpush1.msra.mxu0 0.0
    %2518 = vmatprep.subr.mxu0 0.0
    %2519 = vmatpush1.msra.mxu0 0.0
    %2520 = vmatprep.subr.mxu0 0.0
    %2521 = vmatpush1.msra.mxu0 0.0
    %2522 = vmatprep.subr.mxu0 0.0
    %2523 = vmatpush1.msra.mxu0 0.0
    %2524 = vmatprep.subr.mxu0 0.0
    %2525 = vmatpush1.msra.mxu0 0.0
    %2526 = vmatprep.subr.mxu0 0.0
    %2527 = vmatpush1.msra.mxu0 0.0
    %2528 = vmatprep.subr.mxu0 0.0
    %2529 = vmatpush1.msra.mxu0 0.0
    %2530 = vmatprep.subr.mxu0 0.0
    %2531 = vmatpush1.msra.mxu0 0.0
    %2532 = vmatprep.subr.mxu0 0.0
    %2533 = vmatpush1.msra.mxu0 0.0
    %2534 = vmatprep.subr.mxu0 0.0
    %2535 = vmatpush1.msra.mxu0 0.0
    %2536 = vmatprep.subr.mxu0 0.0
    %2537 = vmatpush1.msra.mxu0 0.0
    %2538 = vmatprep.subr.mxu0 0.0
    %2539 = vmatpush1.msra.mxu0 0.0
    %2540 = vmatprep.subr.mxu0 0.0
    %2541 = vmatpush1.msra.mxu0 0.0
    %2542 = vmatprep.mubr.f32.mxu0 0.0
    %2543 = vmatmul.mubr.f32.gmra.mrb[0].mxu0 %v2474
    %v2544 = vpop.f32.mrb[0].mxu0
    %v2545 = vadd.f32 %v2463, %v2544
    %v2546 = vpop.f32.mrb[0].mxu0
    %2547 = vmatprep.mubr.f32.mxu0 0.0
    %2548 = vmatmul.mubr.f32.gmra.mrb[0].mxu0 %v2476
    %v2549 = vpop.f32.mrb[0].mxu0
    %v2550 = vadd.f32 %v2463, %v2549
    %v2551 = vpop.f32.mrb[0].mxu0
    %2552 = vdwg.mxu0
    %v2553 = vtanh.pop %v2545
    %v2554 = vtanh.pop %v2550
    %v2555 = vld [vmem:[%s6] sm:$0xff]
    %v2556 = vld [vmem:[%s6 + $0x8] sm:$0xff]
    %v2557 = vld [vmem:[%s6 + $0x10] sm:$0xff]
    %v2558 = vld [vmem:[%s6 + $0x18] sm:$0xff]
    %v2559 = vld [vmem:[#allocation2] sm:$0x1]
    %v2561 = vlaneseq
    %v2562 = vshrl.u32 %v2561, 7
    %v2563 = vsub.s32 0, %v2562
    %v2564 = vrot.slane %v2559, %v2563
    %v2567 = vsel %vm72, %v2553, 0
    %v2570 = vsel %vm72, %v2554, 0
    %2572 = vmatprep.subr.mxu0 0.0
    %2573 = vmatpush1.msra.mxu0 %v2555
    %2574 = vmatprep.subr.mxu0 0.0
    %2575 = vmatpush1.msra.mxu0 %v2556
    %2576 = vmatprep.subr.mxu0 0.0
    %2577 = vmatpush1.msra.mxu0 %v2557
    %2578 = vmatprep.subr.mxu0 0.0
    %2579 = vmatpush1.msra.mxu0 %v2558
    %2580 = vmatprep.subr.mxu0 0.0
    %2581 = vmatpush1.msra.mxu0 0.0
    %2582 = vmatprep.subr.mxu0 0.0
    %2583 = vmatpush1.msra.mxu0 0.0
    %2584 = vmatprep.subr.mxu0 0.0
    %2585 = vmatpush1.msra.mxu0 0.0
    %2586 = vmatprep.subr.mxu0 0.0
    %2587 = vmatpush1.msra.mxu0 0.0
    %2588 = vmatprep.subr.mxu0 0.0
    %2589 = vmatpush1.msra.mxu0 0.0
    %2590 = vmatprep.subr.mxu0 0.0
    %2591 = vmatpush1.msra.mxu0 0.0
    %2592 = vmatprep.subr.mxu0 0.0
    %2593 = vmatpush1.msra.mxu0 0.0
    %2594 = vmatprep.subr.mxu0 0.0
    %2595 = vmatpush1.msra.mxu0 0.0
    %2596 = vmatprep.subr.mxu0 0.0
    %2597 = vmatpush1.msra.mxu0 0.0
    %2598 = vmatprep.subr.mxu0 0.0
    %2599 = vmatpush1.msra.mxu0 0.0
    %2600 = vmatprep.subr.mxu0 0.0
    %2601 = vmatpush1.msra.mxu0 0.0
    %2602 = vmatprep.subr.mxu0 0.0
    %2603 = vmatpush1.msra.mxu0 0.0
    %2604 = vmatprep.subr.mxu0 0.0
    %2605 = vmatpush1.msra.mxu0 0.0
    %2606 = vmatprep.subr.mxu0 0.0
    %2607 = vmatpush1.msra.mxu0 0.0
    %2608 = vmatprep.subr.mxu0 0.0
    %2609 = vmatpush1.msra.mxu0 0.0
    %2610 = vmatprep.subr.mxu0 0.0
    %2611 = vmatpush1.msra.mxu0 0.0
    %2612 = vmatprep.subr.mxu0 0.0
    %2613 = vmatpush1.msra.mxu0 0.0
    %2614 = vmatprep.subr.mxu0 0.0
    %2615 = vmatpush1.msra.mxu0 0.0
    %2616 = vmatprep.subr.mxu0 0.0
    %2617 = vmatpush1.msra.mxu0 0.0
    %2618 = vmatprep.subr.mxu0 0.0
    %2619 = vmatpush1.msra.mxu0 0.0
    %2620 = vmatprep.subr.mxu0 0.0
    %2621 = vmatpush1.msra.mxu0 0.0
    %2622 = vmatprep.subr.mxu0 0.0
    %2623 = vmatpush1.msra.mxu0 0.0
    %2624 = vmatprep.subr.mxu0 0.0
    %2625 = vmatpush1.msra.mxu0 0.0
    %2626 = vmatprep.subr.mxu0 0.0
    %2627 = vmatpush1.msra.mxu0 0.0
    %2628 = vmatprep.subr.mxu0 0.0
    %2629 = vmatpush1.msra.mxu0 0.0
    %2630 = vmatprep.subr.mxu0 0.0
    %2631 = vmatpush1.msra.mxu0 0.0
    %2632 = vmatprep.subr.mxu0 0.0
    %2633 = vmatpush1.msra.mxu0 0.0
    %2634 = vmatprep.subr.mxu0 0.0
    %2635 = vmatpush1.msra.mxu0 0.0
    %2636 = vmatprep.mubr.f32.mxu0 0.0
    %2637 = vmatmul.mubr.f32.gmra.mrb[0].mxu0 %v2567
    %v2638 = vpop.f32.mrb[0].mxu0
    %v2639 = vadd.f32 %v2564, %v2638
    %v2640 = vpop.f32.mrb[0].mxu0
    %2641 = vmatprep.mubr.f32.mxu0 0.0
    %2642 = vmatmul.mubr.f32.gmra.mrb[0].mxu0 %v2570
    %v2643 = vpop.f32.mrb[0].mxu0
    %v2644 = vadd.f32 %v2564, %v2643
    %v2645 = vpop.f32.mrb[0].mxu0
    %2646 = vdwg.mxu0
    %v2648 = vrot.slane %v2639, 2
    %2649 = vrot.lane.b32.xlu0 %v2648, 1
    %v2650 = vpop.permute.xlu0 %2649
    %v2652 = vrot.slane %v2639, 4
    %2653 = vrot.lane.b32.xlu0 %v2652, 2
    %v2654 = vpop.permute.xlu0 %2653
    %v2656 = vrot.slane %v2639, 6
    %2657 = vrot.lane.b32.xlu0 %v2656, 3
    %v2658 = vpop.permute.xlu0 %2657
    %2661 = vrot.lane.b32.xlu0 %v2644, 4
    %v2662 = vpop.permute.xlu0 %2661
    %v2664 = vrot.slane %v2644, 2
    %2665 = vrot.lane.b32.xlu0 %v2664, 5
    %v2666 = vpop.permute.xlu0 %2665
    %v2668 = vrot.slane %v2644, 4
    %2669 = vrot.lane.b32.xlu0 %v2668, 6
    %v2670 = vpop.permute.xlu0 %2669
    %v2672 = vrot.slane %v2644, 6
    %2673 = vrot.lane.b32.xlu0 %v2672, 7
    %v2674 = vpop.permute.xlu0 %2673
    %vm2676 = vcmask 7168
    %v2677 = vsel %vm2676, %v2639, %v2650
    %vm2678 = vcmask 15360
    %v2679 = vsel %vm2678, %v2677, %v2654
    %vm2680 = vcmask 23552
    %v2681 = vsel %vm2680, %v2679, %v2658
    %vm2682 = vcmask 31744
    %v2683 = vsel %vm2682, %v2681, %v2662
    %vm2684 = vcmask 39936
    %v2685 = vsel %vm2684, %v2683, %v2666
    %vm2686 = vcmask 48128
    %v2687 = vsel %vm2686, %v2685, %v2670
    %vm2688 = vcmask 56320
    %v2689 = vsel %vm2688, %v2687, %v2674
    %vm2690 = vcmask 58368
    %v2691 = vsel %vm2690, %v2689, -inf
    %2692 = vmax.xlane.f32.xlu0 %v2691
    %v2693 = vpop.xlane.xlu0 %2692
    %v2694 = vsub.f32 %v2689, %v2693
    %v2695 = vmul.f32 %v2694, 1.442695
    %v2696 = vpow.pop %v2695
    %v2697 = vsel %vm2690, %v2696, 0.0
    %2698 = vadd.xlane.f32.xlu0 %v2697
    %v2699 = vpop.xlane.xlu0 %2698
    %v2700 = vrcp.pop %v2699
    %v2701 = vmul.f32 %v2696, %v2700
    %2702 = vst.msk [vmem:[#allocation7] sm:$0x3] %vm2690, %v2701
    %2704 = vset.pattern.permute.xlu0 0
    %2705 = vperm.xlu0 %2704, %v2701
    %v2706 = vpop.permute.xlu0 %2705
    %v2708 = vmul.f32 %v2706, %v438
    %v2709 = vadd.f32 %v2708, 0.0
    %2710 = vset.pattern.permute.xlu0 1
    %2711 = vperm.xlu0 %2710, %v2701
    %v2712 = vpop.permute.xlu0 %2711
    %v2714 = vmul.f32 %v2712, %v711
    %v2715 = vadd.f32 %v2709, %v2714
    %2716 = vset.pattern.permute.xlu0 2
    %2717 = vperm.xlu0 %2716, %v2701
    %v2718 = vpop.permute.xlu0 %2717
    %v2720 = vmul.f32 %v2718, %v984
    %v2721 = vadd.f32 %v2715, %v2720
    %2722 = vset.pattern.permute.xlu0 3
    %2723 = vperm.xlu0 %2722, %v2701
    %v2724 = vpop.permute.xlu0 %2723
    %v2726 = vmul.f32 %v2724, %v1257
    %v2727 = vadd.f32 %v2721, %v2726
    %2728 = vset.pattern.permute.xlu0 4
    %2729 = vperm.xlu0 %2728, %v2701
    %v2730 = vpop.permute.xlu0 %2729
    %v2732 = vmul.f32 %v2730, %v1526
    %v2733 = vadd.f32 %v2727, %v2732
    %2734 = vset.pattern.permute.xlu0 5
    %2735 = vperm.xlu0 %2734, %v2701
    %v2736 = vpop.permute.xlu0 %2735
    %v2738 = vmul.f32 %v2736, %v1799
    %v2739 = vadd.f32 %v2733, %v2738
    %2740 = vset.pattern.permute.xlu0 6
    %2741 = vperm.xlu0 %2740, %v2701
    %v2742 = vpop.permute.xlu0 %2741
    %v2744 = vmul.f32 %v2742, %v2072
    %v2745 = vadd.f32 %v2739, %v2744
    %2746 = vset.pattern.permute.xlu0 7
    %2747 = vperm.xlu0 %2746, %v2701
    %v2748 = vpop.permute.xlu0 %2747
    %v2750 = vmul.f32 %v2748, %v2345
    %v2751 = vadd.f32 %v2745, %v2750
    %v2752 = vld [vmem:[%s8] sm:$0xff]
    %v2753 = vld [vmem:[%s8 + $0x8] sm:$0xff]
    %v2754 = vld [vmem:[%s8 + $0x10] sm:$0xff]
    %v2755 = vld [vmem:[%s8 + $0x18] sm:$0xff]
    %v2756 = vld [vmem:[%s9] sm:$0xff]
    %v2757 = vld [vmem:[%s9 + $0x8] sm:$0xff]
    %v2758 = vld [vmem:[%s9 + $0x10] sm:$0xff]
    %v2759 = vld [vmem:[%s9 + $0x18] sm:$0xff]
    %2760 = vmatprep.subr.mxu0 0.0
    %2761 = vmatpush1.msra.mxu0 %v2756
    %2762 = vmatprep.subr.mxu0 0.0
    %2763 = vmatpush1.msra.mxu0 %v2757
    %2764 = vmatprep.subr.mxu0 0.0
    %2765 = vmatpush1.msra.mxu0 %v2758
    %2766 = vmatprep.subr.mxu0 0.0
    %2767 = vmatpush1.msra.mxu0 %v2759
    %2768 = vmatprep.subr.mxu0 0.0
    %2769 = vmatpush1.msra.mxu0 0.0
    %2770 = vmatprep.subr.mxu0 0.0
    %2771 = vmatpush1.msra.mxu0 0.0
    %2772 = vmatprep.subr.mxu0 0.0
    %2773 = vmatpush1.msra.mxu0 0.0
    %2774 = vmatprep.subr.mxu0 0.0
    %2775 = vmatpush1.msra.mxu0 0.0
    %2776 = vmatprep.subr.mxu0 0.0
    %2777 = vmatpush1.msra.mxu0 0.0
    %2778 = vmatprep.subr.mxu0 0.0
    %2779 = vmatpush1.msra.mxu0 0.0
    %2780 = vmatprep.subr.mxu0 0.0
    %2781 = vmatpush1.msra.mxu0 0.0
    %2782 = vmatprep.subr.mxu0 0.0
    %2783 = vmatpush1.msra.mxu0 0.0
    %2784 = vmatprep.subr.mxu0 0.0
    %2785 = vmatpush1.msra.mxu0 0.0
    %2786 = vmatprep.subr.mxu0 0.0
    %2787 = vmatpush1.msra.mxu0 0.0
    %2788 = vmatprep.subr.mxu0 0.0
    %2789 = vmatpush1.msra.mxu0 0.0
    %2790 = vmatprep.subr.mxu0 0.0
    %2791 = vmatpush1.msra.mxu0 0.0
    %2792 = vmatprep.subr.mxu0 0.0
    %2793 = vmatpush1.msra.mxu0 0.0
    %2794 = vmatprep.subr.mxu0 0.0
    %2795 = vmatpush1.msra.mxu0 0.0
    %2796 = vmatprep.subr.mxu0 0.0
    %2797 = vmatpush1.msra.mxu0 0.0
    %2798 = vmatprep.subr.mxu0 0.0
    %2799 = vmatpush1.msra.mxu0 0.0
    %2800 = vmatprep.subr.mxu0 0.0
    %2801 = vmatpush1.msra.mxu0 0.0
    %2802 = vmatprep.subr.mxu0 0.0
    %2803 = vmatpush1.msra.mxu0 0.0
    %2804 = vmatprep.subr.mxu0 0.0
    %2805 = vmatpush1.msra.mxu0 0.0
    %2806 = vmatprep.subr.mxu0 0.0
    %2807 = vmatpush1.msra.mxu0 0.0
    %2808 = vmatprep.subr.mxu0 0.0
    %2809 = vmatpush1.msra.mxu0 0.0
    %2810 = vmatprep.subr.mxu0 0.0
    %2811 = vmatpush1.msra.mxu0 0.0
    %2812 = vmatprep.subr.mxu0 0.0
    %2813 = vmatpush1.msra.mxu0 0.0
    %2814 = vmatprep.subr.mxu0 0.0
    %2815 = vmatpush1.msra.mxu0 0.0
    %2816 = vmatprep.subr.mxu0 0.0
    %2817 = vmatpush1.msra.mxu0 0.0
    %2818 = vmatprep.subr.mxu0 0.0
    %2819 = vmatpush1.msra.mxu0 0.0
    %2820 = vmatprep.subr.mxu0 0.0
    %2821 = vmatpush1.msra.mxu0 0.0
    %2822 = vmatprep.subr.mxu0 0.0
    %2823 = vmatpush1.msra.mxu0 0.0
    %2824 = vmatprep.mubr.f32.mxu0 0.0
    %2825 = vmatmul.mubr.f32.gmra.mrb[0].mxu0 %v2382
    %v2826 = vpop.f32.mrb[0].mxu0
    %v2827 = vadd.f32 0.0, %v2826
    %v2828 = vpop.f32.mrb[0].mxu0
    %2829 = vdwg.mxu0
    %2831 = vrot.lane.b32.xlu0 %v2751, 32
    %v2832 = vpop.permute.xlu0 %2831
    %v2833 = vsel %vm72, %v2832, 0
    %2835 = vmatprep.subr.mxu0 0.0
    %2836 = vmatpush1.msra.mxu0 %v2752
    %2837 = vmatprep.subr.mxu0 0.0
    %2838 = vmatpush1.msra.mxu0 %v2753
    %2839 = vmatprep.subr.mxu0 0.0
    %2840 = vmatpush1.msra.mxu0 %v2754
    %2841 = vmatprep.subr.mxu0 0.0
    %2842 = vmatpush1.msra.mxu0 %v2755
    %2843 = vmatprep.subr.mxu0 0.0
    %2844 = vmatpush1.msra.mxu0 0.0
    %2845 = vmatprep.subr.mxu0 0.0
    %2846 = vmatpush1.msra.mxu0 0.0
    %2847 = vmatprep.subr.mxu0 0.0
    %2848 = vmatpush1.msra.mxu0 0.0
    %2849 = vmatprep.subr.mxu0 0.0
    %2850 = vmatpush1.msra.mxu0 0.0
    %2851 = vmatprep.subr.mxu0 0.0
    %2852 = vmatpush1.msra.mxu0 0.0
    %2853 = vmatprep.subr.mxu0 0.0
    %2854 = vmatpush1.msra.mxu0 0.0
    %2855 = vmatprep.subr.mxu0 0.0
    %2856 = vmatpush1.msra.mxu0 0.0
    %2857 = vmatprep.subr.mxu0 0.0
    %2858 = vmatpush1.msra.mxu0 0.0
    %2859 = vmatprep.subr.mxu0 0.0
    %2860 = vmatpush1.msra.mxu0 0.0
    %2861 = vmatprep.subr.mxu0 0.0
    %2862 = vmatpush1.msra.mxu0 0.0
    %2863 = vmatprep.subr.mxu0 0.0
    %2864 = vmatpush1.msra.mxu0 0.0
    %2865 = vmatprep.subr.mxu0 0.0
    %2866 = vmatpush1.msra.mxu0 0.0
    %2867 = vmatprep.subr.mxu0 0.0
    %2868 = vmatpush1.msra.mxu0 0.0
    %2869 = vmatprep.subr.mxu0 0.0
    %2870 = vmatpush1.msra.mxu0 0.0
    %2871 = vmatprep.subr.mxu0 0.0
    %2872 = vmatpush1.msra.mxu0 0.0
    %2873 = vmatprep.subr.mxu0 0.0
    %2874 = vmatpush1.msra.mxu0 0.0
    %2875 = vmatprep.subr.mxu0 0.0
    %2876 = vmatpush1.msra.mxu0 0.0
    %2877 = vmatprep.subr.mxu0 0.0
    %2878 = vmatpush1.msra.mxu0 0.0
    %2879 = vmatprep.subr.mxu0 0.0
    %2880 = vmatpush1.msra.mxu0 0.0
    %2881 = vmatprep.subr.mxu0 0.0
    %2882 = vmatpush1.msra.mxu0 0.0
    %2883 = vmatprep.subr.mxu0 0.0
    %2884 = vmatpush1.msra.mxu0 0.0
    %2885 = vmatprep.subr.mxu0 0.0
    %2886 = vmatpush1.msra.mxu0 0.0
    %2887 = vmatprep.subr.mxu0 0.0
    %2888 = vmatpush1.msra.mxu0 0.0
    %2889 = vmatprep.subr.mxu0 0.0
    %2890 = vmatpush1.msra.mxu0 0.0
    %2891 = vmatprep.subr.mxu0 0.0
    %2892 = vmatpush1.msra.mxu0 0.0
    %2893 = vmatprep.subr.mxu0 0.0
    %2894 = vmatpush1.msra.mxu0 0.0
    %2895 = vmatprep.subr.mxu0 0.0
    %2896 = vmatpush1.msra.mxu0 0.0
    %2897 = vmatprep.subr.mxu0 0.0
    %2898 = vmatpush1.msra.mxu0 0.0
    %2899 = vmatprep.mubr.f32.mxu0 0.0
    %2900 = vmatmul.mubr.f32.gmra.mrb[0].mxu0 %v2833
    %v2901 = vpop.f32.mrb[0].mxu0
    %v2902 = vadd.f32 %v2827, %v2901
    %v2903 = vpop.f32.mrb[0].mxu0
    %2904 = vdwg.mxu0
    %v2905 = vld [vmem:[#allocation3] sm:$0x1]
    %v2907 = vlaneseq
    %v2908 = vshrl.u32 %v2907, 7
    %v2909 = vsub.s32 0, %v2908
    %v2910 = vrot.slane %v2905, %v2909
    %v2912 = vadd.f32 %v2902, %v2910
    %vm2913 = vcmask 1024
    %2914 = vst.msk [vmem:[%s12] sm:$0x3] %vm2913, %v2912
    // Predicated region
    $region50: #{tpu_custom_call.1} parent=1 // pred_check
      _
    $region51: #{tpu_custom_call.1} parent=1 // pred_check_branch
      %2916 = sbr.rel (0) target = $region53
    $region52: #{tpu_custom_call.1} parent=1 // pred_region
      %s2918 = ssub.s32 32, 32
      %2919 = vsyncadd [#allocation6], %s2918
      %s2921 = sshll.u32 [#allocation7], 4
      %s2922 = int_to_ptr.vmem [resolvable:$true] %s2921
      %2924 = dma.vmem_to_hbm [thread:$0]  %s2922, 32, %s11, [#allocation6]
    $region53: #{tpu_custom_call.1} parent=1 // pred_fallthru
      _
    // Predicated region
    $region54: #{tpu_custom_call.1} parent=1 // pred_check
      _
    $region55: #{tpu_custom_call.1} parent=1 // pred_check_branch
      %2926 = sbr.rel (0) target = $region57
    $region56: #{tpu_custom_call.1} parent=1 // pred_region
      _
    $region57: #{tpu_custom_call.1} parent=1 // pred_fallthru
      _
    // Predicated region
    $region58: #{tpu_custom_call.1} parent=1 // pred_check
      _
    $region59: #{tpu_custom_call.1} parent=1 // pred_check_branch
      %2928 = sbr.rel (0) target = $region61
    $region60: #{tpu_custom_call.1} parent=1 // pred_region
      %2929 = dma.done [#allocation6], 32
    $region61: #{tpu_custom_call.1} parent=1 // pred_fallthru
      _
    // Predicated region
    $region62: #{tpu_custom_call.1} parent=1 // pred_check
      _
    $region63: #{tpu_custom_call.1} parent=1 // pred_check_branch
      %2931 = sbr.rel (0) target = $region65
    $region64: #{tpu_custom_call.1} parent=1 // pred_region
      _
    $region65: #{tpu_custom_call.1} parent=1 // pred_fallthru
      _
    %2932 = vsyncpa [#allocation5], 1
    %2933 = vsyncpa [#allocation6], 1

</llo_original>
